<compile_context>
chip_gen: v7x
topology: tpu7x:2x2x1
jax: 0.10.0
libtpu: 0.0.40
codegen_flags: <defaults>
</compile_context>

<pallas_src>
import math

import jax
import jax.numpy as jnp
from jax.experimental import pallas as pl
from jax.experimental.pallas import tpu as pltpu

# ----------------------------- config ---------------------------------------
HIDDEN = 32
NUM_HEADS = 2
HEAD_DIM = HIDDEN // NUM_HEADS
FFN = 64
NUM_LAYERS = 2
VOCAB = 30
MAX_POS = 16
TYPE_VOCAB = 2
N_CLASSES = 3
OUT_PAD = 128          # lane-dense classifier output (sliced to N_CLASSES outside)
LN_EPS = 1e-12


def _vmem():
    return pl.BlockSpec(memory_space=pltpu.MemorySpace.VMEM)


# ----------------------------- fused kernel ---------------------------------
def _fused_forward_kernel(
    emb_ref, mask_ref, eln_g_ref, eln_b_ref,
    wq_ref, bq_ref, wk_ref, bk_ref, wv_ref, bv_ref,
    wo_ref, bo_ref, ln1g_ref, ln1b_ref,
    w1_ref, b1_ref, w2_ref, b2_ref, ln2g_ref, ln2b_ref,
    pool_w_ref, pool_b_ref, out_w_ref, out_b_ref,
    out_ref,
):
    bh, seq, _ = mask_ref.shape            # bh = B * NUM_HEADS
    bsz = bh // NUM_HEADS
    n_layers = wq_ref.shape[0]
    scale = 1.0 / math.sqrt(HEAD_DIM)

    def ln(x, g, b):
        mu = jnp.mean(x, axis=-1, keepdims=True)
        var = jnp.mean((x - mu) * (x - mu), axis=-1, keepdims=True)
        return (x - mu) * jax.lax.rsqrt(var + LN_EPS) * g + b

    # embeddings LayerNorm (token/pos/type gather+sum done outside the kernel)
    x = ln(emb_ref[...], eln_g_ref[...], eln_b_ref[...])        # [B*S, H] f32
    # pre-broadcast additive mask, hoisted once for the whole forward
    mask = mask_ref[...]                                         # [B*NH, S, S]

    for l in range(n_layers):
        # --- replicate activations across heads along a new MAJOR axis (cheap) ---
        xh = jnp.broadcast_to(
            x.reshape(bsz, 1, seq, HIDDEN), (bsz, NUM_HEADS, seq, HIDDEN)
        ).reshape(bh, seq, HIDDEN)                               # [B*NH, S, H]

        # --- batched Q/K/V projections straight into [B*NH, S, D] ----------------
        q = jnp.einsum('nsh,nhd->nsd', xh, wq_ref[l],
                       preferred_element_type=jnp.float32) + bq_ref[l]
        k = jnp.einsum('nsh,nhd->nsd', xh, wk_ref[l],
                       preferred_element_type=jnp.float32) + bk_ref[l]
        v = jnp.einsum('nsh,nhd->nsd', xh, wv_ref[l],
                       preferred_element_type=jnp.float32) + bv_ref[l]

        # --- attention: ONE batched score/softmax/PV for all (b, h) pairs --------
        s = jnp.einsum('nqd,nkd->nqk', q, k,
                       preferred_element_type=jnp.float32) * scale + mask
        s = s - jnp.max(s, axis=-1, keepdims=True)
        p = jnp.exp(s)
        p = p * pl.reciprocal(jnp.sum(p, axis=-1, keepdims=True), approx=True)
        ctx = jnp.einsum('nqk,nkd->nqd', p, v,
                         preferred_element_type=jnp.float32)     # [B*NH, S, D]

        # --- output proj: per-head partials, then sum over the head (major) axis -
        attn = jnp.einsum('nsd,ndh->nsh', ctx, wo_ref[l],
                          preferred_element_type=jnp.float32)    # [B*NH, S, H]
        attn = jnp.sum(attn.reshape(bsz, NUM_HEADS, seq, HIDDEN), axis=1)
        attn = attn.reshape(bsz * seq, HIDDEN) + bo_ref[l]
        x = ln(attn + x, ln1g_ref[l], ln1b_ref[l])               # residual + LN

        # --- FFN (exact erf-GELU) + residual + LN (all f32 MXU operands) ---------
        ff = jnp.dot(x, w1_ref[l], preferred_element_type=jnp.float32) + b1_ref[l]
        ff = 0.5 * ff * (1.0 + jax.lax.erf(ff * (1.0 / math.sqrt(2.0))))
        ff = jnp.dot(ff, w2_ref[l], preferred_element_type=jnp.float32) + b2_ref[l]
        x = ln(ff + x, ln2g_ref[l], ln2b_ref[l])

    # ---- BERT pooler on [CLS] rows: tanh(Linear(hidden[:, 0])) — no scratch -----
    cls = x.reshape(bsz, seq, HIDDEN)[:, 0, :]                   # [B, H]
    pooled = jnp.tanh(
        jnp.dot(cls, pool_w_ref[...], preferred_element_type=jnp.float32)
        + pool_b_ref[...])

    # self.drop: nn.Dropout(p=0.3) is identity at inference (eval mode)
    # ---- classifier head + Softmax(dim=1), lane-padded output -------------------
    logits = jnp.dot(pooled, out_w_ref[...], preferred_element_type=jnp.float32)
    logits = logits + out_b_ref[...]         # pad lanes carry -1e9 bias -> exp()==0
    logits = logits - jnp.max(logits, axis=-1, keepdims=True)
    e = jnp.exp(logits)
    out_ref[...] = e / jnp.sum(e, axis=-1, keepdims=True)   # exact divide: 1e-5 row-sum


# ----------------------------- params ----------------------------------------
def init_params(key):
    def nrm(k, shape, std=0.02):
        return (std * jax.random.normal(k, shape)).astype(jnp.float32)

    H, F, L = HIDDEN, FFN, NUM_LAYERS
    k = jax.random.split(key, 11)
    return {
        "word_emb": nrm(k[0], (VOCAB, H)),
        "pos_emb": nrm(k[1], (MAX_POS, H)),
        "type_emb": nrm(k[2], (TYPE_VOCAB, H)),
        "emb_ln_g": jnp.ones((1, H), jnp.float32),
        "emb_ln_b": jnp.zeros((1, H), jnp.float32),
        "wq": nrm(k[3], (L, H, H)), "bq": jnp.zeros((L, 1, H), jnp.float32),
        "wk": nrm(k[4], (L, H, H)), "bk": jnp.zeros((L, 1, H), jnp.float32),
        "wv": nrm(k[5], (L, H, H)), "bv": jnp.zeros((L, 1, H), jnp.float32),
        "wo": nrm(k[6], (L, H, H)), "bo": jnp.zeros((L, 1, H), jnp.float32),
        "ln1_g": jnp.ones((L, 1, H), jnp.float32),
        "ln1_b": jnp.zeros((L, 1, H), jnp.float32),
        "w1": nrm(k[7], (L, H, F)), "b1": jnp.zeros((L, 1, F), jnp.float32),
        "w2": nrm(k[8], (L, F, H)), "b2": jnp.zeros((L, 1, H), jnp.float32),
        "ln2_g": jnp.ones((L, 1, H), jnp.float32),
        "ln2_b": jnp.zeros((L, 1, H), jnp.float32),
        "pool_w": nrm(k[9], (H, H)),
        "pool_b": jnp.zeros((1, H), jnp.float32),
        "out_w": nrm(k[10], (H, N_CLASSES)),
        "out_b": jnp.zeros((1, N_CLASSES), jnp.float32),
    }


# ----------------------------- forward ----------------------------------------
@jax.jit
def sentiment_classifier(params, input_ids, attention_mask):
    b, s = input_ids.shape
    nh, d, H = NUM_HEADS, HEAD_DIM, HIDDEN

    # token/position/type embedding gather+sum is XLA glue; LN happens in-kernel.
    # token_type hard-coded to 0 (HF default when token_type_ids is not passed).
    emb = (jnp.take(params["word_emb"], input_ids, axis=0)
           + params["pos_emb"][:s][None, :, :]
           + params["type_emb"][0][None, None, :]).reshape(b * s, H)

    # additive attention mask (HF convention), pre-broadcast to [B*NH, S, S]
    # so the kernel never re-materializes the broadcast.
    mask_add = (1.0 - attention_mask.astype(jnp.float32)) * -10000.0
    mask_bh = jnp.broadcast_to(
        mask_add[:, None, None, :], (b, nh, s, s)).reshape(b * nh, s, s)

    # --- host-side per-(batch, head) weight slabs (free; enables batched einsums) ---
    def split_w_in(w):    # [L, H, NH*D] -> [L, B*NH, H, D]   (Q/K/V projections)
        wh = w.reshape(NUM_LAYERS, H, nh, d).transpose(0, 2, 1, 3)
        return jnp.broadcast_to(wh[:, None], (NUM_LAYERS, b, nh, H, d)
                                ).reshape(NUM_LAYERS, b * nh, H, d)

    def split_b_in(bb):   # [L, 1, NH*D] -> [L, B*NH, 1, D]
        bhh = bb.reshape(NUM_LAYERS, 1, nh, d).transpose(0, 2, 1, 3)
        return jnp.broadcast_to(bhh[:, None], (NUM_LAYERS, b, nh, 1, d)
                                ).reshape(NUM_LAYERS, b * nh, 1, d)

    def split_w_out(w):   # [L, NH*D, H] -> [L, B*NH, D, H]   (output projection)
        wh = w.reshape(NUM_LAYERS, nh, d, H)
        return jnp.broadcast_to(wh[:, None], (NUM_LAYERS, b, nh, d, H)
                                ).reshape(NUM_LAYERS, b * nh, d, H)

    wq_bh, wk_bh, wv_bh = (split_w_in(params[n]) for n in ("wq", "wk", "wv"))
    bq_bh, bk_bh, bv_bh = (split_b_in(params[n]) for n in ("bq", "bk", "bv"))
    wo_bh = split_w_out(params["wo"])

    # lane-dense classifier head: pad class dim to OUT_PAD, pad-bias -1e9
    out_w_pad = jnp.zeros((H, OUT_PAD), jnp.float32).at[:, :N_CLASSES].set(
        params["out_w"])
    out_b_pad = jnp.full((1, OUT_PAD), -1e9, jnp.float32).at[:, :N_CLASSES].set(
        params["out_b"])

    inputs = (
        emb, mask_bh, params["emb_ln_g"], params["emb_ln_b"],
        wq_bh, bq_bh, wk_bh, bk_bh, wv_bh, bv_bh,
        wo_bh, params["bo"], params["ln1_g"], params["ln1_b"],
        params["w1"], params["b1"], params["w2"], params["b2"],
        params["ln2_g"], params["ln2_b"],
        params["pool_w"], params["pool_b"], out_w_pad, out_b_pad,
    )

    # advisory cost estimate so XLA schedules the embedding glue around the kernel
    bh_ = b * nh
    per_layer_flops = (3 * 2 * bh_ * s * H * d          # Q/K/V projections
                       + 2 * 2 * bh_ * s * s * d        # scores + P@V
                       + 2 * bh_ * s * d * H            # output projection
                       + 2 * 2 * b * s * H * FFN)       # FFN
    flops = NUM_LAYERS * per_layer_flops + 2 * b * H * H + 2 * b * H * OUT_PAD
    transcendentals = NUM_LAYERS * (bh_ * s * s + b * s * FFN) + b * (H + OUT_PAD)
    bytes_accessed = (sum(int(a.size) * a.dtype.itemsize for a in inputs)
                      + b * OUT_PAD * 4)

    probs_pad = pl.pallas_call(
        _fused_forward_kernel,
        out_shape=jax.ShapeDtypeStruct((b, OUT_PAD), jnp.float32),
        in_specs=[_vmem()] * len(inputs),
        out_specs=_vmem(),
        cost_estimate=pl.CostEstimate(flops=flops,
                                      transcendentals=transcendentals,
                                      bytes_accessed=bytes_accessed),
    )(*inputs)
    return probs_pad[:, :N_CLASSES]


if __name__ == "__main__":
    key = jax.random.PRNGKey(0)
    k_ids, k_params = jax.random.split(key)
    B, S = 2, 8
    input_ids = jax.random.randint(k_ids, (B, S), 0, VOCAB, dtype=jnp.int32)
    attention_mask = jnp.ones((B, S), dtype=jnp.int32)

    params = init_params(k_params)
    probs = jax.block_until_ready(
        sentiment_classifier(params, input_ids, attention_mask))

    assert probs.shape == (B, N_CLASSES)
    assert bool(jnp.all(jnp.isfinite(probs)))
    assert bool(jnp.allclose(jnp.sum(probs, axis=1), 1.0, atol=1e-5))
    print("KERNEL_OK")
</pallas_src>

<mosaic_0001>
module attributes {stable_mosaic.version = 11 : i64} {
  func.func @_fused_forward_kernel(%arg0: memref<16x32xf32, #tpu.memory_space<vmem>>, %arg1: memref<4x8x8xf32, #tpu.memory_space<vmem>>, %arg2: memref<1x32xf32, #tpu.memory_space<vmem>>, %arg3: memref<1x32xf32, #tpu.memory_space<vmem>>, %arg4: memref<2x4x32x16xf32, #tpu.memory_space<vmem>>, %arg5: memref<2x4x1x16xf32, #tpu.memory_space<vmem>>, %arg6: memref<2x4x32x16xf32, #tpu.memory_space<vmem>>, %arg7: memref<2x4x1x16xf32, #tpu.memory_space<vmem>>, %arg8: memref<2x4x32x16xf32, #tpu.memory_space<vmem>>, %arg9: memref<2x4x1x16xf32, #tpu.memory_space<vmem>>, %arg10: memref<2x4x16x32xf32, #tpu.memory_space<vmem>>, %arg11: memref<2x1x32xf32, #tpu.memory_space<vmem>>, %arg12: memref<2x1x32xf32, #tpu.memory_space<vmem>>, %arg13: memref<2x1x32xf32, #tpu.memory_space<vmem>>, %arg14: memref<2x32x64xf32, #tpu.memory_space<vmem>>, %arg15: memref<2x1x64xf32, #tpu.memory_space<vmem>>, %arg16: memref<2x64x32xf32, #tpu.memory_space<vmem>>, %arg17: memref<2x1x32xf32, #tpu.memory_space<vmem>>, %arg18: memref<2x1x32xf32, #tpu.memory_space<vmem>>, %arg19: memref<2x1x32xf32, #tpu.memory_space<vmem>>, %arg20: memref<32x32xf32, #tpu.memory_space<vmem>>, %arg21: memref<1x32xf32, #tpu.memory_space<vmem>>, %arg22: memref<32x128xf32, #tpu.memory_space<vmem>>, %arg23: memref<1x128xf32, #tpu.memory_space<vmem>>, %arg24: memref<2x128xf32, #tpu.memory_space<vmem>>) attributes {dimension_semantics = [], scalar_prefetch = 0 : i64, scratch_operands = 0 : i64, tpu.core_type = #tpu.core_type<tc>} {
    %c0 = arith.constant 0 : index
    %c0_0 = arith.constant 0 : index
    %0 = vector.load %arg0[%c0, %c0_0] : memref<16x32xf32, #tpu.memory_space<vmem>>, vector<16x32xf32>
    %c0_1 = arith.constant 0 : index
    %c0_2 = arith.constant 0 : index
    %1 = vector.load %arg2[%c0_1, %c0_2] : memref<1x32xf32, #tpu.memory_space<vmem>>, vector<1x32xf32>
    %c0_3 = arith.constant 0 : index
    %c0_4 = arith.constant 0 : index
    %2 = vector.load %arg3[%c0_3, %c0_4] : memref<1x32xf32, #tpu.memory_space<vmem>>, vector<1x32xf32>
    %cst = arith.constant dense<0.000000e+00> : vector<16xf32>
    %3 = vector.multi_reduction <add>, %0, %cst [1] : vector<16x32xf32> to vector<16xf32>
    %4 = vector.shape_cast %3 : vector<16xf32> to vector<16x1xf32>
    %cst_5 = arith.constant 3.200000e+01 : f32
    %5 = vector.broadcast %cst_5 : f32 to vector<16x1xf32>
    %6 = arith.divf %4, %5 : vector<16x1xf32>
    %7 = vector.broadcast %6 : vector<16x1xf32> to vector<16x32xf32>
    %8 = arith.subf %0, %7 : vector<16x32xf32>
    %9 = vector.broadcast %6 : vector<16x1xf32> to vector<16x32xf32>
    %10 = arith.subf %0, %9 : vector<16x32xf32>
    %11 = arith.mulf %8, %10 : vector<16x32xf32>
    %cst_6 = arith.constant dense<0.000000e+00> : vector<16xf32>
    %12 = vector.multi_reduction <add>, %11, %cst_6 [1] : vector<16x32xf32> to vector<16xf32>
    %13 = vector.shape_cast %12 : vector<16xf32> to vector<16x1xf32>
    %cst_7 = arith.constant 3.200000e+01 : f32
    %14 = vector.broadcast %cst_7 : f32 to vector<16x1xf32>
    %15 = arith.divf %13, %14 : vector<16x1xf32>
    %16 = vector.broadcast %6 : vector<16x1xf32> to vector<16x32xf32>
    %17 = arith.subf %0, %16 : vector<16x32xf32>
    %cst_8 = arith.constant 9.99999996E-13 : f32
    %18 = vector.broadcast %cst_8 : f32 to vector<16x1xf32>
    %19 = arith.addf %15, %18 : vector<16x1xf32>
    %20 = math.rsqrt %19 : vector<16x1xf32>
    %21 = vector.broadcast %20 : vector<16x1xf32> to vector<16x32xf32>
    %22 = arith.mulf %17, %21 : vector<16x32xf32>
    %23 = vector.broadcast %1 : vector<1x32xf32> to vector<16x32xf32>
    %24 = arith.mulf %22, %23 : vector<16x32xf32>
    %25 = vector.broadcast %2 : vector<1x32xf32> to vector<16x32xf32>
    %26 = arith.addf %24, %25 : vector<16x32xf32>
    %c0_9 = arith.constant 0 : index
    %c0_10 = arith.constant 0 : index
    %c0_11 = arith.constant 0 : index
    %27 = vector.load %arg1[%c0_9, %c0_10, %c0_11] : memref<4x8x8xf32, #tpu.memory_space<vmem>>, vector<4x8x8xf32>
    %28 = vector.shape_cast %26 : vector<16x32xf32> to vector<2x1x8x32xf32>
    %29 = vector.shape_cast %28 : vector<2x1x8x32xf32> to vector<2x1x8x32xf32>
    %30 = vector.broadcast %29 : vector<2x1x8x32xf32> to vector<2x2x8x32xf32>
    %31 = vector.shape_cast %30 : vector<2x2x8x32xf32> to vector<4x8x32xf32>
    %c0_12 = arith.constant 0 : index
    %c0_13 = arith.constant 0 : index
    %c0_14 = arith.constant 0 : index
    %c0_15 = arith.constant 0 : index
    %32 = vector.load %arg4[%c0_12, %c0_13, %c0_14, %c0_15] : memref<2x4x32x16xf32, #tpu.memory_space<vmem>>, vector<1x4x32x16xf32>
    %33 = vector.shape_cast %32 : vector<1x4x32x16xf32> to vector<4x32x16xf32>
    "tpu.trace_start"() <{level = 10 : i32, message = "nsh,nhd->nsd"}> : () -> ()
    %cst_16 = arith.constant dense<0.000000e+00> : vector<4x8x16xf32>
    %34 = tpu.matmul %31, %33, %cst_16 {dimension_numbers = #tpu.dot_dimension_numbers<[2], [1], [1], [2], [0, 0, 0, 1, 1, 2], [0], [0]>} : vector<4x8x32xf32>, vector<4x32x16xf32>, vector<4x8x16xf32> -> vector<4x8x16xf32>
    "tpu.trace_stop"() : () -> ()
    %c0_17 = arith.constant 0 : index
    %c0_18 = arith.constant 0 : index
    %c0_19 = arith.constant 0 : index
    %c0_20 = arith.constant 0 : index
    %35 = vector.load %arg5[%c0_17, %c0_18, %c0_19, %c0_20] : memref<2x4x1x16xf32, #tpu.memory_space<vmem>>, vector<1x4x1x16xf32>
    %36 = vector.shape_cast %35 : vector<1x4x1x16xf32> to vector<4x1x16xf32>
    %37 = vector.broadcast %36 : vector<4x1x16xf32> to vector<4x8x16xf32>
    %38 = arith.addf %34, %37 : vector<4x8x16xf32>
    %c0_21 = arith.constant 0 : index
    %c0_22 = arith.constant 0 : index
    %c0_23 = arith.constant 0 : index
    %c0_24 = arith.constant 0 : index
    %39 = vector.load %arg6[%c0_21, %c0_22, %c0_23, %c0_24] : memref<2x4x32x16xf32, #tpu.memory_space<vmem>>, vector<1x4x32x16xf32>
    %40 = vector.shape_cast %39 : vector<1x4x32x16xf32> to vector<4x32x16xf32>
    "tpu.trace_start"() <{level = 10 : i32, message = "nsh,nhd->nsd"}> : () -> ()
    %cst_25 = arith.constant dense<0.000000e+00> : vector<4x8x16xf32>
    %41 = tpu.matmul %31, %40, %cst_25 {dimension_numbers = #tpu.dot_dimension_numbers<[2], [1], [1], [2], [0, 0, 0, 1, 1, 2], [0], [0]>} : vector<4x8x32xf32>, vector<4x32x16xf32>, vector<4x8x16xf32> -> vector<4x8x16xf32>
    "tpu.trace_stop"() : () -> ()
    %c0_26 = arith.constant 0 : index
    %c0_27 = arith.constant 0 : index
    %c0_28 = arith.constant 0 : index
    %c0_29 = arith.constant 0 : index
    %42 = vector.load %arg7[%c0_26, %c0_27, %c0_28, %c0_29] : memref<2x4x1x16xf32, #tpu.memory_space<vmem>>, vector<1x4x1x16xf32>
    %43 = vector.shape_cast %42 : vector<1x4x1x16xf32> to vector<4x1x16xf32>
    %44 = vector.broadcast %43 : vector<4x1x16xf32> to vector<4x8x16xf32>
    %45 = arith.addf %41, %44 : vector<4x8x16xf32>
    %c0_30 = arith.constant 0 : index
    %c0_31 = arith.constant 0 : index
    %c0_32 = arith.constant 0 : index
    %c0_33 = arith.constant 0 : index
    %46 = vector.load %arg8[%c0_30, %c0_31, %c0_32, %c0_33] : memref<2x4x32x16xf32, #tpu.memory_space<vmem>>, vector<1x4x32x16xf32>
    %47 = vector.shape_cast %46 : vector<1x4x32x16xf32> to vector<4x32x16xf32>
    "tpu.trace_start"() <{level = 10 : i32, message = "nsh,nhd->nsd"}> : () -> ()
    %cst_34 = arith.constant dense<0.000000e+00> : vector<4x8x16xf32>
    %48 = tpu.matmul %31, %47, %cst_34 {dimension_numbers = #tpu.dot_dimension_numbers<[2], [1], [1], [2], [0, 0, 0, 1, 1, 2], [0], [0]>} : vector<4x8x32xf32>, vector<4x32x16xf32>, vector<4x8x16xf32> -> vector<4x8x16xf32>
    "tpu.trace_stop"() : () -> ()
    %c0_35 = arith.constant 0 : index
    %c0_36 = arith.constant 0 : index
    %c0_37 = arith.constant 0 : index
    %c0_38 = arith.constant 0 : index
    %49 = vector.load %arg9[%c0_35, %c0_36, %c0_37, %c0_38] : memref<2x4x1x16xf32, #tpu.memory_space<vmem>>, vector<1x4x1x16xf32>
    %50 = vector.shape_cast %49 : vector<1x4x1x16xf32> to vector<4x1x16xf32>
    %51 = vector.broadcast %50 : vector<4x1x16xf32> to vector<4x8x16xf32>
    %52 = arith.addf %48, %51 : vector<4x8x16xf32>
    "tpu.trace_start"() <{level = 10 : i32, message = "nqd,nkd->nqk"}> : () -> ()
    %cst_39 = arith.constant dense<0.000000e+00> : vector<4x8x8xf32>
    %53 = tpu.matmul %38, %45, %cst_39 {dimension_numbers = #tpu.dot_dimension_numbers<[2], [2], [1], [1], [0, 0, 0, 1, 1, 1], [0], [0]>} : vector<4x8x16xf32>, vector<4x8x16xf32>, vector<4x8x8xf32> -> vector<4x8x8xf32>
    "tpu.trace_stop"() : () -> ()
    %cst_40 = arith.constant 2.500000e-01 : f32
    %54 = vector.broadcast %cst_40 : f32 to vector<4x8x8xf32>
    %55 = arith.mulf %53, %54 : vector<4x8x8xf32>
    %56 = arith.addf %55, %27 : vector<4x8x8xf32>
    %cst_41 = arith.constant dense<0xFF800000> : vector<4x8xf32>
    %57 = vector.multi_reduction <maximumf>, %56, %cst_41 [2] : vector<4x8x8xf32> to vector<4x8xf32>
    %58 = vector.shape_cast %57 : vector<4x8xf32> to vector<4x8x1xf32>
    %59 = vector.broadcast %58 : vector<4x8x1xf32> to vector<4x8x8xf32>
    %60 = arith.subf %56, %59 : vector<4x8x8xf32>
    %61 = math.exp %60 : vector<4x8x8xf32>
    %cst_42 = arith.constant dense<0.000000e+00> : vector<4x8xf32>
    %62 = vector.multi_reduction <add>, %61, %cst_42 [2] : vector<4x8x8xf32> to vector<4x8xf32>
    %63 = vector.shape_cast %62 : vector<4x8xf32> to vector<4x8x1xf32>
    %64 = tpu.reciprocal %63 {approx = true} : vector<4x8x1xf32> -> vector<4x8x1xf32>
    %65 = vector.broadcast %64 : vector<4x8x1xf32> to vector<4x8x8xf32>
    %66 = arith.mulf %61, %65 : vector<4x8x8xf32>
    "tpu.trace_start"() <{level = 10 : i32, message = "nqk,nkd->nqd"}> : () -> ()
    %cst_43 = arith.constant dense<0.000000e+00> : vector<4x8x16xf32>
    %67 = tpu.matmul %66, %52, %cst_43 {dimension_numbers = #tpu.dot_dimension_numbers<[2], [1], [1], [2], [0, 0, 0, 1, 1, 2], [0], [0]>} : vector<4x8x8xf32>, vector<4x8x16xf32>, vector<4x8x16xf32> -> vector<4x8x16xf32>
    "tpu.trace_stop"() : () -> ()
    %c0_44 = arith.constant 0 : index
    %c0_45 = arith.constant 0 : index
    %c0_46 = arith.constant 0 : index
    %c0_47 = arith.constant 0 : index
    %68 = vector.load %arg10[%c0_44, %c0_45, %c0_46, %c0_47] : memref<2x4x16x32xf32, #tpu.memory_space<vmem>>, vector<1x4x16x32xf32>
    %69 = vector.shape_cast %68 : vector<1x4x16x32xf32> to vector<4x16x32xf32>
    "tpu.trace_start"() <{level = 10 : i32, message = "nsd,ndh->nsh"}> : () -> ()
    %cst_48 = arith.constant dense<0.000000e+00> : vector<4x8x32xf32>
    %70 = tpu.matmul %67, %69, %cst_48 {dimension_numbers = #tpu.dot_dimension_numbers<[2], [1], [1], [2], [0, 0, 0, 1, 1, 2], [0], [0]>} : vector<4x8x16xf32>, vector<4x16x32xf32>, vector<4x8x32xf32> -> vector<4x8x32xf32>
    "tpu.trace_stop"() : () -> ()
    %71 = vector.shape_cast %70 : vector<4x8x32xf32> to vector<2x2x8x32xf32>
    %cst_49 = arith.constant dense<0.000000e+00> : vector<2x8x32xf32>
    %72 = vector.multi_reduction <add>, %71, %cst_49 [1] : vector<2x2x8x32xf32> to vector<2x8x32xf32>
    %73 = vector.shape_cast %72 : vector<2x8x32xf32> to vector<16x32xf32>
    %c0_50 = arith.constant 0 : index
    %c0_51 = arith.constant 0 : index
    %c0_52 = arith.constant 0 : index
    %74 = vector.load %arg11[%c0_50, %c0_51, %c0_52] : memref<2x1x32xf32, #tpu.memory_space<vmem>>, vector<1x1x32xf32>
    %75 = vector.shape_cast %74 : vector<1x1x32xf32> to vector<1x32xf32>
    %76 = vector.broadcast %75 : vector<1x32xf32> to vector<16x32xf32>
    %77 = arith.addf %73, %76 : vector<16x32xf32>
    %78 = arith.addf %77, %26 : vector<16x32xf32>
    %c0_53 = arith.constant 0 : index
    %c0_54 = arith.constant 0 : index
    %c0_55 = arith.constant 0 : index
    %79 = vector.load %arg12[%c0_53, %c0_54, %c0_55] : memref<2x1x32xf32, #tpu.memory_space<vmem>>, vector<1x1x32xf32>
    %80 = vector.shape_cast %79 : vector<1x1x32xf32> to vector<1x32xf32>
    %c0_56 = arith.constant 0 : index
    %c0_57 = arith.constant 0 : index
    %c0_58 = arith.constant 0 : index
    %81 = vector.load %arg13[%c0_56, %c0_57, %c0_58] : memref<2x1x32xf32, #tpu.memory_space<vmem>>, vector<1x1x32xf32>
    %82 = vector.shape_cast %81 : vector<1x1x32xf32> to vector<1x32xf32>
    %cst_59 = arith.constant dense<0.000000e+00> : vector<16xf32>
    %83 = vector.multi_reduction <add>, %78, %cst_59 [1] : vector<16x32xf32> to vector<16xf32>
    %84 = vector.shape_cast %83 : vector<16xf32> to vector<16x1xf32>
    %cst_60 = arith.constant 3.200000e+01 : f32
    %85 = vector.broadcast %cst_60 : f32 to vector<16x1xf32>
    %86 = arith.divf %84, %85 : vector<16x1xf32>
    %87 = vector.broadcast %86 : vector<16x1xf32> to vector<16x32xf32>
    %88 = arith.subf %78, %87 : vector<16x32xf32>
    %89 = vector.broadcast %86 : vector<16x1xf32> to vector<16x32xf32>
    %90 = arith.subf %78, %89 : vector<16x32xf32>
    %91 = arith.mulf %88, %90 : vector<16x32xf32>
    %cst_61 = arith.constant dense<0.000000e+00> : vector<16xf32>
    %92 = vector.multi_reduction <add>, %91, %cst_61 [1] : vector<16x32xf32> to vector<16xf32>
    %93 = vector.shape_cast %92 : vector<16xf32> to vector<16x1xf32>
    %cst_62 = arith.constant 3.200000e+01 : f32
    %94 = vector.broadcast %cst_62 : f32 to vector<16x1xf32>
    %95 = arith.divf %93, %94 : vector<16x1xf32>
    %96 = vector.broadcast %86 : vector<16x1xf32> to vector<16x32xf32>
    %97 = arith.subf %78, %96 : vector<16x32xf32>
    %cst_63 = arith.constant 9.99999996E-13 : f32
    %98 = vector.broadcast %cst_63 : f32 to vector<16x1xf32>
    %99 = arith.addf %95, %98 : vector<16x1xf32>
    %100 = math.rsqrt %99 : vector<16x1xf32>
    %101 = vector.broadcast %100 : vector<16x1xf32> to vector<16x32xf32>
    %102 = arith.mulf %97, %101 : vector<16x32xf32>
    %103 = vector.broadcast %80 : vector<1x32xf32> to vector<16x32xf32>
    %104 = arith.mulf %102, %103 : vector<16x32xf32>
    %105 = vector.broadcast %82 : vector<1x32xf32> to vector<16x32xf32>
    %106 = arith.addf %104, %105 : vector<16x32xf32>
    %c0_64 = arith.constant 0 : index
    %c0_65 = arith.constant 0 : index
    %c0_66 = arith.constant 0 : index
    %107 = vector.load %arg14[%c0_64, %c0_65, %c0_66] : memref<2x32x64xf32, #tpu.memory_space<vmem>>, vector<1x32x64xf32>
    %108 = vector.shape_cast %107 : vector<1x32x64xf32> to vector<32x64xf32>
    %cst_67 = arith.constant dense<0.000000e+00> : vector<16x64xf32>
    %109 = tpu.matmul %106, %108, %cst_67 {dimension_numbers = #tpu.dot_dimension_numbers<[1], [0], [0], [1], [0, 0, 1, 1], [], []>} : vector<16x32xf32>, vector<32x64xf32>, vector<16x64xf32> -> vector<16x64xf32>
    %c0_68 = arith.constant 0 : index
    %c0_69 = arith.constant 0 : index
    %c0_70 = arith.constant 0 : index
    %110 = vector.load %arg15[%c0_68, %c0_69, %c0_70] : memref<2x1x64xf32, #tpu.memory_space<vmem>>, vector<1x1x64xf32>
    %111 = vector.shape_cast %110 : vector<1x1x64xf32> to vector<1x64xf32>
    %112 = vector.broadcast %111 : vector<1x64xf32> to vector<16x64xf32>
    %113 = arith.addf %109, %112 : vector<16x64xf32>
    %cst_71 = arith.constant 5.000000e-01 : f32
    %114 = vector.broadcast %cst_71 : f32 to vector<16x64xf32>
    %115 = arith.mulf %114, %113 : vector<16x64xf32>
    %cst_72 = arith.constant 0.707106769 : f32
    %116 = vector.broadcast %cst_72 : f32 to vector<16x64xf32>
    %117 = arith.mulf %113, %116 : vector<16x64xf32>
    %118 = math.erf %117 : vector<16x64xf32>
    %cst_73 = arith.constant 1.000000e+00 : f32
    %119 = vector.broadcast %cst_73 : f32 to vector<16x64xf32>
    %120 = arith.addf %119, %118 : vector<16x64xf32>
    %121 = arith.mulf %115, %120 : vector<16x64xf32>
    %c0_74 = arith.constant 0 : index
    %c0_75 = arith.constant 0 : index
    %c0_76 = arith.constant 0 : index
    %122 = vector.load %arg16[%c0_74, %c0_75, %c0_76] : memref<2x64x32xf32, #tpu.memory_space<vmem>>, vector<1x64x32xf32>
    %123 = vector.shape_cast %122 : vector<1x64x32xf32> to vector<64x32xf32>
    %cst_77 = arith.constant dense<0.000000e+00> : vector<16x32xf32>
    %124 = tpu.matmul %121, %123, %cst_77 {dimension_numbers = #tpu.dot_dimension_numbers<[1], [0], [0], [1], [0, 0, 1, 1], [], []>} : vector<16x64xf32>, vector<64x32xf32>, vector<16x32xf32> -> vector<16x32xf32>
    %c0_78 = arith.constant 0 : index
    %c0_79 = arith.constant 0 : index
    %c0_80 = arith.constant 0 : index
    %125 = vector.load %arg17[%c0_78, %c0_79, %c0_80] : memref<2x1x32xf32, #tpu.memory_space<vmem>>, vector<1x1x32xf32>
    %126 = vector.shape_cast %125 : vector<1x1x32xf32> to vector<1x32xf32>
    %127 = vector.broadcast %126 : vector<1x32xf32> to vector<16x32xf32>
    %128 = arith.addf %124, %127 : vector<16x32xf32>
    %129 = arith.addf %128, %106 : vector<16x32xf32>
    %c0_81 = arith.constant 0 : index
    %c0_82 = arith.constant 0 : index
    %c0_83 = arith.constant 0 : index
    %130 = vector.load %arg18[%c0_81, %c0_82, %c0_83] : memref<2x1x32xf32, #tpu.memory_space<vmem>>, vector<1x1x32xf32>
    %131 = vector.shape_cast %130 : vector<1x1x32xf32> to vector<1x32xf32>
    %c0_84 = arith.constant 0 : index
    %c0_85 = arith.constant 0 : index
    %c0_86 = arith.constant 0 : index
    %132 = vector.load %arg19[%c0_84, %c0_85, %c0_86] : memref<2x1x32xf32, #tpu.memory_space<vmem>>, vector<1x1x32xf32>
    %133 = vector.shape_cast %132 : vector<1x1x32xf32> to vector<1x32xf32>
    %cst_87 = arith.constant dense<0.000000e+00> : vector<16xf32>
    %134 = vector.multi_reduction <add>, %129, %cst_87 [1] : vector<16x32xf32> to vector<16xf32>
    %135 = vector.shape_cast %134 : vector<16xf32> to vector<16x1xf32>
    %cst_88 = arith.constant 3.200000e+01 : f32
    %136 = vector.broadcast %cst_88 : f32 to vector<16x1xf32>
    %137 = arith.divf %135, %136 : vector<16x1xf32>
    %138 = vector.broadcast %137 : vector<16x1xf32> to vector<16x32xf32>
    %139 = arith.subf %129, %138 : vector<16x32xf32>
    %140 = vector.broadcast %137 : vector<16x1xf32> to vector<16x32xf32>
    %141 = arith.subf %129, %140 : vector<16x32xf32>
    %142 = arith.mulf %139, %141 : vector<16x32xf32>
    %cst_89 = arith.constant dense<0.000000e+00> : vector<16xf32>
    %143 = vector.multi_reduction <add>, %142, %cst_89 [1] : vector<16x32xf32> to vector<16xf32>
    %144 = vector.shape_cast %143 : vector<16xf32> to vector<16x1xf32>
    %cst_90 = arith.constant 3.200000e+01 : f32
    %145 = vector.broadcast %cst_90 : f32 to vector<16x1xf32>
    %146 = arith.divf %144, %145 : vector<16x1xf32>
    %147 = vector.broadcast %137 : vector<16x1xf32> to vector<16x32xf32>
    %148 = arith.subf %129, %147 : vector<16x32xf32>
    %cst_91 = arith.constant 9.99999996E-13 : f32
    %149 = vector.broadcast %cst_91 : f32 to vector<16x1xf32>
    %150 = arith.addf %146, %149 : vector<16x1xf32>
    %151 = math.rsqrt %150 : vector<16x1xf32>
    %152 = vector.broadcast %151 : vector<16x1xf32> to vector<16x32xf32>
    %153 = arith.mulf %148, %152 : vector<16x32xf32>
    %154 = vector.broadcast %131 : vector<1x32xf32> to vector<16x32xf32>
    %155 = arith.mulf %153, %154 : vector<16x32xf32>
    %156 = vector.broadcast %133 : vector<1x32xf32> to vector<16x32xf32>
    %157 = arith.addf %155, %156 : vector<16x32xf32>
    %158 = vector.shape_cast %157 : vector<16x32xf32> to vector<2x1x8x32xf32>
    %159 = vector.shape_cast %158 : vector<2x1x8x32xf32> to vector<2x1x8x32xf32>
    %160 = vector.broadcast %159 : vector<2x1x8x32xf32> to vector<2x2x8x32xf32>
    %161 = vector.shape_cast %160 : vector<2x2x8x32xf32> to vector<4x8x32xf32>
    %c1 = arith.constant 1 : index
    %c0_92 = arith.constant 0 : index
    %c0_93 = arith.constant 0 : index
    %c0_94 = arith.constant 0 : index
    %162 = vector.load %arg4[%c1, %c0_92, %c0_93, %c0_94] : memref<2x4x32x16xf32, #tpu.memory_space<vmem>>, vector<1x4x32x16xf32>
    %163 = vector.shape_cast %162 : vector<1x4x32x16xf32> to vector<4x32x16xf32>
    "tpu.trace_start"() <{level = 10 : i32, message = "nsh,nhd->nsd"}> : () -> ()
    %cst_95 = arith.constant dense<0.000000e+00> : vector<4x8x16xf32>
    %164 = tpu.matmul %161, %163, %cst_95 {dimension_numbers = #tpu.dot_dimension_numbers<[2], [1], [1], [2], [0, 0, 0, 1, 1, 2], [0], [0]>} : vector<4x8x32xf32>, vector<4x32x16xf32>, vector<4x8x16xf32> -> vector<4x8x16xf32>
    "tpu.trace_stop"() : () -> ()
    %c1_96 = arith.constant 1 : index
    %c0_97 = arith.constant 0 : index
    %c0_98 = arith.constant 0 : index
    %c0_99 = arith.constant 0 : index
    %165 = vector.load %arg5[%c1_96, %c0_97, %c0_98, %c0_99] : memref<2x4x1x16xf32, #tpu.memory_space<vmem>>, vector<1x4x1x16xf32>
    %166 = vector.shape_cast %165 : vector<1x4x1x16xf32> to vector<4x1x16xf32>
    %167 = vector.broadcast %166 : vector<4x1x16xf32> to vector<4x8x16xf32>
    %168 = arith.addf %164, %167 : vector<4x8x16xf32>
    %c1_100 = arith.constant 1 : index
    %c0_101 = arith.constant 0 : index
    %c0_102 = arith.constant 0 : index
    %c0_103 = arith.constant 0 : index
    %169 = vector.load %arg6[%c1_100, %c0_101, %c0_102, %c0_103] : memref<2x4x32x16xf32, #tpu.memory_space<vmem>>, vector<1x4x32x16xf32>
    %170 = vector.shape_cast %169 : vector<1x4x32x16xf32> to vector<4x32x16xf32>
    "tpu.trace_start"() <{level = 10 : i32, message = "nsh,nhd->nsd"}> : () -> ()
    %cst_104 = arith.constant dense<0.000000e+00> : vector<4x8x16xf32>
    %171 = tpu.matmul %161, %170, %cst_104 {dimension_numbers = #tpu.dot_dimension_numbers<[2], [1], [1], [2], [0, 0, 0, 1, 1, 2], [0], [0]>} : vector<4x8x32xf32>, vector<4x32x16xf32>, vector<4x8x16xf32> -> vector<4x8x16xf32>
    "tpu.trace_stop"() : () -> ()
    %c1_105 = arith.constant 1 : index
    %c0_106 = arith.constant 0 : index
    %c0_107 = arith.constant 0 : index
    %c0_108 = arith.constant 0 : index
    %172 = vector.load %arg7[%c1_105, %c0_106, %c0_107, %c0_108] : memref<2x4x1x16xf32, #tpu.memory_space<vmem>>, vector<1x4x1x16xf32>
    %173 = vector.shape_cast %172 : vector<1x4x1x16xf32> to vector<4x1x16xf32>
    %174 = vector.broadcast %173 : vector<4x1x16xf32> to vector<4x8x16xf32>
    %175 = arith.addf %171, %174 : vector<4x8x16xf32>
    %c1_109 = arith.constant 1 : index
    %c0_110 = arith.constant 0 : index
    %c0_111 = arith.constant 0 : index
    %c0_112 = arith.constant 0 : index
    %176 = vector.load %arg8[%c1_109, %c0_110, %c0_111, %c0_112] : memref<2x4x32x16xf32, #tpu.memory_space<vmem>>, vector<1x4x32x16xf32>
    %177 = vector.shape_cast %176 : vector<1x4x32x16xf32> to vector<4x32x16xf32>
    "tpu.trace_start"() <{level = 10 : i32, message = "nsh,nhd->nsd"}> : () -> ()
    %cst_113 = arith.constant dense<0.000000e+00> : vector<4x8x16xf32>
    %178 = tpu.matmul %161, %177, %cst_113 {dimension_numbers = #tpu.dot_dimension_numbers<[2], [1], [1], [2], [0, 0, 0, 1, 1, 2], [0], [0]>} : vector<4x8x32xf32>, vector<4x32x16xf32>, vector<4x8x16xf32> -> vector<4x8x16xf32>
    "tpu.trace_stop"() : () -> ()
    %c1_114 = arith.constant 1 : index
    %c0_115 = arith.constant 0 : index
    %c0_116 = arith.constant 0 : index
    %c0_117 = arith.constant 0 : index
    %179 = vector.load %arg9[%c1_114, %c0_115, %c0_116, %c0_117] : memref<2x4x1x16xf32, #tpu.memory_space<vmem>>, vector<1x4x1x16xf32>
    %180 = vector.shape_cast %179 : vector<1x4x1x16xf32> to vector<4x1x16xf32>
    %181 = vector.broadcast %180 : vector<4x1x16xf32> to vector<4x8x16xf32>
    %182 = arith.addf %178, %181 : vector<4x8x16xf32>
    "tpu.trace_start"() <{level = 10 : i32, message = "nqd,nkd->nqk"}> : () -> ()
    %cst_118 = arith.constant dense<0.000000e+00> : vector<4x8x8xf32>
    %183 = tpu.matmul %168, %175, %cst_118 {dimension_numbers = #tpu.dot_dimension_numbers<[2], [2], [1], [1], [0, 0, 0, 1, 1, 1], [0], [0]>} : vector<4x8x16xf32>, vector<4x8x16xf32>, vector<4x8x8xf32> -> vector<4x8x8xf32>
    "tpu.trace_stop"() : () -> ()
    %cst_119 = arith.constant 2.500000e-01 : f32
    %184 = vector.broadcast %cst_119 : f32 to vector<4x8x8xf32>
    %185 = arith.mulf %183, %184 : vector<4x8x8xf32>
    %186 = arith.addf %185, %27 : vector<4x8x8xf32>
    %cst_120 = arith.constant dense<0xFF800000> : vector<4x8xf32>
    %187 = vector.multi_reduction <maximumf>, %186, %cst_120 [2] : vector<4x8x8xf32> to vector<4x8xf32>
    %188 = vector.shape_cast %187 : vector<4x8xf32> to vector<4x8x1xf32>
    %189 = vector.broadcast %188 : vector<4x8x1xf32> to vector<4x8x8xf32>
    %190 = arith.subf %186, %189 : vector<4x8x8xf32>
    %191 = math.exp %190 : vector<4x8x8xf32>
    %cst_121 = arith.constant dense<0.000000e+00> : vector<4x8xf32>
    %192 = vector.multi_reduction <add>, %191, %cst_121 [2] : vector<4x8x8xf32> to vector<4x8xf32>
    %193 = vector.shape_cast %192 : vector<4x8xf32> to vector<4x8x1xf32>
    %194 = tpu.reciprocal %193 {approx = true} : vector<4x8x1xf32> -> vector<4x8x1xf32>
    %195 = vector.broadcast %194 : vector<4x8x1xf32> to vector<4x8x8xf32>
    %196 = arith.mulf %191, %195 : vector<4x8x8xf32>
    "tpu.trace_start"() <{level = 10 : i32, message = "nqk,nkd->nqd"}> : () -> ()
    %cst_122 = arith.constant dense<0.000000e+00> : vector<4x8x16xf32>
    %197 = tpu.matmul %196, %182, %cst_122 {dimension_numbers = #tpu.dot_dimension_numbers<[2], [1], [1], [2], [0, 0, 0, 1, 1, 2], [0], [0]>} : vector<4x8x8xf32>, vector<4x8x16xf32>, vector<4x8x16xf32> -> vector<4x8x16xf32>
    "tpu.trace_stop"() : () -> ()
    %c1_123 = arith.constant 1 : index
    %c0_124 = arith.constant 0 : index
    %c0_125 = arith.constant 0 : index
    %c0_126 = arith.constant 0 : index
    %198 = vector.load %arg10[%c1_123, %c0_124, %c0_125, %c0_126] : memref<2x4x16x32xf32, #tpu.memory_space<vmem>>, vector<1x4x16x32xf32>
    %199 = vector.shape_cast %198 : vector<1x4x16x32xf32> to vector<4x16x32xf32>
    "tpu.trace_start"() <{level = 10 : i32, message = "nsd,ndh->nsh"}> : () -> ()
    %cst_127 = arith.constant dense<0.000000e+00> : vector<4x8x32xf32>
    %200 = tpu.matmul %197, %199, %cst_127 {dimension_numbers = #tpu.dot_dimension_numbers<[2], [1], [1], [2], [0, 0, 0, 1, 1, 2], [0], [0]>} : vector<4x8x16xf32>, vector<4x16x32xf32>, vector<4x8x32xf32> -> vector<4x8x32xf32>
    "tpu.trace_stop"() : () -> ()
    %201 = vector.shape_cast %200 : vector<4x8x32xf32> to vector<2x2x8x32xf32>
    %cst_128 = arith.constant dense<0.000000e+00> : vector<2x8x32xf32>
    %202 = vector.multi_reduction <add>, %201, %cst_128 [1] : vector<2x2x8x32xf32> to vector<2x8x32xf32>
    %203 = vector.shape_cast %202 : vector<2x8x32xf32> to vector<16x32xf32>
    %c1_129 = arith.constant 1 : index
    %c0_130 = arith.constant 0 : index
    %c0_131 = arith.constant 0 : index
    %204 = vector.load %arg11[%c1_129, %c0_130, %c0_131] : memref<2x1x32xf32, #tpu.memory_space<vmem>>, vector<1x1x32xf32>
    %205 = vector.shape_cast %204 : vector<1x1x32xf32> to vector<1x32xf32>
    %206 = vector.broadcast %205 : vector<1x32xf32> to vector<16x32xf32>
    %207 = arith.addf %203, %206 : vector<16x32xf32>
    %208 = arith.addf %207, %157 : vector<16x32xf32>
    %c1_132 = arith.constant 1 : index
    %c0_133 = arith.constant 0 : index
    %c0_134 = arith.constant 0 : index
    %209 = vector.load %arg12[%c1_132, %c0_133, %c0_134] : memref<2x1x32xf32, #tpu.memory_space<vmem>>, vector<1x1x32xf32>
    %210 = vector.shape_cast %209 : vector<1x1x32xf32> to vector<1x32xf32>
    %c1_135 = arith.constant 1 : index
    %c0_136 = arith.constant 0 : index
    %c0_137 = arith.constant 0 : index
    %211 = vector.load %arg13[%c1_135, %c0_136, %c0_137] : memref<2x1x32xf32, #tpu.memory_space<vmem>>, vector<1x1x32xf32>
    %212 = vector.shape_cast %211 : vector<1x1x32xf32> to vector<1x32xf32>
    %cst_138 = arith.constant dense<0.000000e+00> : vector<16xf32>
    %213 = vector.multi_reduction <add>, %208, %cst_138 [1] : vector<16x32xf32> to vector<16xf32>
    %214 = vector.shape_cast %213 : vector<16xf32> to vector<16x1xf32>
    %cst_139 = arith.constant 3.200000e+01 : f32
    %215 = vector.broadcast %cst_139 : f32 to vector<16x1xf32>
    %216 = arith.divf %214, %215 : vector<16x1xf32>
    %217 = vector.broadcast %216 : vector<16x1xf32> to vector<16x32xf32>
    %218 = arith.subf %208, %217 : vector<16x32xf32>
    %219 = vector.broadcast %216 : vector<16x1xf32> to vector<16x32xf32>
    %220 = arith.subf %208, %219 : vector<16x32xf32>
    %221 = arith.mulf %218, %220 : vector<16x32xf32>
    %cst_140 = arith.constant dense<0.000000e+00> : vector<16xf32>
    %222 = vector.multi_reduction <add>, %221, %cst_140 [1] : vector<16x32xf32> to vector<16xf32>
    %223 = vector.shape_cast %222 : vector<16xf32> to vector<16x1xf32>
    %cst_141 = arith.constant 3.200000e+01 : f32
    %224 = vector.broadcast %cst_141 : f32 to vector<16x1xf32>
    %225 = arith.divf %223, %224 : vector<16x1xf32>
    %226 = vector.broadcast %216 : vector<16x1xf32> to vector<16x32xf32>
    %227 = arith.subf %208, %226 : vector<16x32xf32>
    %cst_142 = arith.constant 9.99999996E-13 : f32
    %228 = vector.broadcast %cst_142 : f32 to vector<16x1xf32>
    %229 = arith.addf %225, %228 : vector<16x1xf32>
    %230 = math.rsqrt %229 : vector<16x1xf32>
    %231 = vector.broadcast %230 : vector<16x1xf32> to vector<16x32xf32>
    %232 = arith.mulf %227, %231 : vector<16x32xf32>
    %233 = vector.broadcast %210 : vector<1x32xf32> to vector<16x32xf32>
    %234 = arith.mulf %232, %233 : vector<16x32xf32>
    %235 = vector.broadcast %212 : vector<1x32xf32> to vector<16x32xf32>
    %236 = arith.addf %234, %235 : vector<16x32xf32>
    %c1_143 = arith.constant 1 : index
    %c0_144 = arith.constant 0 : index
    %c0_145 = arith.constant 0 : index
    %237 = vector.load %arg14[%c1_143, %c0_144, %c0_145] : memref<2x32x64xf32, #tpu.memory_space<vmem>>, vector<1x32x64xf32>
    %238 = vector.shape_cast %237 : vector<1x32x64xf32> to vector<32x64xf32>
    %cst_146 = arith.constant dense<0.000000e+00> : vector<16x64xf32>
    %239 = tpu.matmul %236, %238, %cst_146 {dimension_numbers = #tpu.dot_dimension_numbers<[1], [0], [0], [1], [0, 0, 1, 1], [], []>} : vector<16x32xf32>, vector<32x64xf32>, vector<16x64xf32> -> vector<16x64xf32>
    %c1_147 = arith.constant 1 : index
    %c0_148 = arith.constant 0 : index
    %c0_149 = arith.constant 0 : index
    %240 = vector.load %arg15[%c1_147, %c0_148, %c0_149] : memref<2x1x64xf32, #tpu.memory_space<vmem>>, vector<1x1x64xf32>
    %241 = vector.shape_cast %240 : vector<1x1x64xf32> to vector<1x64xf32>
    %242 = vector.broadcast %241 : vector<1x64xf32> to vector<16x64xf32>
    %243 = arith.addf %239, %242 : vector<16x64xf32>
    %cst_150 = arith.constant 5.000000e-01 : f32
    %244 = vector.broadcast %cst_150 : f32 to vector<16x64xf32>
    %245 = arith.mulf %244, %243 : vector<16x64xf32>
    %cst_151 = arith.constant 0.707106769 : f32
    %246 = vector.broadcast %cst_151 : f32 to vector<16x64xf32>
    %247 = arith.mulf %243, %246 : vector<16x64xf32>
    %248 = math.erf %247 : vector<16x64xf32>
    %cst_152 = arith.constant 1.000000e+00 : f32
    %249 = vector.broadcast %cst_152 : f32 to vector<16x64xf32>
    %250 = arith.addf %249, %248 : vector<16x64xf32>
    %251 = arith.mulf %245, %250 : vector<16x64xf32>
    %c1_153 = arith.constant 1 : index
    %c0_154 = arith.constant 0 : index
    %c0_155 = arith.constant 0 : index
    %252 = vector.load %arg16[%c1_153, %c0_154, %c0_155] : memref<2x64x32xf32, #tpu.memory_space<vmem>>, vector<1x64x32xf32>
    %253 = vector.shape_cast %252 : vector<1x64x32xf32> to vector<64x32xf32>
    %cst_156 = arith.constant dense<0.000000e+00> : vector<16x32xf32>
    %254 = tpu.matmul %251, %253, %cst_156 {dimension_numbers = #tpu.dot_dimension_numbers<[1], [0], [0], [1], [0, 0, 1, 1], [], []>} : vector<16x64xf32>, vector<64x32xf32>, vector<16x32xf32> -> vector<16x32xf32>
    %c1_157 = arith.constant 1 : index
    %c0_158 = arith.constant 0 : index
    %c0_159 = arith.constant 0 : index
    %255 = vector.load %arg17[%c1_157, %c0_158, %c0_159] : memref<2x1x32xf32, #tpu.memory_space<vmem>>, vector<1x1x32xf32>
    %256 = vector.shape_cast %255 : vector<1x1x32xf32> to vector<1x32xf32>
    %257 = vector.broadcast %256 : vector<1x32xf32> to vector<16x32xf32>
    %258 = arith.addf %254, %257 : vector<16x32xf32>
    %259 = arith.addf %258, %236 : vector<16x32xf32>
    %c1_160 = arith.constant 1 : index
    %c0_161 = arith.constant 0 : index
    %c0_162 = arith.constant 0 : index
    %260 = vector.load %arg18[%c1_160, %c0_161, %c0_162] : memref<2x1x32xf32, #tpu.memory_space<vmem>>, vector<1x1x32xf32>
    %261 = vector.shape_cast %260 : vector<1x1x32xf32> to vector<1x32xf32>
    %c1_163 = arith.constant 1 : index
    %c0_164 = arith.constant 0 : index
    %c0_165 = arith.constant 0 : index
    %262 = vector.load %arg19[%c1_163, %c0_164, %c0_165] : memref<2x1x32xf32, #tpu.memory_space<vmem>>, vector<1x1x32xf32>
    %263 = vector.shape_cast %262 : vector<1x1x32xf32> to vector<1x32xf32>
    %cst_166 = arith.constant dense<0.000000e+00> : vector<16xf32>
    %264 = vector.multi_reduction <add>, %259, %cst_166 [1] : vector<16x32xf32> to vector<16xf32>
    %265 = vector.shape_cast %264 : vector<16xf32> to vector<16x1xf32>
    %cst_167 = arith.constant 3.200000e+01 : f32
    %266 = vector.broadcast %cst_167 : f32 to vector<16x1xf32>
    %267 = arith.divf %265, %266 : vector<16x1xf32>
    %268 = vector.broadcast %267 : vector<16x1xf32> to vector<16x32xf32>
    %269 = arith.subf %259, %268 : vector<16x32xf32>
    %270 = vector.broadcast %267 : vector<16x1xf32> to vector<16x32xf32>
    %271 = arith.subf %259, %270 : vector<16x32xf32>
    %272 = arith.mulf %269, %271 : vector<16x32xf32>
    %cst_168 = arith.constant dense<0.000000e+00> : vector<16xf32>
    %273 = vector.multi_reduction <add>, %272, %cst_168 [1] : vector<16x32xf32> to vector<16xf32>
    %274 = vector.shape_cast %273 : vector<16xf32> to vector<16x1xf32>
    %cst_169 = arith.constant 3.200000e+01 : f32
    %275 = vector.broadcast %cst_169 : f32 to vector<16x1xf32>
    %276 = arith.divf %274, %275 : vector<16x1xf32>
    %277 = vector.broadcast %267 : vector<16x1xf32> to vector<16x32xf32>
    %278 = arith.subf %259, %277 : vector<16x32xf32>
    %cst_170 = arith.constant 9.99999996E-13 : f32
    %279 = vector.broadcast %cst_170 : f32 to vector<16x1xf32>
    %280 = arith.addf %276, %279 : vector<16x1xf32>
    %281 = math.rsqrt %280 : vector<16x1xf32>
    %282 = vector.broadcast %281 : vector<16x1xf32> to vector<16x32xf32>
    %283 = arith.mulf %278, %282 : vector<16x32xf32>
    %284 = vector.broadcast %261 : vector<1x32xf32> to vector<16x32xf32>
    %285 = arith.mulf %283, %284 : vector<16x32xf32>
    %286 = vector.broadcast %263 : vector<1x32xf32> to vector<16x32xf32>
    %287 = arith.addf %285, %286 : vector<16x32xf32>
    %288 = vector.shape_cast %287 : vector<16x32xf32> to vector<2x8x32xf32>
    %289 = vector.extract_strided_slice %288 {offsets = [0, 0, 0], sizes = [2, 1, 32], strides = [1, 1, 1]} : vector<2x8x32xf32> to vector<2x1x32xf32>
    %290 = vector.shape_cast %289 : vector<2x1x32xf32> to vector<2x32xf32>
    %c0_171 = arith.constant 0 : index
    %c0_172 = arith.constant 0 : index
    %291 = vector.load %arg20[%c0_171, %c0_172] : memref<32x32xf32, #tpu.memory_space<vmem>>, vector<32x32xf32>
    %cst_173 = arith.constant dense<0.000000e+00> : vector<2x32xf32>
    %292 = tpu.matmul %290, %291, %cst_173 {dimension_numbers = #tpu.dot_dimension_numbers<[1], [0], [0], [1], [0, 0, 1, 1], [], []>} : vector<2x32xf32>, vector<32x32xf32>, vector<2x32xf32> -> vector<2x32xf32>
    %c0_174 = arith.constant 0 : index
    %c0_175 = arith.constant 0 : index
    %293 = vector.load %arg21[%c0_174, %c0_175] : memref<1x32xf32, #tpu.memory_space<vmem>>, vector<1x32xf32>
    %294 = vector.broadcast %293 : vector<1x32xf32> to vector<2x32xf32>
    %295 = arith.addf %292, %294 : vector<2x32xf32>
    %296 = math.tanh %295 : vector<2x32xf32>
    %c0_176 = arith.constant 0 : index
    %c0_177 = arith.constant 0 : index
    %297 = vector.load %arg22[%c0_176, %c0_177] : memref<32x128xf32, #tpu.memory_space<vmem>>, vector<32x128xf32>
    %cst_178 = arith.constant dense<0.000000e+00> : vector<2x128xf32>
    %298 = tpu.matmul %296, %297, %cst_178 {dimension_numbers = #tpu.dot_dimension_numbers<[1], [0], [0], [1], [0, 0, 1, 1], [], []>} : vector<2x32xf32>, vector<32x128xf32>, vector<2x128xf32> -> vector<2x128xf32>
    %c0_179 = arith.constant 0 : index
    %c0_180 = arith.constant 0 : index
    %299 = vector.load %arg23[%c0_179, %c0_180] : memref<1x128xf32, #tpu.memory_space<vmem>>, vector<1x128xf32>
    %300 = vector.broadcast %299 : vector<1x128xf32> to vector<2x128xf32>
    %301 = arith.addf %298, %300 : vector<2x128xf32>
    %cst_181 = arith.constant dense<0xFF800000> : vector<2xf32>
    %302 = vector.multi_reduction <maximumf>, %301, %cst_181 [1] : vector<2x128xf32> to vector<2xf32>
    %303 = vector.shape_cast %302 : vector<2xf32> to vector<2x1xf32>
    %304 = vector.broadcast %303 : vector<2x1xf32> to vector<2x128xf32>
    %305 = arith.subf %301, %304 : vector<2x128xf32>
    %306 = math.exp %305 : vector<2x128xf32>
    %cst_182 = arith.constant dense<0.000000e+00> : vector<2xf32>
    %307 = vector.multi_reduction <add>, %306, %cst_182 [1] : vector<2x128xf32> to vector<2xf32>
    %308 = vector.shape_cast %307 : vector<2xf32> to vector<2x1xf32>
    %309 = vector.broadcast %308 : vector<2x1xf32> to vector<2x128xf32>
    %310 = arith.divf %306, %309 : vector<2x128xf32>
    %c0_183 = arith.constant 0 : index
    %c0_184 = arith.constant 0 : index
    %311 = vector.load %arg24[%c0_183, %c0_184] : memref<2x128xf32, #tpu.memory_space<vmem>>, vector<2x128xf32>
    tpu.vector_store %arg24[%c0_183, %c0_184], %310 {strides = array<i32>} : memref<2x128xf32, #tpu.memory_space<vmem>>, vector<2x128xf32>,
    return
  }
}

</mosaic_0001>

<llo_original>
// kernel: sentiment_classifier.1
$region0: #{sentiment_classifier.1}
  #allocation0 [shape = 'u32[]', space=smem, size = 0x4, offset = 0x4, fixed_abs, tag = 'smem constant byte address 0x4 - core index']
  #allocation1 [shape = 'u32[144,128]{1,0:T(1,128)}', space=vmem, size = 0x12000, scoped, tag = 'internal scratch']
  %s0 = inlined_call_operand.vmem [shape: f32[16,32], index: 0, kind: input, shape index: {}]
  %s1 = inlined_call_operand.vmem [shape: f32[4,8,8], index: 1, kind: input, shape index: {}]
  %s2 = inlined_call_operand.vmem [shape: f32[1,32], index: 2, kind: input, shape index: {}]
  %s3 = inlined_call_operand.vmem [shape: f32[1,32], index: 3, kind: input, shape index: {}]
  %s4 = inlined_call_operand.vmem [shape: f32[2,4,32,16], index: 4, kind: input, shape index: {}]
  %s5 = inlined_call_operand.vmem [shape: f32[2,4,1,16], index: 5, kind: input, shape index: {}]
  %s6 = inlined_call_operand.vmem [shape: f32[2,4,32,16], index: 6, kind: input, shape index: {}]
  %s7 = inlined_call_operand.vmem [shape: f32[2,4,1,16], index: 7, kind: input, shape index: {}]
  %s8 = inlined_call_operand.vmem [shape: f32[2,4,32,16], index: 8, kind: input, shape index: {}]
  %s9 = inlined_call_operand.vmem [shape: f32[2,4,1,16], index: 9, kind: input, shape index: {}]
  %s10 = inlined_call_operand.vmem [shape: f32[2,4,16,32], index: 10, kind: input, shape index: {}]
  %s11 = inlined_call_operand.vmem [shape: f32[2,1,32], index: 11, kind: input, shape index: {}]
  %s12 = inlined_call_operand.vmem [shape: f32[2,1,32], index: 12, kind: input, shape index: {}]
  %s13 = inlined_call_operand.vmem [shape: f32[2,1,32], index: 13, kind: input, shape index: {}]
  %s14 = inlined_call_operand.vmem [shape: f32[2,32,64], index: 14, kind: input, shape index: {}]
  %s15 = inlined_call_operand.vmem [shape: f32[2,1,64], index: 15, kind: input, shape index: {}]
  %s16 = inlined_call_operand.vmem [shape: f32[2,64,32], index: 16, kind: input, shape index: {}]
  %s17 = inlined_call_operand.vmem [shape: f32[2,1,32], index: 17, kind: input, shape index: {}]
  %s18 = inlined_call_operand.vmem [shape: f32[2,1,32], index: 18, kind: input, shape index: {}]
  %s19 = inlined_call_operand.vmem [shape: f32[2,1,32], index: 19, kind: input, shape index: {}]
  %s20 = inlined_call_operand.vmem [shape: f32[32,32], index: 20, kind: input, shape index: {}]
  %s21 = inlined_call_operand.vmem [shape: f32[1,32], index: 21, kind: input, shape index: {}]
  %s22 = inlined_call_operand.vmem [shape: f32[32,128], index: 22, kind: input, shape index: {}]
  %s23 = inlined_call_operand.vmem [shape: f32[1,128], index: 23, kind: input, shape index: {}]
  %s24 = inlined_call_operand.hbm [shape: f32[2,128], index: 24, kind: output, shape index: {}]
  %s25 = sld [smem:[#allocation0]]
  $region106: #{sentiment_classifier.1} parent=0
    _
  %s27 = ssub.s32 1, %s25
  %s28 = scalar_select 0, %s27, %s25
  $region1: #{sentiment_classifier.1} parent=0
    #allocation2 [shape = 'u8[1024]{0}', space=vmem, size = 0x400, scoped, tag = 'output window, operand 0, single buffered']
    #allocation3 [shape = 's32[1]{0}', space=sflag, size = 0x4, scoped, tag = 'scoped memory for sentiment_classifier.1']
    %29 = vsyncpa [#allocation3], 0
    // Predicated region
    $region2: #{sentiment_classifier.1} parent=1 // pred_check
      _
    $region3: #{sentiment_classifier.1} parent=1 // pred_check_branch
      %31 = sbr.rel (0) target = $region5
    $region4: #{sentiment_classifier.1} parent=1 // pred_region
      _
    $region5: #{sentiment_classifier.1} parent=1 // pred_fallthru
      _
    // Predicated region
    $region6: #{sentiment_classifier.1} parent=1 // pred_check
      _
    $region7: #{sentiment_classifier.1} parent=1 // pred_check_branch
      %33 = sbr.rel (0) target = $region9
    $region8: #{sentiment_classifier.1} parent=1 // pred_region
      _
    $region9: #{sentiment_classifier.1} parent=1 // pred_fallthru
      _
    // Predicated region
    $region10: #{sentiment_classifier.1} parent=1 // pred_check
      _
    $region11: #{sentiment_classifier.1} parent=1 // pred_check_branch
      %35 = sbr.rel (0) target = $region13
    $region12: #{sentiment_classifier.1} parent=1 // pred_region
      _
    $region13: #{sentiment_classifier.1} parent=1 // pred_fallthru
      _
    // Predicated region
    $region14: #{sentiment_classifier.1} parent=1 // pred_check
      _
    $region15: #{sentiment_classifier.1} parent=1 // pred_check_branch
      %37 = sbr.rel (0) target = $region17
    $region16: #{sentiment_classifier.1} parent=1 // pred_region
      _
    $region17: #{sentiment_classifier.1} parent=1 // pred_fallthru
      _
    // Predicated region
    $region18: #{sentiment_classifier.1} parent=1 // pred_check
      _
    $region19: #{sentiment_classifier.1} parent=1 // pred_check_branch
      %39 = sbr.rel (0) target = $region21
    $region20: #{sentiment_classifier.1} parent=1 // pred_region
      _
    $region21: #{sentiment_classifier.1} parent=1 // pred_fallthru
      _
    // Predicated region
    $region22: #{sentiment_classifier.1} parent=1 // pred_check
      _
    $region23: #{sentiment_classifier.1} parent=1 // pred_check_branch
      %41 = sbr.rel (0) target = $region25
    $region24: #{sentiment_classifier.1} parent=1 // pred_region
      _
    $region25: #{sentiment_classifier.1} parent=1 // pred_fallthru
      _
    // Predicated region
    $region26: #{sentiment_classifier.1} parent=1 // pred_check
      _
    $region27: #{sentiment_classifier.1} parent=1 // pred_check_branch
      %43 = sbr.rel (0) target = $region29
    $region28: #{sentiment_classifier.1} parent=1 // pred_region
      _
    $region29: #{sentiment_classifier.1} parent=1 // pred_fallthru
      _
    // Predicated region
    $region30: #{sentiment_classifier.1} parent=1 // pred_check
      _
    $region31: #{sentiment_classifier.1} parent=1 // pred_check_branch
      %45 = sbr.rel (0) target = $region33
    $region32: #{sentiment_classifier.1} parent=1 // pred_region
      _
    $region33: #{sentiment_classifier.1} parent=1 // pred_fallthru
      _
    // Predicated region
    $region34: #{sentiment_classifier.1} parent=1 // pred_check
      _
    $region35: #{sentiment_classifier.1} parent=1 // pred_check_branch
      %47 = sbr.rel (0) target = $region37
    $region36: #{sentiment_classifier.1} parent=1 // pred_region
      _
    $region37: #{sentiment_classifier.1} parent=1 // pred_fallthru
      _
    // Predicated region
    $region38: #{sentiment_classifier.1} parent=1 // pred_check
      _
    $region39: #{sentiment_classifier.1} parent=1 // pred_check_branch
      %49 = sbr.rel (0) target = $region41
    $region40: #{sentiment_classifier.1} parent=1 // pred_region
      _
    $region41: #{sentiment_classifier.1} parent=1 // pred_fallthru
      _
    // Predicated region
    $region42: #{sentiment_classifier.1} parent=1 // pred_check
      _
    $region43: #{sentiment_classifier.1} parent=1 // pred_check_branch
      %51 = sbr.rel (0) target = $region45
    $region44: #{sentiment_classifier.1} parent=1 // pred_region
      _
    $region45: #{sentiment_classifier.1} parent=1 // pred_fallthru
      _
    // Predicated region
    $region46: #{sentiment_classifier.1} parent=1 // pred_check
      _
    $region47: #{sentiment_classifier.1} parent=1 // pred_check_branch
      %53 = sbr.rel (0) target = $region49
    $region48: #{sentiment_classifier.1} parent=1 // pred_region
      _
    $region49: #{sentiment_classifier.1} parent=1 // pred_fallthru
      _
    // Predicated region
    $region50: #{sentiment_classifier.1} parent=1 // pred_check
      _
    $region51: #{sentiment_classifier.1} parent=1 // pred_check_branch
      %55 = sbr.rel (0) target = $region53
    $region52: #{sentiment_classifier.1} parent=1 // pred_region
      _
    $region53: #{sentiment_classifier.1} parent=1 // pred_fallthru
      _
    // Predicated region
    $region54: #{sentiment_classifier.1} parent=1 // pred_check
      _
    $region55: #{sentiment_classifier.1} parent=1 // pred_check_branch
      %57 = sbr.rel (0) target = $region57
    $region56: #{sentiment_classifier.1} parent=1 // pred_region
      _
    $region57: #{sentiment_classifier.1} parent=1 // pred_fallthru
      _
    // Predicated region
    $region58: #{sentiment_classifier.1} parent=1 // pred_check
      _
    $region59: #{sentiment_classifier.1} parent=1 // pred_check_branch
      %59 = sbr.rel (0) target = $region61
    $region60: #{sentiment_classifier.1} parent=1 // pred_region
      _
    $region61: #{sentiment_classifier.1} parent=1 // pred_fallthru
      _
    // Predicated region
    $region62: #{sentiment_classifier.1} parent=1 // pred_check
      _
    $region63: #{sentiment_classifier.1} parent=1 // pred_check_branch
      %61 = sbr.rel (0) target = $region65
    $region64: #{sentiment_classifier.1} parent=1 // pred_region
      _
    $region65: #{sentiment_classifier.1} parent=1 // pred_fallthru
      _
    // Predicated region
    $region66: #{sentiment_classifier.1} parent=1 // pred_check
      _
    $region67: #{sentiment_classifier.1} parent=1 // pred_check_branch
      %63 = sbr.rel (0) target = $region69
    $region68: #{sentiment_classifier.1} parent=1 // pred_region
      _
    $region69: #{sentiment_classifier.1} parent=1 // pred_fallthru
      _
    // Predicated region
    $region70: #{sentiment_classifier.1} parent=1 // pred_check
      _
    $region71: #{sentiment_classifier.1} parent=1 // pred_check_branch
      %65 = sbr.rel (0) target = $region73
    $region72: #{sentiment_classifier.1} parent=1 // pred_region
      _
    $region73: #{sentiment_classifier.1} parent=1 // pred_fallthru
      _
    // Predicated region
    $region74: #{sentiment_classifier.1} parent=1 // pred_check
      _
    $region75: #{sentiment_classifier.1} parent=1 // pred_check_branch
      %67 = sbr.rel (0) target = $region77
    $region76: #{sentiment_classifier.1} parent=1 // pred_region
      _
    $region77: #{sentiment_classifier.1} parent=1 // pred_fallthru
      _
    // Predicated region
    $region78: #{sentiment_classifier.1} parent=1 // pred_check
      _
    $region79: #{sentiment_classifier.1} parent=1 // pred_check_branch
      %69 = sbr.rel (0) target = $region81
    $region80: #{sentiment_classifier.1} parent=1 // pred_region
      _
    $region81: #{sentiment_classifier.1} parent=1 // pred_fallthru
      _
    // Predicated region
    $region82: #{sentiment_classifier.1} parent=1 // pred_check
      _
    $region83: #{sentiment_classifier.1} parent=1 // pred_check_branch
      %71 = sbr.rel (0) target = $region85
    $region84: #{sentiment_classifier.1} parent=1 // pred_region
      _
    $region85: #{sentiment_classifier.1} parent=1 // pred_fallthru
      _
    // Predicated region
    $region86: #{sentiment_classifier.1} parent=1 // pred_check
      _
    $region87: #{sentiment_classifier.1} parent=1 // pred_check_branch
      %73 = sbr.rel (0) target = $region89
    $region88: #{sentiment_classifier.1} parent=1 // pred_region
      _
    $region89: #{sentiment_classifier.1} parent=1 // pred_fallthru
      _
    // Predicated region
    $region90: #{sentiment_classifier.1} parent=1 // pred_check
      _
    $region91: #{sentiment_classifier.1} parent=1 // pred_check_branch
      %75 = sbr.rel (0) target = $region93
    $region92: #{sentiment_classifier.1} parent=1 // pred_region
      _
    $region93: #{sentiment_classifier.1} parent=1 // pred_fallthru
      _
    // Predicated region
    $region94: #{sentiment_classifier.1} parent=1 // pred_check
      _
    $region95: #{sentiment_classifier.1} parent=1 // pred_check_branch
      %77 = sbr.rel (0) target = $region97
    $region96: #{sentiment_classifier.1} parent=1 // pred_region
      _
    $region97: #{sentiment_classifier.1} parent=1 // pred_fallthru
      _
    %v78 = vld [vmem:[%s0] sm:$0xff]
    %v79 = vld [vmem:[%s0 + $0x8] sm:$0xff]
    %v80 = vld [vmem:[%s2] sm:$0x1]
    %v81 = vld [vmem:[%s3] sm:$0x1]
    %vm82 = vcmask 261120
    %v83 = vsel %vm82, %v78, 0.0
    %84 = vadd.xlane.f32.xlu0 %v83
    %v85 = vpop.xlane.xlu0 %84
    %v86 = vsel %vm82, %v79, 0.0
    %87 = vadd.xlane.f32.xlu0 %v86
    %v88 = vpop.xlane.xlu0 %87
    %v89 = vrcp.pop 32.0
    %v90 = vmul.f32 %v85, %v89
    %v91 = vmul.f32 %v88, %v89
    %v92 = vsub.f32 %v78, %v90
    %v93 = vsub.f32 %v79, %v91
    %v94 = vmul.f32 %v92, %v92
    %v95 = vmul.f32 %v93, %v93
    %v96 = vsel %vm82, %v94, 0.0
    %97 = vadd.xlane.f32.xlu0 %v96
    %v98 = vpop.xlane.xlu0 %97
    %v99 = vsel %vm82, %v95, 0.0
    %100 = vadd.xlane.f32.xlu0 %v99
    %v101 = vpop.xlane.xlu0 %100
    %v102 = vmul.f32 %v98, %v89
    %v103 = vmul.f32 %v101, %v89
    %v104 = vadd.f32 %v102, 1e-12
    %v105 = vadd.f32 %v103, 1e-12
    %v106 = vrsqrt.pop %v104
    %v107 = vrsqrt.pop %v105
    %v108 = vmul.f32 %v92, %v106
    %v109 = vmul.f32 %v93, %v107
    %v111 = vlaneseq
    %v112 = vshrl.u32 %v111, 7
    %v113 = vsub.s32 0, %v112
    %v114 = vrot.slane %v80, %v113
    %v116 = vmul.f32 %v108, %v114
    %v117 = vmul.f32 %v109, %v114
    %v119 = vlaneseq
    %v120 = vshrl.u32 %v119, 7
    %v121 = vsub.s32 0, %v120
    %v122 = vrot.slane %v81, %v121
    %v124 = vadd.f32 %v116, %v122
    %v125 = vadd.f32 %v117, %v122
    %v126 = vld [vmem:[%s1] sm:$0xff]
    %v127 = vld [vmem:[%s1 + $0x8] sm:$0xff]
    %v128 = vld [vmem:[%s1 + $0x10] sm:$0xff]
    %v129 = vld [vmem:[%s1 + $0x18] sm:$0xff]
    %v130 = vld [vmem:[%s4] sm:$0xff]
    %v131 = vld [vmem:[%s4 + $0x8] sm:$0xff]
    %v132 = vld [vmem:[%s4 + $0x10] sm:$0xff]
    %v133 = vld [vmem:[%s4 + $0x18] sm:$0xff]
    %v134 = vld [vmem:[%s4 + $0x20] sm:$0xff]
    %v135 = vld [vmem:[%s4 + $0x28] sm:$0xff]
    %v136 = vld [vmem:[%s4 + $0x30] sm:$0xff]
    %v137 = vld [vmem:[%s4 + $0x38] sm:$0xff]
    %v138 = vld [vmem:[%s4 + $0x40] sm:$0xff]
    %v139 = vld [vmem:[%s4 + $0x48] sm:$0xff]
    %v140 = vld [vmem:[%s4 + $0x50] sm:$0xff]
    %v141 = vld [vmem:[%s4 + $0x58] sm:$0xff]
    %v142 = vld [vmem:[%s4 + $0x60] sm:$0xff]
    %v143 = vld [vmem:[%s4 + $0x68] sm:$0xff]
    %v144 = vld [vmem:[%s4 + $0x70] sm:$0xff]
    %v145 = vld [vmem:[%s4 + $0x78] sm:$0xff]
    %v146 = vld [vmem:[%s5] sm:$0x1]
    %v147 = vld [vmem:[%s5 + $0x1] sm:$0x1]
    %v148 = vld [vmem:[%s5 + $0x2] sm:$0x1]
    %v149 = vld [vmem:[%s5 + $0x3] sm:$0x1]
    %v154 = vlaneseq
    %v155 = vshrl.u32 %v154, 7
    %v156 = vsub.s32 0, %v155
    %v157 = vrot.slane %v146, %v156
    %v158 = vlaneseq
    %v159 = vshrl.u32 %v158, 7
    %v160 = vsub.s32 0, %v159
    %v161 = vrot.slane %v147, %v160
    %v162 = vlaneseq
    %v163 = vshrl.u32 %v162, 7
    %v164 = vsub.s32 0, %v163
    %v165 = vrot.slane %v148, %v164
    %v166 = vlaneseq
    %v167 = vshrl.u32 %v166, 7
    %v168 = vsub.s32 0, %v167
    %v169 = vrot.slane %v149, %v168
    %v175 = vsel %vm82, %v124, 0
    %177 = vmatprep.subr.mxu0 0.0
    %178 = vmatpush1.msra.mxu0 %v130
    %179 = vmatprep.subr.mxu0 0.0
    %180 = vmatpush1.msra.mxu0 %v131
    %181 = vmatprep.subr.mxu0 0.0
    %182 = vmatpush1.msra.mxu0 %v132
    %183 = vmatprep.subr.mxu0 0.0
    %184 = vmatpush1.msra.mxu0 %v133
    %185 = vmatprep.subr.mxu0 0.0
    %186 = vmatpush1.msra.mxu0 0.0
    %187 = vmatprep.subr.mxu0 0.0
    %188 = vmatpush1.msra.mxu0 0.0
    %189 = vmatprep.subr.mxu0 0.0
    %190 = vmatpush1.msra.mxu0 0.0
    %191 = vmatprep.subr.mxu0 0.0
    %192 = vmatpush1.msra.mxu0 0.0
    %193 = vmatprep.subr.mxu0 0.0
    %194 = vmatpush1.msra.mxu0 0.0
    %195 = vmatprep.subr.mxu0 0.0
    %196 = vmatpush1.msra.mxu0 0.0
    %197 = vmatprep.subr.mxu0 0.0
    %198 = vmatpush1.msra.mxu0 0.0
    %199 = vmatprep.subr.mxu0 0.0
    %200 = vmatpush1.msra.mxu0 0.0
    %201 = vmatprep.subr.mxu0 0.0
    %202 = vmatpush1.msra.mxu0 0.0
    %203 = vmatprep.subr.mxu0 0.0
    %204 = vmatpush1.msra.mxu0 0.0
    %205 = vmatprep.subr.mxu0 0.0
    %206 = vmatpush1.msra.mxu0 0.0
    %207 = vmatprep.subr.mxu0 0.0
    %208 = vmatpush1.msra.mxu0 0.0
    %209 = vmatprep.subr.mxu0 0.0
    %210 = vmatpush1.msra.mxu0 0.0
    %211 = vmatprep.subr.mxu0 0.0
    %212 = vmatpush1.msra.mxu0 0.0
    %213 = vmatprep.subr.mxu0 0.0
    %214 = vmatpush1.msra.mxu0 0.0
    %215 = vmatprep.subr.mxu0 0.0
    %216 = vmatpush1.msra.mxu0 0.0
    %217 = vmatprep.subr.mxu0 0.0
    %218 = vmatpush1.msra.mxu0 0.0
    %219 = vmatprep.subr.mxu0 0.0
    %220 = vmatpush1.msra.mxu0 0.0
    %221 = vmatprep.subr.mxu0 0.0
    %222 = vmatpush1.msra.mxu0 0.0
    %223 = vmatprep.subr.mxu0 0.0
    %224 = vmatpush1.msra.mxu0 0.0
    %225 = vmatprep.subr.mxu0 0.0
    %226 = vmatpush1.msra.mxu0 0.0
    %227 = vmatprep.subr.mxu0 0.0
    %228 = vmatpush1.msra.mxu0 0.0
    %229 = vmatprep.subr.mxu0 0.0
    %230 = vmatpush1.msra.mxu0 0.0
    %231 = vmatprep.subr.mxu0 0.0
    %232 = vmatpush1.msra.mxu0 0.0
    %233 = vmatprep.subr.mxu0 0.0
    %234 = vmatpush1.msra.mxu0 0.0
    %235 = vmatprep.subr.mxu0 0.0
    %236 = vmatpush1.msra.mxu0 0.0
    %237 = vmatprep.subr.mxu0 0.0
    %238 = vmatpush1.msra.mxu0 0.0
    %239 = vmatprep.subr.mxu0 0.0
    %240 = vmatpush1.msra.mxu0 0.0
    %241 = vmatprep.mubr.f32.mxu0 0.0
    %242 = vmatmul.mubr.f32.gmra.mrb[0].mxu0 %v175
    %v243 = vpop.f32.mrb[0].mxu0
    %v244 = vadd.f32 %v157, %v243
    %v245 = vpop.f32.mrb[0].mxu0
    %246 = vdwg.mxu0
    %247 = vmatprep.subr.mxu0 0.0
    %248 = vmatpush1.msra.mxu0 %v134
    %249 = vmatprep.subr.mxu0 0.0
    %250 = vmatpush1.msra.mxu0 %v135
    %251 = vmatprep.subr.mxu0 0.0
    %252 = vmatpush1.msra.mxu0 %v136
    %253 = vmatprep.subr.mxu0 0.0
    %254 = vmatpush1.msra.mxu0 %v137
    %255 = vmatprep.subr.mxu0 0.0
    %256 = vmatpush1.msra.mxu0 0.0
    %257 = vmatprep.subr.mxu0 0.0
    %258 = vmatpush1.msra.mxu0 0.0
    %259 = vmatprep.subr.mxu0 0.0
    %260 = vmatpush1.msra.mxu0 0.0
    %261 = vmatprep.subr.mxu0 0.0
    %262 = vmatpush1.msra.mxu0 0.0
    %263 = vmatprep.subr.mxu0 0.0
    %264 = vmatpush1.msra.mxu0 0.0
    %265 = vmatprep.subr.mxu0 0.0
    %266 = vmatpush1.msra.mxu0 0.0
    %267 = vmatprep.subr.mxu0 0.0
    %268 = vmatpush1.msra.mxu0 0.0
    %269 = vmatprep.subr.mxu0 0.0
    %270 = vmatpush1.msra.mxu0 0.0
    %271 = vmatprep.subr.mxu0 0.0
    %272 = vmatpush1.msra.mxu0 0.0
    %273 = vmatprep.subr.mxu0 0.0
    %274 = vmatpush1.msra.mxu0 0.0
    %275 = vmatprep.subr.mxu0 0.0
    %276 = vmatpush1.msra.mxu0 0.0
    %277 = vmatprep.subr.mxu0 0.0
    %278 = vmatpush1.msra.mxu0 0.0
    %279 = vmatprep.subr.mxu0 0.0
    %280 = vmatpush1.msra.mxu0 0.0
    %281 = vmatprep.subr.mxu0 0.0
    %282 = vmatpush1.msra.mxu0 0.0
    %283 = vmatprep.subr.mxu0 0.0
    %284 = vmatpush1.msra.mxu0 0.0
    %285 = vmatprep.subr.mxu0 0.0
    %286 = vmatpush1.msra.mxu0 0.0
    %287 = vmatprep.subr.mxu0 0.0
    %288 = vmatpush1.msra.mxu0 0.0
    %289 = vmatprep.subr.mxu0 0.0
    %290 = vmatpush1.msra.mxu0 0.0
    %291 = vmatprep.subr.mxu0 0.0
    %292 = vmatpush1.msra.mxu0 0.0
    %293 = vmatprep.subr.mxu0 0.0
    %294 = vmatpush1.msra.mxu0 0.0
    %295 = vmatprep.subr.mxu0 0.0
    %296 = vmatpush1.msra.mxu0 0.0
    %297 = vmatprep.subr.mxu0 0.0
    %298 = vmatpush1.msra.mxu0 0.0
    %299 = vmatprep.subr.mxu0 0.0
    %300 = vmatpush1.msra.mxu0 0.0
    %301 = vmatprep.subr.mxu0 0.0
    %302 = vmatpush1.msra.mxu0 0.0
    %303 = vmatprep.subr.mxu0 0.0
    %304 = vmatpush1.msra.mxu0 0.0
    %305 = vmatprep.subr.mxu0 0.0
    %306 = vmatpush1.msra.mxu0 0.0
    %307 = vmatprep.subr.mxu0 0.0
    %308 = vmatpush1.msra.mxu0 0.0
    %309 = vmatprep.subr.mxu0 0.0
    %310 = vmatpush1.msra.mxu0 0.0
    %311 = vmatprep.mubr.f32.mxu0 0.0
    %312 = vmatmul.mubr.f32.gmra.mrb[0].mxu0 %v175
    %v313 = vpop.f32.mrb[0].mxu0
    %v314 = vadd.f32 %v161, %v313
    %v315 = vpop.f32.mrb[0].mxu0
    %316 = vdwg.mxu0
    %v318 = vsel %vm82, %v125, 0
    %320 = vmatprep.subr.mxu0 0.0
    %321 = vmatpush1.msra.mxu0 %v138
    %322 = vmatprep.subr.mxu0 0.0
    %323 = vmatpush1.msra.mxu0 %v139
    %324 = vmatprep.subr.mxu0 0.0
    %325 = vmatpush1.msra.mxu0 %v140
    %326 = vmatprep.subr.mxu0 0.0
    %327 = vmatpush1.msra.mxu0 %v141
    %328 = vmatprep.subr.mxu0 0.0
    %329 = vmatpush1.msra.mxu0 0.0
    %330 = vmatprep.subr.mxu0 0.0
    %331 = vmatpush1.msra.mxu0 0.0
    %332 = vmatprep.subr.mxu0 0.0
    %333 = vmatpush1.msra.mxu0 0.0
    %334 = vmatprep.subr.mxu0 0.0
    %335 = vmatpush1.msra.mxu0 0.0
    %336 = vmatprep.subr.mxu0 0.0
    %337 = vmatpush1.msra.mxu0 0.0
    %338 = vmatprep.subr.mxu0 0.0
    %339 = vmatpush1.msra.mxu0 0.0
    %340 = vmatprep.subr.mxu0 0.0
    %341 = vmatpush1.msra.mxu0 0.0
    %342 = vmatprep.subr.mxu0 0.0
    %343 = vmatpush1.msra.mxu0 0.0
    %344 = vmatprep.subr.mxu0 0.0
    %345 = vmatpush1.msra.mxu0 0.0
    %346 = vmatprep.subr.mxu0 0.0
    %347 = vmatpush1.msra.mxu0 0.0
    %348 = vmatprep.subr.mxu0 0.0
    %349 = vmatpush1.msra.mxu0 0.0
    %350 = vmatprep.subr.mxu0 0.0
    %351 = vmatpush1.msra.mxu0 0.0
    %352 = vmatprep.subr.mxu0 0.0
    %353 = vmatpush1.msra.mxu0 0.0
    %354 = vmatprep.subr.mxu0 0.0
    %355 = vmatpush1.msra.mxu0 0.0
    %356 = vmatprep.subr.mxu0 0.0
    %357 = vmatpush1.msra.mxu0 0.0
    %358 = vmatprep.subr.mxu0 0.0
    %359 = vmatpush1.msra.mxu0 0.0
    %360 = vmatprep.subr.mxu0 0.0
    %361 = vmatpush1.msra.mxu0 0.0
    %362 = vmatprep.subr.mxu0 0.0
    %363 = vmatpush1.msra.mxu0 0.0
    %364 = vmatprep.subr.mxu0 0.0
    %365 = vmatpush1.msra.mxu0 0.0
    %366 = vmatprep.subr.mxu0 0.0
    %367 = vmatpush1.msra.mxu0 0.0
    %368 = vmatprep.subr.mxu0 0.0
    %369 = vmatpush1.msra.mxu0 0.0
    %370 = vmatprep.subr.mxu0 0.0
    %371 = vmatpush1.msra.mxu0 0.0
    %372 = vmatprep.subr.mxu0 0.0
    %373 = vmatpush1.msra.mxu0 0.0
    %374 = vmatprep.subr.mxu0 0.0
    %375 = vmatpush1.msra.mxu0 0.0
    %376 = vmatprep.subr.mxu0 0.0
    %377 = vmatpush1.msra.mxu0 0.0
    %378 = vmatprep.subr.mxu0 0.0
    %379 = vmatpush1.msra.mxu0 0.0
    %380 = vmatprep.subr.mxu0 0.0
    %381 = vmatpush1.msra.mxu0 0.0
    %382 = vmatprep.subr.mxu0 0.0
    %383 = vmatpush1.msra.mxu0 0.0
    %384 = vmatprep.mubr.f32.mxu0 0.0
    %385 = vmatmul.mubr.f32.gmra.mrb[0].mxu0 %v318
    %v386 = vpop.f32.mrb[0].mxu0
    %v387 = vadd.f32 %v165, %v386
    %v388 = vpop.f32.mrb[0].mxu0
    %389 = vdwg.mxu0
    %390 = vmatprep.subr.mxu0 0.0
    %391 = vmatpush1.msra.mxu0 %v142
    %392 = vmatprep.subr.mxu0 0.0
    %393 = vmatpush1.msra.mxu0 %v143
    %394 = vmatprep.subr.mxu0 0.0
    %395 = vmatpush1.msra.mxu0 %v144
    %396 = vmatprep.subr.mxu0 0.0
    %397 = vmatpush1.msra.mxu0 %v145
    %398 = vmatprep.subr.mxu0 0.0
    %399 = vmatpush1.msra.mxu0 0.0
    %400 = vmatprep.subr.mxu0 0.0
    %401 = vmatpush1.msra.mxu0 0.0
    %402 = vmatprep.subr.mxu0 0.0
    %403 = vmatpush1.msra.mxu0 0.0
    %404 = vmatprep.subr.mxu0 0.0
    %405 = vmatpush1.msra.mxu0 0.0
    %406 = vmatprep.subr.mxu0 0.0
    %407 = vmatpush1.msra.mxu0 0.0
    %408 = vmatprep.subr.mxu0 0.0
    %409 = vmatpush1.msra.mxu0 0.0
    %410 = vmatprep.subr.mxu0 0.0
    %411 = vmatpush1.msra.mxu0 0.0
    %412 = vmatprep.subr.mxu0 0.0
    %413 = vmatpush1.msra.mxu0 0.0
    %414 = vmatprep.subr.mxu0 0.0
    %415 = vmatpush1.msra.mxu0 0.0
    %416 = vmatprep.subr.mxu0 0.0
    %417 = vmatpush1.msra.mxu0 0.0
    %418 = vmatprep.subr.mxu0 0.0
    %419 = vmatpush1.msra.mxu0 0.0
    %420 = vmatprep.subr.mxu0 0.0
    %421 = vmatpush1.msra.mxu0 0.0
    %422 = vmatprep.subr.mxu0 0.0
    %423 = vmatpush1.msra.mxu0 0.0
    %424 = vmatprep.subr.mxu0 0.0
    %425 = vmatpush1.msra.mxu0 0.0
    %426 = vmatprep.subr.mxu0 0.0
    %427 = vmatpush1.msra.mxu0 0.0
    %428 = vmatprep.subr.mxu0 0.0
    %429 = vmatpush1.msra.mxu0 0.0
    %430 = vmatprep.subr.mxu0 0.0
    %431 = vmatpush1.msra.mxu0 0.0
    %432 = vmatprep.subr.mxu0 0.0
    %433 = vmatpush1.msra.mxu0 0.0
    %434 = vmatprep.subr.mxu0 0.0
    %435 = vmatpush1.msra.mxu0 0.0
    %436 = vmatprep.subr.mxu0 0.0
    %437 = vmatpush1.msra.mxu0 0.0
    %438 = vmatprep.subr.mxu0 0.0
    %439 = vmatpush1.msra.mxu0 0.0
    %440 = vmatprep.subr.mxu0 0.0
    %441 = vmatpush1.msra.mxu0 0.0
    %442 = vmatprep.subr.mxu0 0.0
    %443 = vmatpush1.msra.mxu0 0.0
    %444 = vmatprep.subr.mxu0 0.0
    %445 = vmatpush1.msra.mxu0 0.0
    %446 = vmatprep.subr.mxu0 0.0
    %447 = vmatpush1.msra.mxu0 0.0
    %448 = vmatprep.subr.mxu0 0.0
    %449 = vmatpush1.msra.mxu0 0.0
    %450 = vmatprep.subr.mxu0 0.0
    %451 = vmatpush1.msra.mxu0 0.0
    %452 = vmatprep.subr.mxu0 0.0
    %453 = vmatpush1.msra.mxu0 0.0
    %454 = vmatprep.mubr.f32.mxu0 0.0
    %455 = vmatmul.mubr.f32.gmra.mrb[0].mxu0 %v318
    %v456 = vpop.f32.mrb[0].mxu0
    %v457 = vadd.f32 %v169, %v456
    %v458 = vpop.f32.mrb[0].mxu0
    %459 = vdwg.mxu0
    %v460 = vld [vmem:[%s6] sm:$0xff]
    %v461 = vld [vmem:[%s6 + $0x8] sm:$0xff]
    %v462 = vld [vmem:[%s6 + $0x10] sm:$0xff]
    %v463 = vld [vmem:[%s6 + $0x18] sm:$0xff]
    %v464 = vld [vmem:[%s6 + $0x20] sm:$0xff]
    %v465 = vld [vmem:[%s6 + $0x28] sm:$0xff]
    %v466 = vld [vmem:[%s6 + $0x30] sm:$0xff]
    %v467 = vld [vmem:[%s6 + $0x38] sm:$0xff]
    %v468 = vld [vmem:[%s6 + $0x40] sm:$0xff]
    %v469 = vld [vmem:[%s6 + $0x48] sm:$0xff]
    %v470 = vld [vmem:[%s6 + $0x50] sm:$0xff]
    %v471 = vld [vmem:[%s6 + $0x58] sm:$0xff]
    %v472 = vld [vmem:[%s6 + $0x60] sm:$0xff]
    %v473 = vld [vmem:[%s6 + $0x68] sm:$0xff]
    %v474 = vld [vmem:[%s6 + $0x70] sm:$0xff]
    %v475 = vld [vmem:[%s6 + $0x78] sm:$0xff]
    %v476 = vld [vmem:[%s7] sm:$0x1]
    %v477 = vld [vmem:[%s7 + $0x1] sm:$0x1]
    %v478 = vld [vmem:[%s7 + $0x2] sm:$0x1]
    %v479 = vld [vmem:[%s7 + $0x3] sm:$0x1]
    %v484 = vlaneseq
    %v485 = vshrl.u32 %v484, 7
    %v486 = vsub.s32 0, %v485
    %v487 = vrot.slane %v476, %v486
    %v488 = vlaneseq
    %v489 = vshrl.u32 %v488, 7
    %v490 = vsub.s32 0, %v489
    %v491 = vrot.slane %v477, %v490
    %v492 = vlaneseq
    %v493 = vshrl.u32 %v492, 7
    %v494 = vsub.s32 0, %v493
    %v495 = vrot.slane %v478, %v494
    %v496 = vlaneseq
    %v497 = vshrl.u32 %v496, 7
    %v498 = vsub.s32 0, %v497
    %v499 = vrot.slane %v479, %v498
    %504 = vmatprep.subr.mxu0 0.0
    %505 = vmatpush1.msra.mxu0 %v460
    %506 = vmatprep.subr.mxu0 0.0
    %507 = vmatpush1.msra.mxu0 %v461
    %508 = vmatprep.subr.mxu0 0.0
    %509 = vmatpush1.msra.mxu0 %v462
    %510 = vmatprep.subr.mxu0 0.0
    %511 = vmatpush1.msra.mxu0 %v463
    %512 = vmatprep.subr.mxu0 0.0
    %513 = vmatpush1.msra.mxu0 0.0
    %514 = vmatprep.subr.mxu0 0.0
    %515 = vmatpush1.msra.mxu0 0.0
    %516 = vmatprep.subr.mxu0 0.0
    %517 = vmatpush1.msra.mxu0 0.0
    %518 = vmatprep.subr.mxu0 0.0
    %519 = vmatpush1.msra.mxu0 0.0
    %520 = vmatprep.subr.mxu0 0.0
    %521 = vmatpush1.msra.mxu0 0.0
    %522 = vmatprep.subr.mxu0 0.0
    %523 = vmatpush1.msra.mxu0 0.0
    %524 = vmatprep.subr.mxu0 0.0
    %525 = vmatpush1.msra.mxu0 0.0
    %526 = vmatprep.subr.mxu0 0.0
    %527 = vmatpush1.msra.mxu0 0.0
    %528 = vmatprep.subr.mxu0 0.0
    %529 = vmatpush1.msra.mxu0 0.0
    %530 = vmatprep.subr.mxu0 0.0
    %531 = vmatpush1.msra.mxu0 0.0
    %532 = vmatprep.subr.mxu0 0.0
    %533 = vmatpush1.msra.mxu0 0.0
    %534 = vmatprep.subr.mxu0 0.0
    %535 = vmatpush1.msra.mxu0 0.0
    %536 = vmatprep.subr.mxu0 0.0
    %537 = vmatpush1.msra.mxu0 0.0
    %538 = vmatprep.subr.mxu0 0.0
    %539 = vmatpush1.msra.mxu0 0.0
    %540 = vmatprep.subr.mxu0 0.0
    %541 = vmatpush1.msra.mxu0 0.0
    %542 = vmatprep.subr.mxu0 0.0
    %543 = vmatpush1.msra.mxu0 0.0
    %544 = vmatprep.subr.mxu0 0.0
    %545 = vmatpush1.msra.mxu0 0.0
    %546 = vmatprep.subr.mxu0 0.0
    %547 = vmatpush1.msra.mxu0 0.0
    %548 = vmatprep.subr.mxu0 0.0
    %549 = vmatpush1.msra.mxu0 0.0
    %550 = vmatprep.subr.mxu0 0.0
    %551 = vmatpush1.msra.mxu0 0.0
    %552 = vmatprep.subr.mxu0 0.0
    %553 = vmatpush1.msra.mxu0 0.0
    %554 = vmatprep.subr.mxu0 0.0
    %555 = vmatpush1.msra.mxu0 0.0
    %556 = vmatprep.subr.mxu0 0.0
    %557 = vmatpush1.msra.mxu0 0.0
    %558 = vmatprep.subr.mxu0 0.0
    %559 = vmatpush1.msra.mxu0 0.0
    %560 = vmatprep.subr.mxu0 0.0
    %561 = vmatpush1.msra.mxu0 0.0
    %562 = vmatprep.subr.mxu0 0.0
    %563 = vmatpush1.msra.mxu0 0.0
    %564 = vmatprep.subr.mxu0 0.0
    %565 = vmatpush1.msra.mxu0 0.0
    %566 = vmatprep.subr.mxu0 0.0
    %567 = vmatpush1.msra.mxu0 0.0
    %568 = vmatprep.mubr.f32.mxu0 0.0
    %569 = vmatmul.mubr.f32.gmra.mrb[0].mxu0 %v175
    %v570 = vpop.f32.mrb[0].mxu0
    %v571 = vadd.f32 %v487, %v570
    %v572 = vpop.f32.mrb[0].mxu0
    %573 = vdwg.mxu0
    %574 = vmatprep.subr.mxu0 0.0
    %575 = vmatpush1.msra.mxu0 %v464
    %576 = vmatprep.subr.mxu0 0.0
    %577 = vmatpush1.msra.mxu0 %v465
    %578 = vmatprep.subr.mxu0 0.0
    %579 = vmatpush1.msra.mxu0 %v466
    %580 = vmatprep.subr.mxu0 0.0
    %581 = vmatpush1.msra.mxu0 %v467
    %582 = vmatprep.subr.mxu0 0.0
    %583 = vmatpush1.msra.mxu0 0.0
    %584 = vmatprep.subr.mxu0 0.0
    %585 = vmatpush1.msra.mxu0 0.0
    %586 = vmatprep.subr.mxu0 0.0
    %587 = vmatpush1.msra.mxu0 0.0
    %588 = vmatprep.subr.mxu0 0.0
    %589 = vmatpush1.msra.mxu0 0.0
    %590 = vmatprep.subr.mxu0 0.0
    %591 = vmatpush1.msra.mxu0 0.0
    %592 = vmatprep.subr.mxu0 0.0
    %593 = vmatpush1.msra.mxu0 0.0
    %594 = vmatprep.subr.mxu0 0.0
    %595 = vmatpush1.msra.mxu0 0.0
    %596 = vmatprep.subr.mxu0 0.0
    %597 = vmatpush1.msra.mxu0 0.0
    %598 = vmatprep.subr.mxu0 0.0
    %599 = vmatpush1.msra.mxu0 0.0
    %600 = vmatprep.subr.mxu0 0.0
    %601 = vmatpush1.msra.mxu0 0.0
    %602 = vmatprep.subr.mxu0 0.0
    %603 = vmatpush1.msra.mxu0 0.0
    %604 = vmatprep.subr.mxu0 0.0
    %605 = vmatpush1.msra.mxu0 0.0
    %606 = vmatprep.subr.mxu0 0.0
    %607 = vmatpush1.msra.mxu0 0.0
    %608 = vmatprep.subr.mxu0 0.0
    %609 = vmatpush1.msra.mxu0 0.0
    %610 = vmatprep.subr.mxu0 0.0
    %611 = vmatpush1.msra.mxu0 0.0
    %612 = vmatprep.subr.mxu0 0.0
    %613 = vmatpush1.msra.mxu0 0.0
    %614 = vmatprep.subr.mxu0 0.0
    %615 = vmatpush1.msra.mxu0 0.0
    %616 = vmatprep.subr.mxu0 0.0
    %617 = vmatpush1.msra.mxu0 0.0
    %618 = vmatprep.subr.mxu0 0.0
    %619 = vmatpush1.msra.mxu0 0.0
    %620 = vmatprep.subr.mxu0 0.0
    %621 = vmatpush1.msra.mxu0 0.0
    %622 = vmatprep.subr.mxu0 0.0
    %623 = vmatpush1.msra.mxu0 0.0
    %624 = vmatprep.subr.mxu0 0.0
    %625 = vmatpush1.msra.mxu0 0.0
    %626 = vmatprep.subr.mxu0 0.0
    %627 = vmatpush1.msra.mxu0 0.0
    %628 = vmatprep.subr.mxu0 0.0
    %629 = vmatpush1.msra.mxu0 0.0
    %630 = vmatprep.subr.mxu0 0.0
    %631 = vmatpush1.msra.mxu0 0.0
    %632 = vmatprep.subr.mxu0 0.0
    %633 = vmatpush1.msra.mxu0 0.0
    %634 = vmatprep.subr.mxu0 0.0
    %635 = vmatpush1.msra.mxu0 0.0
    %636 = vmatprep.subr.mxu0 0.0
    %637 = vmatpush1.msra.mxu0 0.0
    %638 = vmatprep.mubr.f32.mxu0 0.0
    %639 = vmatmul.mubr.f32.gmra.mrb[0].mxu0 %v175
    %v640 = vpop.f32.mrb[0].mxu0
    %v641 = vadd.f32 %v491, %v640
    %v642 = vpop.f32.mrb[0].mxu0
    %643 = vdwg.mxu0
    %644 = vmatprep.subr.mxu0 0.0
    %645 = vmatpush1.msra.mxu0 %v468
    %646 = vmatprep.subr.mxu0 0.0
    %647 = vmatpush1.msra.mxu0 %v469
    %648 = vmatprep.subr.mxu0 0.0
    %649 = vmatpush1.msra.mxu0 %v470
    %650 = vmatprep.subr.mxu0 0.0
    %651 = vmatpush1.msra.mxu0 %v471
    %652 = vmatprep.subr.mxu0 0.0
    %653 = vmatpush1.msra.mxu0 0.0
    %654 = vmatprep.subr.mxu0 0.0
    %655 = vmatpush1.msra.mxu0 0.0
    %656 = vmatprep.subr.mxu0 0.0
    %657 = vmatpush1.msra.mxu0 0.0
    %658 = vmatprep.subr.mxu0 0.0
    %659 = vmatpush1.msra.mxu0 0.0
    %660 = vmatprep.subr.mxu0 0.0
    %661 = vmatpush1.msra.mxu0 0.0
    %662 = vmatprep.subr.mxu0 0.0
    %663 = vmatpush1.msra.mxu0 0.0
    %664 = vmatprep.subr.mxu0 0.0
    %665 = vmatpush1.msra.mxu0 0.0
    %666 = vmatprep.subr.mxu0 0.0
    %667 = vmatpush1.msra.mxu0 0.0
    %668 = vmatprep.subr.mxu0 0.0
    %669 = vmatpush1.msra.mxu0 0.0
    %670 = vmatprep.subr.mxu0 0.0
    %671 = vmatpush1.msra.mxu0 0.0
    %672 = vmatprep.subr.mxu0 0.0
    %673 = vmatpush1.msra.mxu0 0.0
    %674 = vmatprep.subr.mxu0 0.0
    %675 = vmatpush1.msra.mxu0 0.0
    %676 = vmatprep.subr.mxu0 0.0
    %677 = vmatpush1.msra.mxu0 0.0
    %678 = vmatprep.subr.mxu0 0.0
    %679 = vmatpush1.msra.mxu0 0.0
    %680 = vmatprep.subr.mxu0 0.0
    %681 = vmatpush1.msra.mxu0 0.0
    %682 = vmatprep.subr.mxu0 0.0
    %683 = vmatpush1.msra.mxu0 0.0
    %684 = vmatprep.subr.mxu0 0.0
    %685 = vmatpush1.msra.mxu0 0.0
    %686 = vmatprep.subr.mxu0 0.0
    %687 = vmatpush1.msra.mxu0 0.0
    %688 = vmatprep.subr.mxu0 0.0
    %689 = vmatpush1.msra.mxu0 0.0
    %690 = vmatprep.subr.mxu0 0.0
    %691 = vmatpush1.msra.mxu0 0.0
    %692 = vmatprep.subr.mxu0 0.0
    %693 = vmatpush1.msra.mxu0 0.0
    %694 = vmatprep.subr.mxu0 0.0
    %695 = vmatpush1.msra.mxu0 0.0
    %696 = vmatprep.subr.mxu0 0.0
    %697 = vmatpush1.msra.mxu0 0.0
    %698 = vmatprep.subr.mxu0 0.0
    %699 = vmatpush1.msra.mxu0 0.0
    %700 = vmatprep.subr.mxu0 0.0
    %701 = vmatpush1.msra.mxu0 0.0
    %702 = vmatprep.subr.mxu0 0.0
    %703 = vmatpush1.msra.mxu0 0.0
    %704 = vmatprep.subr.mxu0 0.0
    %705 = vmatpush1.msra.mxu0 0.0
    %706 = vmatprep.subr.mxu0 0.0
    %707 = vmatpush1.msra.mxu0 0.0
    %708 = vmatprep.mubr.f32.mxu0 0.0
    %709 = vmatmul.mubr.f32.gmra.mrb[0].mxu0 %v318
    %v710 = vpop.f32.mrb[0].mxu0
    %v711 = vadd.f32 %v495, %v710
    %v712 = vpop.f32.mrb[0].mxu0
    %713 = vdwg.mxu0
    %714 = vmatprep.subr.mxu0 0.0
    %715 = vmatpush1.msra.mxu0 %v472
    %716 = vmatprep.subr.mxu0 0.0
    %717 = vmatpush1.msra.mxu0 %v473
    %718 = vmatprep.subr.mxu0 0.0
    %719 = vmatpush1.msra.mxu0 %v474
    %720 = vmatprep.subr.mxu0 0.0
    %721 = vmatpush1.msra.mxu0 %v475
    %722 = vmatprep.subr.mxu0 0.0
    %723 = vmatpush1.msra.mxu0 0.0
    %724 = vmatprep.subr.mxu0 0.0
    %725 = vmatpush1.msra.mxu0 0.0
    %726 = vmatprep.subr.mxu0 0.0
    %727 = vmatpush1.msra.mxu0 0.0
    %728 = vmatprep.subr.mxu0 0.0
    %729 = vmatpush1.msra.mxu0 0.0
    %730 = vmatprep.subr.mxu0 0.0
    %731 = vmatpush1.msra.mxu0 0.0
    %732 = vmatprep.subr.mxu0 0.0
    %733 = vmatpush1.msra.mxu0 0.0
    %734 = vmatprep.subr.mxu0 0.0
    %735 = vmatpush1.msra.mxu0 0.0
    %736 = vmatprep.subr.mxu0 0.0
    %737 = vmatpush1.msra.mxu0 0.0
    %738 = vmatprep.subr.mxu0 0.0
    %739 = vmatpush1.msra.mxu0 0.0
    %740 = vmatprep.subr.mxu0 0.0
    %741 = vmatpush1.msra.mxu0 0.0
    %742 = vmatprep.subr.mxu0 0.0
    %743 = vmatpush1.msra.mxu0 0.0
    %744 = vmatprep.subr.mxu0 0.0
    %745 = vmatpush1.msra.mxu0 0.0
    %746 = vmatprep.subr.mxu0 0.0
    %747 = vmatpush1.msra.mxu0 0.0
    %748 = vmatprep.subr.mxu0 0.0
    %749 = vmatpush1.msra.mxu0 0.0
    %750 = vmatprep.subr.mxu0 0.0
    %751 = vmatpush1.msra.mxu0 0.0
    %752 = vmatprep.subr.mxu0 0.0
    %753 = vmatpush1.msra.mxu0 0.0
    %754 = vmatprep.subr.mxu0 0.0
    %755 = vmatpush1.msra.mxu0 0.0
    %756 = vmatprep.subr.mxu0 0.0
    %757 = vmatpush1.msra.mxu0 0.0
    %758 = vmatprep.subr.mxu0 0.0
    %759 = vmatpush1.msra.mxu0 0.0
    %760 = vmatprep.subr.mxu0 0.0
    %761 = vmatpush1.msra.mxu0 0.0
    %762 = vmatprep.subr.mxu0 0.0
    %763 = vmatpush1.msra.mxu0 0.0
    %764 = vmatprep.subr.mxu0 0.0
    %765 = vmatpush1.msra.mxu0 0.0
    %766 = vmatprep.subr.mxu0 0.0
    %767 = vmatpush1.msra.mxu0 0.0
    %768 = vmatprep.subr.mxu0 0.0
    %769 = vmatpush1.msra.mxu0 0.0
    %770 = vmatprep.subr.mxu0 0.0
    %771 = vmatpush1.msra.mxu0 0.0
    %772 = vmatprep.subr.mxu0 0.0
    %773 = vmatpush1.msra.mxu0 0.0
    %774 = vmatprep.subr.mxu0 0.0
    %775 = vmatpush1.msra.mxu0 0.0
    %776 = vmatprep.subr.mxu0 0.0
    %777 = vmatpush1.msra.mxu0 0.0
    %778 = vmatprep.mubr.f32.mxu0 0.0
    %779 = vmatmul.mubr.f32.gmra.mrb[0].mxu0 %v318
    %v780 = vpop.f32.mrb[0].mxu0
    %v781 = vadd.f32 %v499, %v780
    %v782 = vpop.f32.mrb[0].mxu0
    %783 = vdwg.mxu0
    %v784 = vld [vmem:[%s8] sm:$0xff]
    %v785 = vld [vmem:[%s8 + $0x8] sm:$0xff]
    %v786 = vld [vmem:[%s8 + $0x10] sm:$0xff]
    %v787 = vld [vmem:[%s8 + $0x18] sm:$0xff]
    %v788 = vld [vmem:[%s8 + $0x20] sm:$0xff]
    %v789 = vld [vmem:[%s8 + $0x28] sm:$0xff]
    %v790 = vld [vmem:[%s8 + $0x30] sm:$0xff]
    %v791 = vld [vmem:[%s8 + $0x38] sm:$0xff]
    %v792 = vld [vmem:[%s8 + $0x40] sm:$0xff]
    %v793 = vld [vmem:[%s8 + $0x48] sm:$0xff]
    %v794 = vld [vmem:[%s8 + $0x50] sm:$0xff]
    %v795 = vld [vmem:[%s8 + $0x58] sm:$0xff]
    %v796 = vld [vmem:[%s8 + $0x60] sm:$0xff]
    %v797 = vld [vmem:[%s8 + $0x68] sm:$0xff]
    %v798 = vld [vmem:[%s8 + $0x70] sm:$0xff]
    %v799 = vld [vmem:[%s8 + $0x78] sm:$0xff]
    %v800 = vld [vmem:[%s9] sm:$0x1]
    %v801 = vld [vmem:[%s9 + $0x1] sm:$0x1]
    %v802 = vld [vmem:[%s9 + $0x2] sm:$0x1]
    %v803 = vld [vmem:[%s9 + $0x3] sm:$0x1]
    %v808 = vlaneseq
    %v809 = vshrl.u32 %v808, 7
    %v810 = vsub.s32 0, %v809
    %v811 = vrot.slane %v800, %v810
    %v812 = vlaneseq
    %v813 = vshrl.u32 %v812, 7
    %v814 = vsub.s32 0, %v813
    %v815 = vrot.slane %v801, %v814
    %v816 = vlaneseq
    %v817 = vshrl.u32 %v816, 7
    %v818 = vsub.s32 0, %v817
    %v819 = vrot.slane %v802, %v818
    %v820 = vlaneseq
    %v821 = vshrl.u32 %v820, 7
    %v822 = vsub.s32 0, %v821
    %v823 = vrot.slane %v803, %v822
    %828 = vmatprep.subr.mxu0 0.0
    %829 = vmatpush1.msra.mxu0 %v784
    %830 = vmatprep.subr.mxu0 0.0
    %831 = vmatpush1.msra.mxu0 %v785
    %832 = vmatprep.subr.mxu0 0.0
    %833 = vmatpush1.msra.mxu0 %v786
    %834 = vmatprep.subr.mxu0 0.0
    %835 = vmatpush1.msra.mxu0 %v787
    %836 = vmatprep.subr.mxu0 0.0
    %837 = vmatpush1.msra.mxu0 0.0
    %838 = vmatprep.subr.mxu0 0.0
    %839 = vmatpush1.msra.mxu0 0.0
    %840 = vmatprep.subr.mxu0 0.0
    %841 = vmatpush1.msra.mxu0 0.0
    %842 = vmatprep.subr.mxu0 0.0
    %843 = vmatpush1.msra.mxu0 0.0
    %844 = vmatprep.subr.mxu0 0.0
    %845 = vmatpush1.msra.mxu0 0.0
    %846 = vmatprep.subr.mxu0 0.0
    %847 = vmatpush1.msra.mxu0 0.0
    %848 = vmatprep.subr.mxu0 0.0
    %849 = vmatpush1.msra.mxu0 0.0
    %850 = vmatprep.subr.mxu0 0.0
    %851 = vmatpush1.msra.mxu0 0.0
    %852 = vmatprep.subr.mxu0 0.0
    %853 = vmatpush1.msra.mxu0 0.0
    %854 = vmatprep.subr.mxu0 0.0
    %855 = vmatpush1.msra.mxu0 0.0
    %856 = vmatprep.subr.mxu0 0.0
    %857 = vmatpush1.msra.mxu0 0.0
    %858 = vmatprep.subr.mxu0 0.0
    %859 = vmatpush1.msra.mxu0 0.0
    %860 = vmatprep.subr.mxu0 0.0
    %861 = vmatpush1.msra.mxu0 0.0
    %862 = vmatprep.subr.mxu0 0.0
    %863 = vmatpush1.msra.mxu0 0.0
    %864 = vmatprep.subr.mxu0 0.0
    %865 = vmatpush1.msra.mxu0 0.0
    %866 = vmatprep.subr.mxu0 0.0
    %867 = vmatpush1.msra.mxu0 0.0
    %868 = vmatprep.subr.mxu0 0.0
    %869 = vmatpush1.msra.mxu0 0.0
    %870 = vmatprep.subr.mxu0 0.0
    %871 = vmatpush1.msra.mxu0 0.0
    %872 = vmatprep.subr.mxu0 0.0
    %873 = vmatpush1.msra.mxu0 0.0
    %874 = vmatprep.subr.mxu0 0.0
    %875 = vmatpush1.msra.mxu0 0.0
    %876 = vmatprep.subr.mxu0 0.0
    %877 = vmatpush1.msra.mxu0 0.0
    %878 = vmatprep.subr.mxu0 0.0
    %879 = vmatpush1.msra.mxu0 0.0
    %880 = vmatprep.subr.mxu0 0.0
    %881 = vmatpush1.msra.mxu0 0.0
    %882 = vmatprep.subr.mxu0 0.0
    %883 = vmatpush1.msra.mxu0 0.0
    %884 = vmatprep.subr.mxu0 0.0
    %885 = vmatpush1.msra.mxu0 0.0
    %886 = vmatprep.subr.mxu0 0.0
    %887 = vmatpush1.msra.mxu0 0.0
    %888 = vmatprep.subr.mxu0 0.0
    %889 = vmatpush1.msra.mxu0 0.0
    %890 = vmatprep.subr.mxu0 0.0
    %891 = vmatpush1.msra.mxu0 0.0
    %892 = vmatprep.mubr.f32.mxu0 0.0
    %893 = vmatmul.mubr.f32.gmra.mrb[0].mxu0 %v175
    %v894 = vpop.f32.mrb[0].mxu0
    %v895 = vadd.f32 %v811, %v894
    %v896 = vpop.f32.mrb[0].mxu0
    %897 = vdwg.mxu0
    %898 = vmatprep.subr.mxu0 0.0
    %899 = vmatpush1.msra.mxu0 %v788
    %900 = vmatprep.subr.mxu0 0.0
    %901 = vmatpush1.msra.mxu0 %v789
    %902 = vmatprep.subr.mxu0 0.0
    %903 = vmatpush1.msra.mxu0 %v790
    %904 = vmatprep.subr.mxu0 0.0
    %905 = vmatpush1.msra.mxu0 %v791
    %906 = vmatprep.subr.mxu0 0.0
    %907 = vmatpush1.msra.mxu0 0.0
    %908 = vmatprep.subr.mxu0 0.0
    %909 = vmatpush1.msra.mxu0 0.0
    %910 = vmatprep.subr.mxu0 0.0
    %911 = vmatpush1.msra.mxu0 0.0
    %912 = vmatprep.subr.mxu0 0.0
    %913 = vmatpush1.msra.mxu0 0.0
    %914 = vmatprep.subr.mxu0 0.0
    %915 = vmatpush1.msra.mxu0 0.0
    %916 = vmatprep.subr.mxu0 0.0
    %917 = vmatpush1.msra.mxu0 0.0
    %918 = vmatprep.subr.mxu0 0.0
    %919 = vmatpush1.msra.mxu0 0.0
    %920 = vmatprep.subr.mxu0 0.0
    %921 = vmatpush1.msra.mxu0 0.0
    %922 = vmatprep.subr.mxu0 0.0
    %923 = vmatpush1.msra.mxu0 0.0
    %924 = vmatprep.subr.mxu0 0.0
    %925 = vmatpush1.msra.mxu0 0.0
    %926 = vmatprep.subr.mxu0 0.0
    %927 = vmatpush1.msra.mxu0 0.0
    %928 = vmatprep.subr.mxu0 0.0
    %929 = vmatpush1.msra.mxu0 0.0
    %930 = vmatprep.subr.mxu0 0.0
    %931 = vmatpush1.msra.mxu0 0.0
    %932 = vmatprep.subr.mxu0 0.0
    %933 = vmatpush1.msra.mxu0 0.0
    %934 = vmatprep.subr.mxu0 0.0
    %935 = vmatpush1.msra.mxu0 0.0
    %936 = vmatprep.subr.mxu0 0.0
    %937 = vmatpush1.msra.mxu0 0.0
    %938 = vmatprep.subr.mxu0 0.0
    %939 = vmatpush1.msra.mxu0 0.0
    %940 = vmatprep.subr.mxu0 0.0
    %941 = vmatpush1.msra.mxu0 0.0
    %942 = vmatprep.subr.mxu0 0.0
    %943 = vmatpush1.msra.mxu0 0.0
    %944 = vmatprep.subr.mxu0 0.0
    %945 = vmatpush1.msra.mxu0 0.0
    %946 = vmatprep.subr.mxu0 0.0
    %947 = vmatpush1.msra.mxu0 0.0
    %948 = vmatprep.subr.mxu0 0.0
    %949 = vmatpush1.msra.mxu0 0.0
    %950 = vmatprep.subr.mxu0 0.0
    %951 = vmatpush1.msra.mxu0 0.0
    %952 = vmatprep.subr.mxu0 0.0
    %953 = vmatpush1.msra.mxu0 0.0
    %954 = vmatprep.subr.mxu0 0.0
    %955 = vmatpush1.msra.mxu0 0.0
    %956 = vmatprep.subr.mxu0 0.0
    %957 = vmatpush1.msra.mxu0 0.0
    %958 = vmatprep.subr.mxu0 0.0
    %959 = vmatpush1.msra.mxu0 0.0
    %960 = vmatprep.subr.mxu0 0.0
    %961 = vmatpush1.msra.mxu0 0.0
    %962 = vmatprep.mubr.f32.mxu0 0.0
    %963 = vmatmul.mubr.f32.gmra.mrb[0].mxu0 %v175
    %v964 = vpop.f32.mrb[0].mxu0
    %v965 = vadd.f32 %v815, %v964
    %v966 = vpop.f32.mrb[0].mxu0
    %967 = vdwg.mxu0
    %968 = vmatprep.subr.mxu0 0.0
    %969 = vmatpush1.msra.mxu0 %v792
    %970 = vmatprep.subr.mxu0 0.0
    %971 = vmatpush1.msra.mxu0 %v793
    %972 = vmatprep.subr.mxu0 0.0
    %973 = vmatpush1.msra.mxu0 %v794
    %974 = vmatprep.subr.mxu0 0.0
    %975 = vmatpush1.msra.mxu0 %v795
    %976 = vmatprep.subr.mxu0 0.0
    %977 = vmatpush1.msra.mxu0 0.0
    %978 = vmatprep.subr.mxu0 0.0
    %979 = vmatpush1.msra.mxu0 0.0
    %980 = vmatprep.subr.mxu0 0.0
    %981 = vmatpush1.msra.mxu0 0.0
    %982 = vmatprep.subr.mxu0 0.0
    %983 = vmatpush1.msra.mxu0 0.0
    %984 = vmatprep.subr.mxu0 0.0
    %985 = vmatpush1.msra.mxu0 0.0
    %986 = vmatprep.subr.mxu0 0.0
    %987 = vmatpush1.msra.mxu0 0.0
    %988 = vmatprep.subr.mxu0 0.0
    %989 = vmatpush1.msra.mxu0 0.0
    %990 = vmatprep.subr.mxu0 0.0
    %991 = vmatpush1.msra.mxu0 0.0
    %992 = vmatprep.subr.mxu0 0.0
    %993 = vmatpush1.msra.mxu0 0.0
    %994 = vmatprep.subr.mxu0 0.0
    %995 = vmatpush1.msra.mxu0 0.0
    %996 = vmatprep.subr.mxu0 0.0
    %997 = vmatpush1.msra.mxu0 0.0
    %998 = vmatprep.subr.mxu0 0.0
    %999 = vmatpush1.msra.mxu0 0.0
    %1000 = vmatprep.subr.mxu0 0.0
    %1001 = vmatpush1.msra.mxu0 0.0
    %1002 = vmatprep.subr.mxu0 0.0
    %1003 = vmatpush1.msra.mxu0 0.0
    %1004 = vmatprep.subr.mxu0 0.0
    %1005 = vmatpush1.msra.mxu0 0.0
    %1006 = vmatprep.subr.mxu0 0.0
    %1007 = vmatpush1.msra.mxu0 0.0
    %1008 = vmatprep.subr.mxu0 0.0
    %1009 = vmatpush1.msra.mxu0 0.0
    %1010 = vmatprep.subr.mxu0 0.0
    %1011 = vmatpush1.msra.mxu0 0.0
    %1012 = vmatprep.subr.mxu0 0.0
    %1013 = vmatpush1.msra.mxu0 0.0
    %1014 = vmatprep.subr.mxu0 0.0
    %1015 = vmatpush1.msra.mxu0 0.0
    %1016 = vmatprep.subr.mxu0 0.0
    %1017 = vmatpush1.msra.mxu0 0.0
    %1018 = vmatprep.subr.mxu0 0.0
    %1019 = vmatpush1.msra.mxu0 0.0
    %1020 = vmatprep.subr.mxu0 0.0
    %1021 = vmatpush1.msra.mxu0 0.0
    %1022 = vmatprep.subr.mxu0 0.0
    %1023 = vmatpush1.msra.mxu0 0.0
    %1024 = vmatprep.subr.mxu0 0.0
    %1025 = vmatpush1.msra.mxu0 0.0
    %1026 = vmatprep.subr.mxu0 0.0
    %1027 = vmatpush1.msra.mxu0 0.0
    %1028 = vmatprep.subr.mxu0 0.0
    %1029 = vmatpush1.msra.mxu0 0.0
    %1030 = vmatprep.subr.mxu0 0.0
    %1031 = vmatpush1.msra.mxu0 0.0
    %1032 = vmatprep.mubr.f32.mxu0 0.0
    %1033 = vmatmul.mubr.f32.gmra.mrb[0].mxu0 %v318
    %v1034 = vpop.f32.mrb[0].mxu0
    %v1035 = vadd.f32 %v819, %v1034
    %v1036 = vpop.f32.mrb[0].mxu0
    %1037 = vdwg.mxu0
    %1038 = vmatprep.subr.mxu0 0.0
    %1039 = vmatpush1.msra.mxu0 %v796
    %1040 = vmatprep.subr.mxu0 0.0
    %1041 = vmatpush1.msra.mxu0 %v797
    %1042 = vmatprep.subr.mxu0 0.0
    %1043 = vmatpush1.msra.mxu0 %v798
    %1044 = vmatprep.subr.mxu0 0.0
    %1045 = vmatpush1.msra.mxu0 %v799
    %1046 = vmatprep.subr.mxu0 0.0
    %1047 = vmatpush1.msra.mxu0 0.0
    %1048 = vmatprep.subr.mxu0 0.0
    %1049 = vmatpush1.msra.mxu0 0.0
    %1050 = vmatprep.subr.mxu0 0.0
    %1051 = vmatpush1.msra.mxu0 0.0
    %1052 = vmatprep.subr.mxu0 0.0
    %1053 = vmatpush1.msra.mxu0 0.0
    %1054 = vmatprep.subr.mxu0 0.0
    %1055 = vmatpush1.msra.mxu0 0.0
    %1056 = vmatprep.subr.mxu0 0.0
    %1057 = vmatpush1.msra.mxu0 0.0
    %1058 = vmatprep.subr.mxu0 0.0
    %1059 = vmatpush1.msra.mxu0 0.0
    %1060 = vmatprep.subr.mxu0 0.0
    %1061 = vmatpush1.msra.mxu0 0.0
    %1062 = vmatprep.subr.mxu0 0.0
    %1063 = vmatpush1.msra.mxu0 0.0
    %1064 = vmatprep.subr.mxu0 0.0
    %1065 = vmatpush1.msra.mxu0 0.0
    %1066 = vmatprep.subr.mxu0 0.0
    %1067 = vmatpush1.msra.mxu0 0.0
    %1068 = vmatprep.subr.mxu0 0.0
    %1069 = vmatpush1.msra.mxu0 0.0
    %1070 = vmatprep.subr.mxu0 0.0
    %1071 = vmatpush1.msra.mxu0 0.0
    %1072 = vmatprep.subr.mxu0 0.0
    %1073 = vmatpush1.msra.mxu0 0.0
    %1074 = vmatprep.subr.mxu0 0.0
    %1075 = vmatpush1.msra.mxu0 0.0
    %1076 = vmatprep.subr.mxu0 0.0
    %1077 = vmatpush1.msra.mxu0 0.0
    %1078 = vmatprep.subr.mxu0 0.0
    %1079 = vmatpush1.msra.mxu0 0.0
    %1080 = vmatprep.subr.mxu0 0.0
    %1081 = vmatpush1.msra.mxu0 0.0
    %1082 = vmatprep.subr.mxu0 0.0
    %1083 = vmatpush1.msra.mxu0 0.0
    %1084 = vmatprep.subr.mxu0 0.0
    %1085 = vmatpush1.msra.mxu0 0.0
    %1086 = vmatprep.subr.mxu0 0.0
    %1087 = vmatpush1.msra.mxu0 0.0
    %1088 = vmatprep.subr.mxu0 0.0
    %1089 = vmatpush1.msra.mxu0 0.0
    %1090 = vmatprep.subr.mxu0 0.0
    %1091 = vmatpush1.msra.mxu0 0.0
    %1092 = vmatprep.subr.mxu0 0.0
    %1093 = vmatpush1.msra.mxu0 0.0
    %1094 = vmatprep.subr.mxu0 0.0
    %1095 = vmatpush1.msra.mxu0 0.0
    %1096 = vmatprep.subr.mxu0 0.0
    %1097 = vmatpush1.msra.mxu0 0.0
    %1098 = vmatprep.subr.mxu0 0.0
    %1099 = vmatpush1.msra.mxu0 0.0
    %1100 = vmatprep.subr.mxu0 0.0
    %1101 = vmatpush1.msra.mxu0 0.0
    %1102 = vmatprep.mubr.f32.mxu0 0.0
    %1103 = vmatmul.mubr.f32.gmra.mrb[0].mxu0 %v318
    %v1104 = vpop.f32.mrb[0].mxu0
    %v1105 = vadd.f32 %v823, %v1104
    %v1106 = vpop.f32.mrb[0].mxu0
    %1107 = vdwg.mxu0
    %vm1108 = vcmask 130048
    %v1110 = vsel %vm1108, %v244, 0
    %v1113 = vsel %vm1108, %v571, 0
    %1115 = vmatprep.subr.mxu0 0.0
    %1116 = vmatpush1.xpose.msra.mxu0 %v1113
    %1117 = vmatprep.subr.mxu0 0.0
    %1118 = vmatpush1.xpose.msra.mxu0 0.0
    %1119 = vmatprep.subr.mxu0 0.0
    %1120 = vmatpush1.xpose.msra.mxu0 0.0
    %1121 = vmatprep.subr.mxu0 0.0
    %1122 = vmatpush1.xpose.msra.mxu0 0.0
    %1123 = vmatprep.subr.mxu0 0.0
    %1124 = vmatpush1.xpose.msra.mxu0 0.0
    %1125 = vmatprep.subr.mxu0 0.0
    %1126 = vmatpush1.xpose.msra.mxu0 0.0
    %1127 = vmatprep.subr.mxu0 0.0
    %1128 = vmatpush1.xpose.msra.mxu0 0.0
    %1129 = vmatprep.subr.mxu0 0.0
    %1130 = vmatpush1.xpose.msra.mxu0 0.0
    %1131 = vmatprep.subr.mxu0 0.0
    %1132 = vmatpush1.xpose.msra.mxu0 0.0
    %1133 = vmatprep.subr.mxu0 0.0
    %1134 = vmatpush1.xpose.msra.mxu0 0.0
    %1135 = vmatprep.subr.mxu0 0.0
    %1136 = vmatpush1.xpose.msra.mxu0 0.0
    %1137 = vmatprep.subr.mxu0 0.0
    %1138 = vmatpush1.xpose.msra.mxu0 0.0
    %1139 = vmatprep.subr.mxu0 0.0
    %1140 = vmatpush1.xpose.msra.mxu0 0.0
    %1141 = vmatprep.subr.mxu0 0.0
    %1142 = vmatpush1.xpose.msra.mxu0 0.0
    %1143 = vmatprep.subr.mxu0 0.0
    %1144 = vmatpush1.xpose.msra.mxu0 0.0
    %1145 = vmatprep.subr.mxu0 0.0
    %1146 = vmatpush1.xpose.msra.mxu0 0.0
    %1147 = vmatprep.subr.mxu0 0.0
    %1148 = vmatpush1.xpose.msra.mxu0 0.0
    %1149 = vmatprep.subr.mxu0 0.0
    %1150 = vmatpush1.xpose.msra.mxu0 0.0
    %1151 = vmatprep.subr.mxu0 0.0
    %1152 = vmatpush1.xpose.msra.mxu0 0.0
    %1153 = vmatprep.subr.mxu0 0.0
    %1154 = vmatpush1.xpose.msra.mxu0 0.0
    %1155 = vmatprep.subr.mxu0 0.0
    %1156 = vmatpush1.xpose.msra.mxu0 0.0
    %1157 = vmatprep.subr.mxu0 0.0
    %1158 = vmatpush1.xpose.msra.mxu0 0.0
    %1159 = vmatprep.subr.mxu0 0.0
    %1160 = vmatpush1.xpose.msra.mxu0 0.0
    %1161 = vmatprep.subr.mxu0 0.0
    %1162 = vmatpush1.xpose.msra.mxu0 0.0
    %1163 = vmatprep.subr.mxu0 0.0
    %1164 = vmatpush1.xpose.msra.mxu0 0.0
    %1165 = vmatprep.subr.mxu0 0.0
    %1166 = vmatpush1.xpose.msra.mxu0 0.0
    %1167 = vmatprep.subr.mxu0 0.0
    %1168 = vmatpush1.xpose.msra.mxu0 0.0
    %1169 = vmatprep.subr.mxu0 0.0
    %1170 = vmatpush1.xpose.msra.mxu0 0.0
    %1171 = vmatprep.subr.mxu0 0.0
    %1172 = vmatpush1.xpose.msra.mxu0 0.0
    %1173 = vmatprep.subr.mxu0 0.0
    %1174 = vmatpush1.xpose.msra.mxu0 0.0
    %1175 = vmatprep.subr.mxu0 0.0
    %1176 = vmatpush1.xpose.msra.mxu0 0.0
    %1177 = vmatprep.subr.mxu0 0.0
    %1178 = vmatpush1.xpose.msra.mxu0 0.0
    %1179 = vmatprep.mubr.f32.mxu0 0.0
    %1180 = vmatmul.mubr.f32.gmra.mrb[0].mxu0 %v1110
    %v1181 = vpop.f32.mrb[0].mxu0
    %v1182 = vadd.f32 0.0, %v1181
    %v1183 = vpop.f32.mrb[0].mxu0
    %1184 = vdwg.mxu0
    %v1186 = vsel %vm1108, %v314, 0
    %v1189 = vsel %vm1108, %v641, 0
    %1191 = vmatprep.subr.mxu0 0.0
    %1192 = vmatpush1.xpose.msra.mxu0 %v1189
    %1193 = vmatprep.subr.mxu0 0.0
    %1194 = vmatpush1.xpose.msra.mxu0 0.0
    %1195 = vmatprep.subr.mxu0 0.0
    %1196 = vmatpush1.xpose.msra.mxu0 0.0
    %1197 = vmatprep.subr.mxu0 0.0
    %1198 = vmatpush1.xpose.msra.mxu0 0.0
    %1199 = vmatprep.subr.mxu0 0.0
    %1200 = vmatpush1.xpose.msra.mxu0 0.0
    %1201 = vmatprep.subr.mxu0 0.0
    %1202 = vmatpush1.xpose.msra.mxu0 0.0
    %1203 = vmatprep.subr.mxu0 0.0
    %1204 = vmatpush1.xpose.msra.mxu0 0.0
    %1205 = vmatprep.subr.mxu0 0.0
    %1206 = vmatpush1.xpose.msra.mxu0 0.0
    %1207 = vmatprep.subr.mxu0 0.0
    %1208 = vmatpush1.xpose.msra.mxu0 0.0
    %1209 = vmatprep.subr.mxu0 0.0
    %1210 = vmatpush1.xpose.msra.mxu0 0.0
    %1211 = vmatprep.subr.mxu0 0.0
    %1212 = vmatpush1.xpose.msra.mxu0 0.0
    %1213 = vmatprep.subr.mxu0 0.0
    %1214 = vmatpush1.xpose.msra.mxu0 0.0
    %1215 = vmatprep.subr.mxu0 0.0
    %1216 = vmatpush1.xpose.msra.mxu0 0.0
    %1217 = vmatprep.subr.mxu0 0.0
    %1218 = vmatpush1.xpose.msra.mxu0 0.0
    %1219 = vmatprep.subr.mxu0 0.0
    %1220 = vmatpush1.xpose.msra.mxu0 0.0
    %1221 = vmatprep.subr.mxu0 0.0
    %1222 = vmatpush1.xpose.msra.mxu0 0.0
    %1223 = vmatprep.subr.mxu0 0.0
    %1224 = vmatpush1.xpose.msra.mxu0 0.0
    %1225 = vmatprep.subr.mxu0 0.0
    %1226 = vmatpush1.xpose.msra.mxu0 0.0
    %1227 = vmatprep.subr.mxu0 0.0
    %1228 = vmatpush1.xpose.msra.mxu0 0.0
    %1229 = vmatprep.subr.mxu0 0.0
    %1230 = vmatpush1.xpose.msra.mxu0 0.0
    %1231 = vmatprep.subr.mxu0 0.0
    %1232 = vmatpush1.xpose.msra.mxu0 0.0
    %1233 = vmatprep.subr.mxu0 0.0
    %1234 = vmatpush1.xpose.msra.mxu0 0.0
    %1235 = vmatprep.subr.mxu0 0.0
    %1236 = vmatpush1.xpose.msra.mxu0 0.0
    %1237 = vmatprep.subr.mxu0 0.0
    %1238 = vmatpush1.xpose.msra.mxu0 0.0
    %1239 = vmatprep.subr.mxu0 0.0
    %1240 = vmatpush1.xpose.msra.mxu0 0.0
    %1241 = vmatprep.subr.mxu0 0.0
    %1242 = vmatpush1.xpose.msra.mxu0 0.0
    %1243 = vmatprep.subr.mxu0 0.0
    %1244 = vmatpush1.xpose.msra.mxu0 0.0
    %1245 = vmatprep.subr.mxu0 0.0
    %1246 = vmatpush1.xpose.msra.mxu0 0.0
    %1247 = vmatprep.subr.mxu0 0.0
    %1248 = vmatpush1.xpose.msra.mxu0 0.0
    %1249 = vmatprep.subr.mxu0 0.0
    %1250 = vmatpush1.xpose.msra.mxu0 0.0
    %1251 = vmatprep.subr.mxu0 0.0
    %1252 = vmatpush1.xpose.msra.mxu0 0.0
    %1253 = vmatprep.subr.mxu0 0.0
    %1254 = vmatpush1.xpose.msra.mxu0 0.0
    %1255 = vmatprep.mubr.f32.mxu0 0.0
    %1256 = vmatmul.mubr.f32.gmra.mrb[0].mxu0 %v1186
    %v1257 = vpop.f32.mrb[0].mxu0
    %v1258 = vadd.f32 0.0, %v1257
    %v1259 = vpop.f32.mrb[0].mxu0
    %1260 = vdwg.mxu0
    %v1262 = vsel %vm1108, %v387, 0
    %v1265 = vsel %vm1108, %v711, 0
    %1267 = vmatprep.subr.mxu0 0.0
    %1268 = vmatpush1.xpose.msra.mxu0 %v1265
    %1269 = vmatprep.subr.mxu0 0.0
    %1270 = vmatpush1.xpose.msra.mxu0 0.0
    %1271 = vmatprep.subr.mxu0 0.0
    %1272 = vmatpush1.xpose.msra.mxu0 0.0
    %1273 = vmatprep.subr.mxu0 0.0
    %1274 = vmatpush1.xpose.msra.mxu0 0.0
    %1275 = vmatprep.subr.mxu0 0.0
    %1276 = vmatpush1.xpose.msra.mxu0 0.0
    %1277 = vmatprep.subr.mxu0 0.0
    %1278 = vmatpush1.xpose.msra.mxu0 0.0
    %1279 = vmatprep.subr.mxu0 0.0
    %1280 = vmatpush1.xpose.msra.mxu0 0.0
    %1281 = vmatprep.subr.mxu0 0.0
    %1282 = vmatpush1.xpose.msra.mxu0 0.0
    %1283 = vmatprep.subr.mxu0 0.0
    %1284 = vmatpush1.xpose.msra.mxu0 0.0
    %1285 = vmatprep.subr.mxu0 0.0
    %1286 = vmatpush1.xpose.msra.mxu0 0.0
    %1287 = vmatprep.subr.mxu0 0.0
    %1288 = vmatpush1.xpose.msra.mxu0 0.0
    %1289 = vmatprep.subr.mxu0 0.0
    %1290 = vmatpush1.xpose.msra.mxu0 0.0
    %1291 = vmatprep.subr.mxu0 0.0
    %1292 = vmatpush1.xpose.msra.mxu0 0.0
    %1293 = vmatprep.subr.mxu0 0.0
    %1294 = vmatpush1.xpose.msra.mxu0 0.0
    %1295 = vmatprep.subr.mxu0 0.0
    %1296 = vmatpush1.xpose.msra.mxu0 0.0
    %1297 = vmatprep.subr.mxu0 0.0
    %1298 = vmatpush1.xpose.msra.mxu0 0.0
    %1299 = vmatprep.subr.mxu0 0.0
    %1300 = vmatpush1.xpose.msra.mxu0 0.0
    %1301 = vmatprep.subr.mxu0 0.0
    %1302 = vmatpush1.xpose.msra.mxu0 0.0
    %1303 = vmatprep.subr.mxu0 0.0
    %1304 = vmatpush1.xpose.msra.mxu0 0.0
    %1305 = vmatprep.subr.mxu0 0.0
    %1306 = vmatpush1.xpose.msra.mxu0 0.0
    %1307 = vmatprep.subr.mxu0 0.0
    %1308 = vmatpush1.xpose.msra.mxu0 0.0
    %1309 = vmatprep.subr.mxu0 0.0
    %1310 = vmatpush1.xpose.msra.mxu0 0.0
    %1311 = vmatprep.subr.mxu0 0.0
    %1312 = vmatpush1.xpose.msra.mxu0 0.0
    %1313 = vmatprep.subr.mxu0 0.0
    %1314 = vmatpush1.xpose.msra.mxu0 0.0
    %1315 = vmatprep.subr.mxu0 0.0
    %1316 = vmatpush1.xpose.msra.mxu0 0.0
    %1317 = vmatprep.subr.mxu0 0.0
    %1318 = vmatpush1.xpose.msra.mxu0 0.0
    %1319 = vmatprep.subr.mxu0 0.0
    %1320 = vmatpush1.xpose.msra.mxu0 0.0
    %1321 = vmatprep.subr.mxu0 0.0
    %1322 = vmatpush1.xpose.msra.mxu0 0.0
    %1323 = vmatprep.subr.mxu0 0.0
    %1324 = vmatpush1.xpose.msra.mxu0 0.0
    %1325 = vmatprep.subr.mxu0 0.0
    %1326 = vmatpush1.xpose.msra.mxu0 0.0
    %1327 = vmatprep.subr.mxu0 0.0
    %1328 = vmatpush1.xpose.msra.mxu0 0.0
    %1329 = vmatprep.subr.mxu0 0.0
    %1330 = vmatpush1.xpose.msra.mxu0 0.0
    %1331 = vmatprep.mubr.f32.mxu0 0.0
    %1332 = vmatmul.mubr.f32.gmra.mrb[0].mxu0 %v1262
    %v1333 = vpop.f32.mrb[0].mxu0
    %v1334 = vadd.f32 0.0, %v1333
    %v1335 = vpop.f32.mrb[0].mxu0
    %1336 = vdwg.mxu0
    %v1338 = vsel %vm1108, %v457, 0
    %v1341 = vsel %vm1108, %v781, 0
    %1343 = vmatprep.subr.mxu0 0.0
    %1344 = vmatpush1.xpose.msra.mxu0 %v1341
    %1345 = vmatprep.subr.mxu0 0.0
    %1346 = vmatpush1.xpose.msra.mxu0 0.0
    %1347 = vmatprep.subr.mxu0 0.0
    %1348 = vmatpush1.xpose.msra.mxu0 0.0
    %1349 = vmatprep.subr.mxu0 0.0
    %1350 = vmatpush1.xpose.msra.mxu0 0.0
    %1351 = vmatprep.subr.mxu0 0.0
    %1352 = vmatpush1.xpose.msra.mxu0 0.0
    %1353 = vmatprep.subr.mxu0 0.0
    %1354 = vmatpush1.xpose.msra.mxu0 0.0
    %1355 = vmatprep.subr.mxu0 0.0
    %1356 = vmatpush1.xpose.msra.mxu0 0.0
    %1357 = vmatprep.subr.mxu0 0.0
    %1358 = vmatpush1.xpose.msra.mxu0 0.0
    %1359 = vmatprep.subr.mxu0 0.0
    %1360 = vmatpush1.xpose.msra.mxu0 0.0
    %1361 = vmatprep.subr.mxu0 0.0
    %1362 = vmatpush1.xpose.msra.mxu0 0.0
    %1363 = vmatprep.subr.mxu0 0.0
    %1364 = vmatpush1.xpose.msra.mxu0 0.0
    %1365 = vmatprep.subr.mxu0 0.0
    %1366 = vmatpush1.xpose.msra.mxu0 0.0
    %1367 = vmatprep.subr.mxu0 0.0
    %1368 = vmatpush1.xpose.msra.mxu0 0.0
    %1369 = vmatprep.subr.mxu0 0.0
    %1370 = vmatpush1.xpose.msra.mxu0 0.0
    %1371 = vmatprep.subr.mxu0 0.0
    %1372 = vmatpush1.xpose.msra.mxu0 0.0
    %1373 = vmatprep.subr.mxu0 0.0
    %1374 = vmatpush1.xpose.msra.mxu0 0.0
    %1375 = vmatprep.subr.mxu0 0.0
    %1376 = vmatpush1.xpose.msra.mxu0 0.0
    %1377 = vmatprep.subr.mxu0 0.0
    %1378 = vmatpush1.xpose.msra.mxu0 0.0
    %1379 = vmatprep.subr.mxu0 0.0
    %1380 = vmatpush1.xpose.msra.mxu0 0.0
    %1381 = vmatprep.subr.mxu0 0.0
    %1382 = vmatpush1.xpose.msra.mxu0 0.0
    %1383 = vmatprep.subr.mxu0 0.0
    %1384 = vmatpush1.xpose.msra.mxu0 0.0
    %1385 = vmatprep.subr.mxu0 0.0
    %1386 = vmatpush1.xpose.msra.mxu0 0.0
    %1387 = vmatprep.subr.mxu0 0.0
    %1388 = vmatpush1.xpose.msra.mxu0 0.0
    %1389 = vmatprep.subr.mxu0 0.0
    %1390 = vmatpush1.xpose.msra.mxu0 0.0
    %1391 = vmatprep.subr.mxu0 0.0
    %1392 = vmatpush1.xpose.msra.mxu0 0.0
    %1393 = vmatprep.subr.mxu0 0.0
    %1394 = vmatpush1.xpose.msra.mxu0 0.0
    %1395 = vmatprep.subr.mxu0 0.0
    %1396 = vmatpush1.xpose.msra.mxu0 0.0
    %1397 = vmatprep.subr.mxu0 0.0
    %1398 = vmatpush1.xpose.msra.mxu0 0.0
    %1399 = vmatprep.subr.mxu0 0.0
    %1400 = vmatpush1.xpose.msra.mxu0 0.0
    %1401 = vmatprep.subr.mxu0 0.0
    %1402 = vmatpush1.xpose.msra.mxu0 0.0
    %1403 = vmatprep.subr.mxu0 0.0
    %1404 = vmatpush1.xpose.msra.mxu0 0.0
    %1405 = vmatprep.subr.mxu0 0.0
    %1406 = vmatpush1.xpose.msra.mxu0 0.0
    %1407 = vmatprep.mubr.f32.mxu0 0.0
    %1408 = vmatmul.mubr.f32.gmra.mrb[0].mxu0 %v1338
    %v1409 = vpop.f32.mrb[0].mxu0
    %v1410 = vadd.f32 0.0, %v1409
    %v1411 = vpop.f32.mrb[0].mxu0
    %1412 = vdwg.mxu0
    %v1413 = vmul.f32 %v1182, 0.25
    %v1414 = vmul.f32 %v1258, 0.25
    %v1415 = vmul.f32 %v1334, 0.25
    %v1416 = vmul.f32 %v1410, 0.25
    %v1417 = vadd.f32 %v1413, %v126
    %v1418 = vadd.f32 %v1414, %v127
    %v1419 = vadd.f32 %v1415, %v128
    %v1420 = vadd.f32 %v1416, %v129
    %vm1421 = vcmask 64512
    %v1422 = vsel %vm1421, %v1417, -inf
    %1423 = vmax.xlane.f32.xlu0 %v1422
    %v1424 = vpop.xlane.xlu0 %1423
    %v1425 = vsel %vm1421, %v1418, -inf
    %1426 = vmax.xlane.f32.xlu0 %v1425
    %v1427 = vpop.xlane.xlu0 %1426
    %v1428 = vsel %vm1421, %v1419, -inf
    %1429 = vmax.xlane.f32.xlu0 %v1428
    %v1430 = vpop.xlane.xlu0 %1429
    %v1431 = vsel %vm1421, %v1420, -inf
    %1432 = vmax.xlane.f32.xlu0 %v1431
    %v1433 = vpop.xlane.xlu0 %1432
    %v1434 = vsub.f32 %v1417, %v1424
    %v1435 = vsub.f32 %v1418, %v1427
    %v1436 = vsub.f32 %v1419, %v1430
    %v1437 = vsub.f32 %v1420, %v1433
    %v1438 = vmul.f32 %v1434, 1.442695
    %v1439 = vpow.pop %v1438
    %v1440 = vmul.f32 %v1435, 1.442695
    %v1441 = vpow.pop %v1440
    %v1442 = vmul.f32 %v1436, 1.442695
    %v1443 = vpow.pop %v1442
    %v1444 = vmul.f32 %v1437, 1.442695
    %v1445 = vpow.pop %v1444
    %v1446 = vsel %vm1421, %v1439, 0.0
    %1447 = vadd.xlane.f32.xlu0 %v1446
    %v1448 = vpop.xlane.xlu0 %1447
    %v1449 = vsel %vm1421, %v1441, 0.0
    %1450 = vadd.xlane.f32.xlu0 %v1449
    %v1451 = vpop.xlane.xlu0 %1450
    %v1452 = vsel %vm1421, %v1443, 0.0
    %1453 = vadd.xlane.f32.xlu0 %v1452
    %v1454 = vpop.xlane.xlu0 %1453
    %v1455 = vsel %vm1421, %v1445, 0.0
    %1456 = vadd.xlane.f32.xlu0 %v1455
    %v1457 = vpop.xlane.xlu0 %1456
    %v1458 = vrcp.pop %v1448
    %v1459 = vrcp.pop %v1451
    %v1460 = vrcp.pop %v1454
    %v1461 = vrcp.pop %v1457
    %v1462 = vmul.f32 %v1439, %v1458
    %v1463 = vmul.f32 %v1441, %v1459
    %v1464 = vmul.f32 %v1443, %v1460
    %v1465 = vmul.f32 %v1445, %v1461
    %v1467 = vsel %vm1421, %v1462, 0
    %1469 = vmatprep.subr.mxu0 0.0
    %1470 = vmatpush1.msra.mxu0 %v895
    %1471 = vmatprep.subr.mxu0 0.0
    %1472 = vmatpush1.msra.mxu0 0.0
    %1473 = vmatprep.subr.mxu0 0.0
    %1474 = vmatpush1.msra.mxu0 0.0
    %1475 = vmatprep.subr.mxu0 0.0
    %1476 = vmatpush1.msra.mxu0 0.0
    %1477 = vmatprep.subr.mxu0 0.0
    %1478 = vmatpush1.msra.mxu0 0.0
    %1479 = vmatprep.subr.mxu0 0.0
    %1480 = vmatpush1.msra.mxu0 0.0
    %1481 = vmatprep.subr.mxu0 0.0
    %1482 = vmatpush1.msra.mxu0 0.0
    %1483 = vmatprep.subr.mxu0 0.0
    %1484 = vmatpush1.msra.mxu0 0.0
    %1485 = vmatprep.subr.mxu0 0.0
    %1486 = vmatpush1.msra.mxu0 0.0
    %1487 = vmatprep.subr.mxu0 0.0
    %1488 = vmatpush1.msra.mxu0 0.0
    %1489 = vmatprep.subr.mxu0 0.0
    %1490 = vmatpush1.msra.mxu0 0.0
    %1491 = vmatprep.subr.mxu0 0.0
    %1492 = vmatpush1.msra.mxu0 0.0
    %1493 = vmatprep.subr.mxu0 0.0
    %1494 = vmatpush1.msra.mxu0 0.0
    %1495 = vmatprep.subr.mxu0 0.0
    %1496 = vmatpush1.msra.mxu0 0.0
    %1497 = vmatprep.subr.mxu0 0.0
    %1498 = vmatpush1.msra.mxu0 0.0
    %1499 = vmatprep.subr.mxu0 0.0
    %1500 = vmatpush1.msra.mxu0 0.0
    %1501 = vmatprep.subr.mxu0 0.0
    %1502 = vmatpush1.msra.mxu0 0.0
    %1503 = vmatprep.subr.mxu0 0.0
    %1504 = vmatpush1.msra.mxu0 0.0
    %1505 = vmatprep.subr.mxu0 0.0
    %1506 = vmatpush1.msra.mxu0 0.0
    %1507 = vmatprep.subr.mxu0 0.0
    %1508 = vmatpush1.msra.mxu0 0.0
    %1509 = vmatprep.subr.mxu0 0.0
    %1510 = vmatpush1.msra.mxu0 0.0
    %1511 = vmatprep.subr.mxu0 0.0
    %1512 = vmatpush1.msra.mxu0 0.0
    %1513 = vmatprep.subr.mxu0 0.0
    %1514 = vmatpush1.msra.mxu0 0.0
    %1515 = vmatprep.subr.mxu0 0.0
    %1516 = vmatpush1.msra.mxu0 0.0
    %1517 = vmatprep.subr.mxu0 0.0
    %1518 = vmatpush1.msra.mxu0 0.0
    %1519 = vmatprep.subr.mxu0 0.0
    %1520 = vmatpush1.msra.mxu0 0.0
    %1521 = vmatprep.subr.mxu0 0.0
    %1522 = vmatpush1.msra.mxu0 0.0
    %1523 = vmatprep.subr.mxu0 0.0
    %1524 = vmatpush1.msra.mxu0 0.0
    %1525 = vmatprep.subr.mxu0 0.0
    %1526 = vmatpush1.msra.mxu0 0.0
    %1527 = vmatprep.subr.mxu0 0.0
    %1528 = vmatpush1.msra.mxu0 0.0
    %1529 = vmatprep.subr.mxu0 0.0
    %1530 = vmatpush1.msra.mxu0 0.0
    %1531 = vmatprep.subr.mxu0 0.0
    %1532 = vmatpush1.msra.mxu0 0.0
    %1533 = vmatprep.mubr.f32.mxu0 0.0
    %1534 = vmatmul.mubr.f32.gmra.mrb[0].mxu0 %v1467
    %v1535 = vpop.f32.mrb[0].mxu0
    %v1536 = vadd.f32 0.0, %v1535
    %v1537 = vpop.f32.mrb[0].mxu0
    %1538 = vdwg.mxu0
    %v1540 = vsel %vm1421, %v1463, 0
    %1542 = vmatprep.subr.mxu0 0.0
    %1543 = vmatpush1.msra.mxu0 %v965
    %1544 = vmatprep.subr.mxu0 0.0
    %1545 = vmatpush1.msra.mxu0 0.0
    %1546 = vmatprep.subr.mxu0 0.0
    %1547 = vmatpush1.msra.mxu0 0.0
    %1548 = vmatprep.subr.mxu0 0.0
    %1549 = vmatpush1.msra.mxu0 0.0
    %1550 = vmatprep.subr.mxu0 0.0
    %1551 = vmatpush1.msra.mxu0 0.0
    %1552 = vmatprep.subr.mxu0 0.0
    %1553 = vmatpush1.msra.mxu0 0.0
    %1554 = vmatprep.subr.mxu0 0.0
    %1555 = vmatpush1.msra.mxu0 0.0
    %1556 = vmatprep.subr.mxu0 0.0
    %1557 = vmatpush1.msra.mxu0 0.0
    %1558 = vmatprep.subr.mxu0 0.0
    %1559 = vmatpush1.msra.mxu0 0.0
    %1560 = vmatprep.subr.mxu0 0.0
    %1561 = vmatpush1.msra.mxu0 0.0
    %1562 = vmatprep.subr.mxu0 0.0
    %1563 = vmatpush1.msra.mxu0 0.0
    %1564 = vmatprep.subr.mxu0 0.0
    %1565 = vmatpush1.msra.mxu0 0.0
    %1566 = vmatprep.subr.mxu0 0.0
    %1567 = vmatpush1.msra.mxu0 0.0
    %1568 = vmatprep.subr.mxu0 0.0
    %1569 = vmatpush1.msra.mxu0 0.0
    %1570 = vmatprep.subr.mxu0 0.0
    %1571 = vmatpush1.msra.mxu0 0.0
    %1572 = vmatprep.subr.mxu0 0.0
    %1573 = vmatpush1.msra.mxu0 0.0
    %1574 = vmatprep.subr.mxu0 0.0
    %1575 = vmatpush1.msra.mxu0 0.0
    %1576 = vmatprep.subr.mxu0 0.0
    %1577 = vmatpush1.msra.mxu0 0.0
    %1578 = vmatprep.subr.mxu0 0.0
    %1579 = vmatpush1.msra.mxu0 0.0
    %1580 = vmatprep.subr.mxu0 0.0
    %1581 = vmatpush1.msra.mxu0 0.0
    %1582 = vmatprep.subr.mxu0 0.0
    %1583 = vmatpush1.msra.mxu0 0.0
    %1584 = vmatprep.subr.mxu0 0.0
    %1585 = vmatpush1.msra.mxu0 0.0
    %1586 = vmatprep.subr.mxu0 0.0
    %1587 = vmatpush1.msra.mxu0 0.0
    %1588 = vmatprep.subr.mxu0 0.0
    %1589 = vmatpush1.msra.mxu0 0.0
    %1590 = vmatprep.subr.mxu0 0.0
    %1591 = vmatpush1.msra.mxu0 0.0
    %1592 = vmatprep.subr.mxu0 0.0
    %1593 = vmatpush1.msra.mxu0 0.0
    %1594 = vmatprep.subr.mxu0 0.0
    %1595 = vmatpush1.msra.mxu0 0.0
    %1596 = vmatprep.subr.mxu0 0.0
    %1597 = vmatpush1.msra.mxu0 0.0
    %1598 = vmatprep.subr.mxu0 0.0
    %1599 = vmatpush1.msra.mxu0 0.0
    %1600 = vmatprep.subr.mxu0 0.0
    %1601 = vmatpush1.msra.mxu0 0.0
    %1602 = vmatprep.subr.mxu0 0.0
    %1603 = vmatpush1.msra.mxu0 0.0
    %1604 = vmatprep.subr.mxu0 0.0
    %1605 = vmatpush1.msra.mxu0 0.0
    %1606 = vmatprep.mubr.f32.mxu0 0.0
    %1607 = vmatmul.mubr.f32.gmra.mrb[0].mxu0 %v1540
    %v1608 = vpop.f32.mrb[0].mxu0
    %v1609 = vadd.f32 0.0, %v1608
    %v1610 = vpop.f32.mrb[0].mxu0
    %1611 = vdwg.mxu0
    %v1613 = vsel %vm1421, %v1464, 0
    %1615 = vmatprep.subr.mxu0 0.0
    %1616 = vmatpush1.msra.mxu0 %v1035
    %1617 = vmatprep.subr.mxu0 0.0
    %1618 = vmatpush1.msra.mxu0 0.0
    %1619 = vmatprep.subr.mxu0 0.0
    %1620 = vmatpush1.msra.mxu0 0.0
    %1621 = vmatprep.subr.mxu0 0.0
    %1622 = vmatpush1.msra.mxu0 0.0
    %1623 = vmatprep.subr.mxu0 0.0
    %1624 = vmatpush1.msra.mxu0 0.0
    %1625 = vmatprep.subr.mxu0 0.0
    %1626 = vmatpush1.msra.mxu0 0.0
    %1627 = vmatprep.subr.mxu0 0.0
    %1628 = vmatpush1.msra.mxu0 0.0
    %1629 = vmatprep.subr.mxu0 0.0
    %1630 = vmatpush1.msra.mxu0 0.0
    %1631 = vmatprep.subr.mxu0 0.0
    %1632 = vmatpush1.msra.mxu0 0.0
    %1633 = vmatprep.subr.mxu0 0.0
    %1634 = vmatpush1.msra.mxu0 0.0
    %1635 = vmatprep.subr.mxu0 0.0
    %1636 = vmatpush1.msra.mxu0 0.0
    %1637 = vmatprep.subr.mxu0 0.0
    %1638 = vmatpush1.msra.mxu0 0.0
    %1639 = vmatprep.subr.mxu0 0.0
    %1640 = vmatpush1.msra.mxu0 0.0
    %1641 = vmatprep.subr.mxu0 0.0
    %1642 = vmatpush1.msra.mxu0 0.0
    %1643 = vmatprep.subr.mxu0 0.0
    %1644 = vmatpush1.msra.mxu0 0.0
    %1645 = vmatprep.subr.mxu0 0.0
    %1646 = vmatpush1.msra.mxu0 0.0
    %1647 = vmatprep.subr.mxu0 0.0
    %1648 = vmatpush1.msra.mxu0 0.0
    %1649 = vmatprep.subr.mxu0 0.0
    %1650 = vmatpush1.msra.mxu0 0.0
    %1651 = vmatprep.subr.mxu0 0.0
    %1652 = vmatpush1.msra.mxu0 0.0
    %1653 = vmatprep.subr.mxu0 0.0
    %1654 = vmatpush1.msra.mxu0 0.0
    %1655 = vmatprep.subr.mxu0 0.0
    %1656 = vmatpush1.msra.mxu0 0.0
    %1657 = vmatprep.subr.mxu0 0.0
    %1658 = vmatpush1.msra.mxu0 0.0
    %1659 = vmatprep.subr.mxu0 0.0
    %1660 = vmatpush1.msra.mxu0 0.0
    %1661 = vmatprep.subr.mxu0 0.0
    %1662 = vmatpush1.msra.mxu0 0.0
    %1663 = vmatprep.subr.mxu0 0.0
    %1664 = vmatpush1.msra.mxu0 0.0
    %1665 = vmatprep.subr.mxu0 0.0
    %1666 = vmatpush1.msra.mxu0 0.0
    %1667 = vmatprep.subr.mxu0 0.0
    %1668 = vmatpush1.msra.mxu0 0.0
    %1669 = vmatprep.subr.mxu0 0.0
    %1670 = vmatpush1.msra.mxu0 0.0
    %1671 = vmatprep.subr.mxu0 0.0
    %1672 = vmatpush1.msra.mxu0 0.0
    %1673 = vmatprep.subr.mxu0 0.0
    %1674 = vmatpush1.msra.mxu0 0.0
    %1675 = vmatprep.subr.mxu0 0.0
    %1676 = vmatpush1.msra.mxu0 0.0
    %1677 = vmatprep.subr.mxu0 0.0
    %1678 = vmatpush1.msra.mxu0 0.0
    %1679 = vmatprep.mubr.f32.mxu0 0.0
    %1680 = vmatmul.mubr.f32.gmra.mrb[0].mxu0 %v1613
    %v1681 = vpop.f32.mrb[0].mxu0
    %v1682 = vadd.f32 0.0, %v1681
    %v1683 = vpop.f32.mrb[0].mxu0
    %1684 = vdwg.mxu0
    %v1686 = vsel %vm1421, %v1465, 0
    %1688 = vmatprep.subr.mxu0 0.0
    %1689 = vmatpush1.msra.mxu0 %v1105
    %1690 = vmatprep.subr.mxu0 0.0
    %1691 = vmatpush1.msra.mxu0 0.0
    %1692 = vmatprep.subr.mxu0 0.0
    %1693 = vmatpush1.msra.mxu0 0.0
    %1694 = vmatprep.subr.mxu0 0.0
    %1695 = vmatpush1.msra.mxu0 0.0
    %1696 = vmatprep.subr.mxu0 0.0
    %1697 = vmatpush1.msra.mxu0 0.0
    %1698 = vmatprep.subr.mxu0 0.0
    %1699 = vmatpush1.msra.mxu0 0.0
    %1700 = vmatprep.subr.mxu0 0.0
    %1701 = vmatpush1.msra.mxu0 0.0
    %1702 = vmatprep.subr.mxu0 0.0
    %1703 = vmatpush1.msra.mxu0 0.0
    %1704 = vmatprep.subr.mxu0 0.0
    %1705 = vmatpush1.msra.mxu0 0.0
    %1706 = vmatprep.subr.mxu0 0.0
    %1707 = vmatpush1.msra.mxu0 0.0
    %1708 = vmatprep.subr.mxu0 0.0
    %1709 = vmatpush1.msra.mxu0 0.0
    %1710 = vmatprep.subr.mxu0 0.0
    %1711 = vmatpush1.msra.mxu0 0.0
    %1712 = vmatprep.subr.mxu0 0.0
    %1713 = vmatpush1.msra.mxu0 0.0
    %1714 = vmatprep.subr.mxu0 0.0
    %1715 = vmatpush1.msra.mxu0 0.0
    %1716 = vmatprep.subr.mxu0 0.0
    %1717 = vmatpush1.msra.mxu0 0.0
    %1718 = vmatprep.subr.mxu0 0.0
    %1719 = vmatpush1.msra.mxu0 0.0
    %1720 = vmatprep.subr.mxu0 0.0
    %1721 = vmatpush1.msra.mxu0 0.0
    %1722 = vmatprep.subr.mxu0 0.0
    %1723 = vmatpush1.msra.mxu0 0.0
    %1724 = vmatprep.subr.mxu0 0.0
    %1725 = vmatpush1.msra.mxu0 0.0
    %1726 = vmatprep.subr.mxu0 0.0
    %1727 = vmatpush1.msra.mxu0 0.0
    %1728 = vmatprep.subr.mxu0 0.0
    %1729 = vmatpush1.msra.mxu0 0.0
    %1730 = vmatprep.subr.mxu0 0.0
    %1731 = vmatpush1.msra.mxu0 0.0
    %1732 = vmatprep.subr.mxu0 0.0
    %1733 = vmatpush1.msra.mxu0 0.0
    %1734 = vmatprep.subr.mxu0 0.0
    %1735 = vmatpush1.msra.mxu0 0.0
    %1736 = vmatprep.subr.mxu0 0.0
    %1737 = vmatpush1.msra.mxu0 0.0
    %1738 = vmatprep.subr.mxu0 0.0
    %1739 = vmatpush1.msra.mxu0 0.0
    %1740 = vmatprep.subr.mxu0 0.0
    %1741 = vmatpush1.msra.mxu0 0.0
    %1742 = vmatprep.subr.mxu0 0.0
    %1743 = vmatpush1.msra.mxu0 0.0
    %1744 = vmatprep.subr.mxu0 0.0
    %1745 = vmatpush1.msra.mxu0 0.0
    %1746 = vmatprep.subr.mxu0 0.0
    %1747 = vmatpush1.msra.mxu0 0.0
    %1748 = vmatprep.subr.mxu0 0.0
    %1749 = vmatpush1.msra.mxu0 0.0
    %1750 = vmatprep.subr.mxu0 0.0
    %1751 = vmatpush1.msra.mxu0 0.0
    %1752 = vmatprep.mubr.f32.mxu0 0.0
    %1753 = vmatmul.mubr.f32.gmra.mrb[0].mxu0 %v1686
    %v1754 = vpop.f32.mrb[0].mxu0
    %v1755 = vadd.f32 0.0, %v1754
    %v1756 = vpop.f32.mrb[0].mxu0
    %1757 = vdwg.mxu0
    %v1758 = vld [vmem:[%s10] sm:$0xff]
    %v1759 = vld [vmem:[%s10 + $0x8] sm:$0xff]
    %v1760 = vld [vmem:[%s10 + $0x10] sm:$0xff]
    %v1761 = vld [vmem:[%s10 + $0x18] sm:$0xff]
    %v1762 = vld [vmem:[%s10 + $0x20] sm:$0xff]
    %v1763 = vld [vmem:[%s10 + $0x28] sm:$0xff]
    %v1764 = vld [vmem:[%s10 + $0x30] sm:$0xff]
    %v1765 = vld [vmem:[%s10 + $0x38] sm:$0xff]
    %v1767 = vsel %vm1108, %v1536, 0
    %1769 = vmatprep.subr.mxu0 0.0
    %1770 = vmatpush1.msra.mxu0 %v1758
    %1771 = vmatprep.subr.mxu0 0.0
    %1772 = vmatpush1.msra.mxu0 %v1759
    %1773 = vmatprep.subr.mxu0 0.0
    %1774 = vmatpush1.msra.mxu0 0.0
    %1775 = vmatprep.subr.mxu0 0.0
    %1776 = vmatpush1.msra.mxu0 0.0
    %1777 = vmatprep.subr.mxu0 0.0
    %1778 = vmatpush1.msra.mxu0 0.0
    %1779 = vmatprep.subr.mxu0 0.0
    %1780 = vmatpush1.msra.mxu0 0.0
    %1781 = vmatprep.subr.mxu0 0.0
    %1782 = vmatpush1.msra.mxu0 0.0
    %1783 = vmatprep.subr.mxu0 0.0
    %1784 = vmatpush1.msra.mxu0 0.0
    %1785 = vmatprep.subr.mxu0 0.0
    %1786 = vmatpush1.msra.mxu0 0.0
    %1787 = vmatprep.subr.mxu0 0.0
    %1788 = vmatpush1.msra.mxu0 0.0
    %1789 = vmatprep.subr.mxu0 0.0
    %1790 = vmatpush1.msra.mxu0 0.0
    %1791 = vmatprep.subr.mxu0 0.0
    %1792 = vmatpush1.msra.mxu0 0.0
    %1793 = vmatprep.subr.mxu0 0.0
    %1794 = vmatpush1.msra.mxu0 0.0
    %1795 = vmatprep.subr.mxu0 0.0
    %1796 = vmatpush1.msra.mxu0 0.0
    %1797 = vmatprep.subr.mxu0 0.0
    %1798 = vmatpush1.msra.mxu0 0.0
    %1799 = vmatprep.subr.mxu0 0.0
    %1800 = vmatpush1.msra.mxu0 0.0
    %1801 = vmatprep.subr.mxu0 0.0
    %1802 = vmatpush1.msra.mxu0 0.0
    %1803 = vmatprep.subr.mxu0 0.0
    %1804 = vmatpush1.msra.mxu0 0.0
    %1805 = vmatprep.subr.mxu0 0.0
    %1806 = vmatpush1.msra.mxu0 0.0
    %1807 = vmatprep.subr.mxu0 0.0
    %1808 = vmatpush1.msra.mxu0 0.0
    %1809 = vmatprep.subr.mxu0 0.0
    %1810 = vmatpush1.msra.mxu0 0.0
    %1811 = vmatprep.subr.mxu0 0.0
    %1812 = vmatpush1.msra.mxu0 0.0
    %1813 = vmatprep.subr.mxu0 0.0
    %1814 = vmatpush1.msra.mxu0 0.0
    %1815 = vmatprep.subr.mxu0 0.0
    %1816 = vmatpush1.msra.mxu0 0.0
    %1817 = vmatprep.subr.mxu0 0.0
    %1818 = vmatpush1.msra.mxu0 0.0
    %1819 = vmatprep.subr.mxu0 0.0
    %1820 = vmatpush1.msra.mxu0 0.0
    %1821 = vmatprep.subr.mxu0 0.0
    %1822 = vmatpush1.msra.mxu0 0.0
    %1823 = vmatprep.subr.mxu0 0.0
    %1824 = vmatpush1.msra.mxu0 0.0
    %1825 = vmatprep.subr.mxu0 0.0
    %1826 = vmatpush1.msra.mxu0 0.0
    %1827 = vmatprep.subr.mxu0 0.0
    %1828 = vmatpush1.msra.mxu0 0.0
    %1829 = vmatprep.subr.mxu0 0.0
    %1830 = vmatpush1.msra.mxu0 0.0
    %1831 = vmatprep.subr.mxu0 0.0
    %1832 = vmatpush1.msra.mxu0 0.0
    %1833 = vmatprep.mubr.f32.mxu0 0.0
    %1834 = vmatmul.mubr.f32.gmra.mrb[0].mxu0 %v1767
    %v1835 = vpop.f32.mrb[0].mxu0
    %v1836 = vadd.f32 0.0, %v1835
    %v1837 = vpop.f32.mrb[0].mxu0
    %1838 = vdwg.mxu0
    %v1840 = vsel %vm1108, %v1609, 0
    %1842 = vmatprep.subr.mxu0 0.0
    %1843 = vmatpush1.msra.mxu0 %v1760
    %1844 = vmatprep.subr.mxu0 0.0
    %1845 = vmatpush1.msra.mxu0 %v1761
    %1846 = vmatprep.subr.mxu0 0.0
    %1847 = vmatpush1.msra.mxu0 0.0
    %1848 = vmatprep.subr.mxu0 0.0
    %1849 = vmatpush1.msra.mxu0 0.0
    %1850 = vmatprep.subr.mxu0 0.0
    %1851 = vmatpush1.msra.mxu0 0.0
    %1852 = vmatprep.subr.mxu0 0.0
    %1853 = vmatpush1.msra.mxu0 0.0
    %1854 = vmatprep.subr.mxu0 0.0
    %1855 = vmatpush1.msra.mxu0 0.0
    %1856 = vmatprep.subr.mxu0 0.0
    %1857 = vmatpush1.msra.mxu0 0.0
    %1858 = vmatprep.subr.mxu0 0.0
    %1859 = vmatpush1.msra.mxu0 0.0
    %1860 = vmatprep.subr.mxu0 0.0
    %1861 = vmatpush1.msra.mxu0 0.0
    %1862 = vmatprep.subr.mxu0 0.0
    %1863 = vmatpush1.msra.mxu0 0.0
    %1864 = vmatprep.subr.mxu0 0.0
    %1865 = vmatpush1.msra.mxu0 0.0
    %1866 = vmatprep.subr.mxu0 0.0
    %1867 = vmatpush1.msra.mxu0 0.0
    %1868 = vmatprep.subr.mxu0 0.0
    %1869 = vmatpush1.msra.mxu0 0.0
    %1870 = vmatprep.subr.mxu0 0.0
    %1871 = vmatpush1.msra.mxu0 0.0
    %1872 = vmatprep.subr.mxu0 0.0
    %1873 = vmatpush1.msra.mxu0 0.0
    %1874 = vmatprep.subr.mxu0 0.0
    %1875 = vmatpush1.msra.mxu0 0.0
    %1876 = vmatprep.subr.mxu0 0.0
    %1877 = vmatpush1.msra.mxu0 0.0
    %1878 = vmatprep.subr.mxu0 0.0
    %1879 = vmatpush1.msra.mxu0 0.0
    %1880 = vmatprep.subr.mxu0 0.0
    %1881 = vmatpush1.msra.mxu0 0.0
    %1882 = vmatprep.subr.mxu0 0.0
    %1883 = vmatpush1.msra.mxu0 0.0
    %1884 = vmatprep.subr.mxu0 0.0
    %1885 = vmatpush1.msra.mxu0 0.0
    %1886 = vmatprep.subr.mxu0 0.0
    %1887 = vmatpush1.msra.mxu0 0.0
    %1888 = vmatprep.subr.mxu0 0.0
    %1889 = vmatpush1.msra.mxu0 0.0
    %1890 = vmatprep.subr.mxu0 0.0
    %1891 = vmatpush1.msra.mxu0 0.0
    %1892 = vmatprep.subr.mxu0 0.0
    %1893 = vmatpush1.msra.mxu0 0.0
    %1894 = vmatprep.subr.mxu0 0.0
    %1895 = vmatpush1.msra.mxu0 0.0
    %1896 = vmatprep.subr.mxu0 0.0
    %1897 = vmatpush1.msra.mxu0 0.0
    %1898 = vmatprep.subr.mxu0 0.0
    %1899 = vmatpush1.msra.mxu0 0.0
    %1900 = vmatprep.subr.mxu0 0.0
    %1901 = vmatpush1.msra.mxu0 0.0
    %1902 = vmatprep.subr.mxu0 0.0
    %1903 = vmatpush1.msra.mxu0 0.0
    %1904 = vmatprep.subr.mxu0 0.0
    %1905 = vmatpush1.msra.mxu0 0.0
    %1906 = vmatprep.mubr.f32.mxu0 0.0
    %1907 = vmatmul.mubr.f32.gmra.mrb[0].mxu0 %v1840
    %v1908 = vpop.f32.mrb[0].mxu0
    %v1909 = vadd.f32 0.0, %v1908
    %v1910 = vpop.f32.mrb[0].mxu0
    %1911 = vdwg.mxu0
    %v1913 = vsel %vm1108, %v1682, 0
    %1915 = vmatprep.subr.mxu0 0.0
    %1916 = vmatpush1.msra.mxu0 %v1762
    %1917 = vmatprep.subr.mxu0 0.0
    %1918 = vmatpush1.msra.mxu0 %v1763
    %1919 = vmatprep.subr.mxu0 0.0
    %1920 = vmatpush1.msra.mxu0 0.0
    %1921 = vmatprep.subr.mxu0 0.0
    %1922 = vmatpush1.msra.mxu0 0.0
    %1923 = vmatprep.subr.mxu0 0.0
    %1924 = vmatpush1.msra.mxu0 0.0
    %1925 = vmatprep.subr.mxu0 0.0
    %1926 = vmatpush1.msra.mxu0 0.0
    %1927 = vmatprep.subr.mxu0 0.0
    %1928 = vmatpush1.msra.mxu0 0.0
    %1929 = vmatprep.subr.mxu0 0.0
    %1930 = vmatpush1.msra.mxu0 0.0
    %1931 = vmatprep.subr.mxu0 0.0
    %1932 = vmatpush1.msra.mxu0 0.0
    %1933 = vmatprep.subr.mxu0 0.0
    %1934 = vmatpush1.msra.mxu0 0.0
    %1935 = vmatprep.subr.mxu0 0.0
    %1936 = vmatpush1.msra.mxu0 0.0
    %1937 = vmatprep.subr.mxu0 0.0
    %1938 = vmatpush1.msra.mxu0 0.0
    %1939 = vmatprep.subr.mxu0 0.0
    %1940 = vmatpush1.msra.mxu0 0.0
    %1941 = vmatprep.subr.mxu0 0.0
    %1942 = vmatpush1.msra.mxu0 0.0
    %1943 = vmatprep.subr.mxu0 0.0
    %1944 = vmatpush1.msra.mxu0 0.0
    %1945 = vmatprep.subr.mxu0 0.0
    %1946 = vmatpush1.msra.mxu0 0.0
    %1947 = vmatprep.subr.mxu0 0.0
    %1948 = vmatpush1.msra.mxu0 0.0
    %1949 = vmatprep.subr.mxu0 0.0
    %1950 = vmatpush1.msra.mxu0 0.0
    %1951 = vmatprep.subr.mxu0 0.0
    %1952 = vmatpush1.msra.mxu0 0.0
    %1953 = vmatprep.subr.mxu0 0.0
    %1954 = vmatpush1.msra.mxu0 0.0
    %1955 = vmatprep.subr.mxu0 0.0
    %1956 = vmatpush1.msra.mxu0 0.0
    %1957 = vmatprep.subr.mxu0 0.0
    %1958 = vmatpush1.msra.mxu0 0.0
    %1959 = vmatprep.subr.mxu0 0.0
    %1960 = vmatpush1.msra.mxu0 0.0
    %1961 = vmatprep.subr.mxu0 0.0
    %1962 = vmatpush1.msra.mxu0 0.0
    %1963 = vmatprep.subr.mxu0 0.0
    %1964 = vmatpush1.msra.mxu0 0.0
    %1965 = vmatprep.subr.mxu0 0.0
    %1966 = vmatpush1.msra.mxu0 0.0
    %1967 = vmatprep.subr.mxu0 0.0
    %1968 = vmatpush1.msra.mxu0 0.0
    %1969 = vmatprep.subr.mxu0 0.0
    %1970 = vmatpush1.msra.mxu0 0.0
    %1971 = vmatprep.subr.mxu0 0.0
    %1972 = vmatpush1.msra.mxu0 0.0
    %1973 = vmatprep.subr.mxu0 0.0
    %1974 = vmatpush1.msra.mxu0 0.0
    %1975 = vmatprep.subr.mxu0 0.0
    %1976 = vmatpush1.msra.mxu0 0.0
    %1977 = vmatprep.subr.mxu0 0.0
    %1978 = vmatpush1.msra.mxu0 0.0
    %1979 = vmatprep.mubr.f32.mxu0 0.0
    %1980 = vmatmul.mubr.f32.gmra.mrb[0].mxu0 %v1913
    %v1981 = vpop.f32.mrb[0].mxu0
    %v1982 = vadd.f32 0.0, %v1981
    %v1983 = vpop.f32.mrb[0].mxu0
    %1984 = vdwg.mxu0
    %v1986 = vsel %vm1108, %v1755, 0
    %1988 = vmatprep.subr.mxu0 0.0
    %1989 = vmatpush1.msra.mxu0 %v1764
    %1990 = vmatprep.subr.mxu0 0.0
    %1991 = vmatpush1.msra.mxu0 %v1765
    %1992 = vmatprep.subr.mxu0 0.0
    %1993 = vmatpush1.msra.mxu0 0.0
    %1994 = vmatprep.subr.mxu0 0.0
    %1995 = vmatpush1.msra.mxu0 0.0
    %1996 = vmatprep.subr.mxu0 0.0
    %1997 = vmatpush1.msra.mxu0 0.0
    %1998 = vmatprep.subr.mxu0 0.0
    %1999 = vmatpush1.msra.mxu0 0.0
    %2000 = vmatprep.subr.mxu0 0.0
    %2001 = vmatpush1.msra.mxu0 0.0
    %2002 = vmatprep.subr.mxu0 0.0
    %2003 = vmatpush1.msra.mxu0 0.0
    %2004 = vmatprep.subr.mxu0 0.0
    %2005 = vmatpush1.msra.mxu0 0.0
    %2006 = vmatprep.subr.mxu0 0.0
    %2007 = vmatpush1.msra.mxu0 0.0
    %2008 = vmatprep.subr.mxu0 0.0
    %2009 = vmatpush1.msra.mxu0 0.0
    %2010 = vmatprep.subr.mxu0 0.0
    %2011 = vmatpush1.msra.mxu0 0.0
    %2012 = vmatprep.subr.mxu0 0.0
    %2013 = vmatpush1.msra.mxu0 0.0
    %2014 = vmatprep.subr.mxu0 0.0
    %2015 = vmatpush1.msra.mxu0 0.0
    %2016 = vmatprep.subr.mxu0 0.0
    %2017 = vmatpush1.msra.mxu0 0.0
    %2018 = vmatprep.subr.mxu0 0.0
    %2019 = vmatpush1.msra.mxu0 0.0
    %2020 = vmatprep.subr.mxu0 0.0
    %2021 = vmatpush1.msra.mxu0 0.0
    %2022 = vmatprep.subr.mxu0 0.0
    %2023 = vmatpush1.msra.mxu0 0.0
    %2024 = vmatprep.subr.mxu0 0.0
    %2025 = vmatpush1.msra.mxu0 0.0
    %2026 = vmatprep.subr.mxu0 0.0
    %2027 = vmatpush1.msra.mxu0 0.0
    %2028 = vmatprep.subr.mxu0 0.0
    %2029 = vmatpush1.msra.mxu0 0.0
    %2030 = vmatprep.subr.mxu0 0.0
    %2031 = vmatpush1.msra.mxu0 0.0
    %2032 = vmatprep.subr.mxu0 0.0
    %2033 = vmatpush1.msra.mxu0 0.0
    %2034 = vmatprep.subr.mxu0 0.0
    %2035 = vmatpush1.msra.mxu0 0.0
    %2036 = vmatprep.subr.mxu0 0.0
    %2037 = vmatpush1.msra.mxu0 0.0
    %2038 = vmatprep.subr.mxu0 0.0
    %2039 = vmatpush1.msra.mxu0 0.0
    %2040 = vmatprep.subr.mxu0 0.0
    %2041 = vmatpush1.msra.mxu0 0.0
    %2042 = vmatprep.subr.mxu0 0.0
    %2043 = vmatpush1.msra.mxu0 0.0
    %2044 = vmatprep.subr.mxu0 0.0
    %2045 = vmatpush1.msra.mxu0 0.0
    %2046 = vmatprep.subr.mxu0 0.0
    %2047 = vmatpush1.msra.mxu0 0.0
    %2048 = vmatprep.subr.mxu0 0.0
    %2049 = vmatpush1.msra.mxu0 0.0
    %2050 = vmatprep.subr.mxu0 0.0
    %2051 = vmatpush1.msra.mxu0 0.0
    %2052 = vmatprep.mubr.f32.mxu0 0.0
    %2053 = vmatmul.mubr.f32.gmra.mrb[0].mxu0 %v1986
    %v2054 = vpop.f32.mrb[0].mxu0
    %v2055 = vadd.f32 0.0, %v2054
    %v2056 = vpop.f32.mrb[0].mxu0
    %2057 = vdwg.mxu0
    %v2058 = vsel %vm82, %v1836, 0.0
    %v2059 = vsel %vm82, %v1909, 0.0
    %v2060 = vadd.f32 %v2058, %v2059
    %v2061 = vsel %vm82, %v1982, 0.0
    %v2062 = vsel %vm82, %v2055, 0.0
    %v2063 = vadd.f32 %v2061, %v2062
    %v2064 = vld [vmem:[%s11] sm:$0x1]
    %v2066 = vlaneseq
    %v2067 = vshrl.u32 %v2066, 7
    %v2068 = vsub.s32 0, %v2067
    %v2069 = vrot.slane %v2064, %v2068
    %v2071 = vadd.f32 %v2060, %v2069
    %v2072 = vadd.f32 %v2063, %v2069
    %v2073 = vadd.f32 %v2071, %v124
    %v2074 = vadd.f32 %v2072, %v125
    %v2075 = vld [vmem:[%s12] sm:$0x1]
    %v2076 = vld [vmem:[%s13] sm:$0x1]
    %v2077 = vsel %vm82, %v2073, 0.0
    %2078 = vadd.xlane.f32.xlu0 %v2077
    %v2079 = vpop.xlane.xlu0 %2078
    %v2080 = vsel %vm82, %v2074, 0.0
    %2081 = vadd.xlane.f32.xlu0 %v2080
    %v2082 = vpop.xlane.xlu0 %2081
    %v2083 = vmul.f32 %v2079, %v89
    %v2084 = vmul.f32 %v2082, %v89
    %v2085 = vsub.f32 %v2073, %v2083
    %v2086 = vsub.f32 %v2074, %v2084
    %v2087 = vmul.f32 %v2085, %v2085
    %v2088 = vmul.f32 %v2086, %v2086
    %v2089 = vsel %vm82, %v2087, 0.0
    %2090 = vadd.xlane.f32.xlu0 %v2089
    %v2091 = vpop.xlane.xlu0 %2090
    %v2092 = vsel %vm82, %v2088, 0.0
    %2093 = vadd.xlane.f32.xlu0 %v2092
    %v2094 = vpop.xlane.xlu0 %2093
    %v2095 = vmul.f32 %v2091, %v89
    %v2096 = vmul.f32 %v2094, %v89
    %v2097 = vadd.f32 %v2095, 1e-12
    %v2098 = vadd.f32 %v2096, 1e-12
    %v2099 = vrsqrt.pop %v2097
    %v2100 = vrsqrt.pop %v2098
    %v2101 = vmul.f32 %v2085, %v2099
    %v2102 = vmul.f32 %v2086, %v2100
    %v2104 = vlaneseq
    %v2105 = vshrl.u32 %v2104, 7
    %v2106 = vsub.s32 0, %v2105
    %v2107 = vrot.slane %v2075, %v2106
    %v2109 = vmul.f32 %v2101, %v2107
    %v2110 = vmul.f32 %v2102, %v2107
    %v2112 = vlaneseq
    %v2113 = vshrl.u32 %v2112, 7
    %v2114 = vsub.s32 0, %v2113
    %v2115 = vrot.slane %v2076, %v2114
    %v2117 = vadd.f32 %v2109, %v2115
    %v2118 = vadd.f32 %v2110, %v2115
    %v2119 = vld [vmem:[%s14] sm:$0xff]
    %v2120 = vld [vmem:[%s14 + $0x8] sm:$0xff]
    %v2121 = vld [vmem:[%s14 + $0x10] sm:$0xff]
    %v2122 = vld [vmem:[%s14 + $0x18] sm:$0xff]
    %v2123 = vld [vmem:[%s15] sm:$0x1]
    %v2125 = vlaneseq
    %v2126 = vshrl.u32 %v2125, 7
    %v2127 = vsub.s32 0, %v2126
    %v2128 = vrot.slane %v2123, %v2127
    %v2131 = vsel %vm82, %v2117, 0
    %v2134 = vsel %vm82, %v2118, 0
    %2136 = vmatprep.subr.mxu0 0.0
    %2137 = vmatpush1.msra.mxu0 %v2119
    %2138 = vmatprep.subr.mxu0 0.0
    %2139 = vmatpush1.msra.mxu0 %v2120
    %2140 = vmatprep.subr.mxu0 0.0
    %2141 = vmatpush1.msra.mxu0 %v2121
    %2142 = vmatprep.subr.mxu0 0.0
    %2143 = vmatpush1.msra.mxu0 %v2122
    %2144 = vmatprep.subr.mxu0 0.0
    %2145 = vmatpush1.msra.mxu0 0.0
    %2146 = vmatprep.subr.mxu0 0.0
    %2147 = vmatpush1.msra.mxu0 0.0
    %2148 = vmatprep.subr.mxu0 0.0
    %2149 = vmatpush1.msra.mxu0 0.0
    %2150 = vmatprep.subr.mxu0 0.0
    %2151 = vmatpush1.msra.mxu0 0.0
    %2152 = vmatprep.subr.mxu0 0.0
    %2153 = vmatpush1.msra.mxu0 0.0
    %2154 = vmatprep.subr.mxu0 0.0
    %2155 = vmatpush1.msra.mxu0 0.0
    %2156 = vmatprep.subr.mxu0 0.0
    %2157 = vmatpush1.msra.mxu0 0.0
    %2158 = vmatprep.subr.mxu0 0.0
    %2159 = vmatpush1.msra.mxu0 0.0
    %2160 = vmatprep.subr.mxu0 0.0
    %2161 = vmatpush1.msra.mxu0 0.0
    %2162 = vmatprep.subr.mxu0 0.0
    %2163 = vmatpush1.msra.mxu0 0.0
    %2164 = vmatprep.subr.mxu0 0.0
    %2165 = vmatpush1.msra.mxu0 0.0
    %2166 = vmatprep.subr.mxu0 0.0
    %2167 = vmatpush1.msra.mxu0 0.0
    %2168 = vmatprep.subr.mxu0 0.0
    %2169 = vmatpush1.msra.mxu0 0.0
    %2170 = vmatprep.subr.mxu0 0.0
    %2171 = vmatpush1.msra.mxu0 0.0
    %2172 = vmatprep.subr.mxu0 0.0
    %2173 = vmatpush1.msra.mxu0 0.0
    %2174 = vmatprep.subr.mxu0 0.0
    %2175 = vmatpush1.msra.mxu0 0.0
    %2176 = vmatprep.subr.mxu0 0.0
    %2177 = vmatpush1.msra.mxu0 0.0
    %2178 = vmatprep.subr.mxu0 0.0
    %2179 = vmatpush1.msra.mxu0 0.0
    %2180 = vmatprep.subr.mxu0 0.0
    %2181 = vmatpush1.msra.mxu0 0.0
    %2182 = vmatprep.subr.mxu0 0.0
    %2183 = vmatpush1.msra.mxu0 0.0
    %2184 = vmatprep.subr.mxu0 0.0
    %2185 = vmatpush1.msra.mxu0 0.0
    %2186 = vmatprep.subr.mxu0 0.0
    %2187 = vmatpush1.msra.mxu0 0.0
    %2188 = vmatprep.subr.mxu0 0.0
    %2189 = vmatpush1.msra.mxu0 0.0
    %2190 = vmatprep.subr.mxu0 0.0
    %2191 = vmatpush1.msra.mxu0 0.0
    %2192 = vmatprep.subr.mxu0 0.0
    %2193 = vmatpush1.msra.mxu0 0.0
    %2194 = vmatprep.subr.mxu0 0.0
    %2195 = vmatpush1.msra.mxu0 0.0
    %2196 = vmatprep.subr.mxu0 0.0
    %2197 = vmatpush1.msra.mxu0 0.0
    %2198 = vmatprep.subr.mxu0 0.0
    %2199 = vmatpush1.msra.mxu0 0.0
    %2200 = vmatprep.mubr.f32.mxu0 0.0
    %2201 = vmatmul.mubr.f32.gmra.mrb[0].mxu0 %v2131
    %v2202 = vpop.f32.mrb[0].mxu0
    %v2203 = vadd.f32 %v2128, %v2202
    %v2204 = vpop.f32.mrb[0].mxu0
    %2205 = vmatprep.mubr.f32.mxu0 0.0
    %2206 = vmatmul.mubr.f32.gmra.mrb[0].mxu0 %v2134
    %v2207 = vpop.f32.mrb[0].mxu0
    %v2208 = vadd.f32 %v2128, %v2207
    %v2209 = vpop.f32.mrb[0].mxu0
    %2210 = vdwg.mxu0
    %v2211 = vmul.f32 %v2203, 0.5
    %v2212 = vmul.f32 %v2208, 0.5
    %v2213 = vmul.f32 %v2203, 0.70710677
    %v2214 = vmul.f32 %v2208, 0.70710677
    %v2215 = verf.f32.pop %v2213
    %v2216 = verf.f32.pop %v2214
    %v2217 = vadd.f32 %v2215, 1.0
    %v2218 = vadd.f32 %v2216, 1.0
    %v2219 = vmul.f32 %v2211, %v2217
    %v2220 = vmul.f32 %v2212, %v2218
    %v2221 = vld [vmem:[%s16] sm:$0xff]
    %v2222 = vld [vmem:[%s16 + $0x8] sm:$0xff]
    %v2223 = vld [vmem:[%s16 + $0x10] sm:$0xff]
    %v2224 = vld [vmem:[%s16 + $0x18] sm:$0xff]
    %v2225 = vld [vmem:[%s16 + $0x20] sm:$0xff]
    %v2226 = vld [vmem:[%s16 + $0x28] sm:$0xff]
    %v2227 = vld [vmem:[%s16 + $0x30] sm:$0xff]
    %v2228 = vld [vmem:[%s16 + $0x38] sm:$0xff]
    %v2229 = vld [vmem:[%s17] sm:$0x1]
    %v2231 = vlaneseq
    %v2232 = vshrl.u32 %v2231, 7
    %v2233 = vsub.s32 0, %v2232
    %v2234 = vrot.slane %v2229, %v2233
    %vm2236 = vcmask 523264
    %v2238 = vsel %vm2236, %v2219, 0
    %v2241 = vsel %vm2236, %v2220, 0
    %2243 = vmatprep.subr.mxu0 0.0
    %2244 = vmatpush1.msra.mxu0 %v2221
    %2245 = vmatprep.subr.mxu0 0.0
    %2246 = vmatpush1.msra.mxu0 %v2222
    %2247 = vmatprep.subr.mxu0 0.0
    %2248 = vmatpush1.msra.mxu0 %v2223
    %2249 = vmatprep.subr.mxu0 0.0
    %2250 = vmatpush1.msra.mxu0 %v2224
    %2251 = vmatprep.subr.mxu0 0.0
    %2252 = vmatpush1.msra.mxu0 %v2225
    %2253 = vmatprep.subr.mxu0 0.0
    %2254 = vmatpush1.msra.mxu0 %v2226
    %2255 = vmatprep.subr.mxu0 0.0
    %2256 = vmatpush1.msra.mxu0 %v2227
    %2257 = vmatprep.subr.mxu0 0.0
    %2258 = vmatpush1.msra.mxu0 %v2228
    %2259 = vmatprep.subr.mxu0 0.0
    %2260 = vmatpush1.msra.mxu0 0.0
    %2261 = vmatprep.subr.mxu0 0.0
    %2262 = vmatpush1.msra.mxu0 0.0
    %2263 = vmatprep.subr.mxu0 0.0
    %2264 = vmatpush1.msra.mxu0 0.0
    %2265 = vmatprep.subr.mxu0 0.0
    %2266 = vmatpush1.msra.mxu0 0.0
    %2267 = vmatprep.subr.mxu0 0.0
    %2268 = vmatpush1.msra.mxu0 0.0
    %2269 = vmatprep.subr.mxu0 0.0
    %2270 = vmatpush1.msra.mxu0 0.0
    %2271 = vmatprep.subr.mxu0 0.0
    %2272 = vmatpush1.msra.mxu0 0.0
    %2273 = vmatprep.subr.mxu0 0.0
    %2274 = vmatpush1.msra.mxu0 0.0
    %2275 = vmatprep.subr.mxu0 0.0
    %2276 = vmatpush1.msra.mxu0 0.0
    %2277 = vmatprep.subr.mxu0 0.0
    %2278 = vmatpush1.msra.mxu0 0.0
    %2279 = vmatprep.subr.mxu0 0.0
    %2280 = vmatpush1.msra.mxu0 0.0
    %2281 = vmatprep.subr.mxu0 0.0
    %2282 = vmatpush1.msra.mxu0 0.0
    %2283 = vmatprep.subr.mxu0 0.0
    %2284 = vmatpush1.msra.mxu0 0.0
    %2285 = vmatprep.subr.mxu0 0.0
    %2286 = vmatpush1.msra.mxu0 0.0
    %2287 = vmatprep.subr.mxu0 0.0
    %2288 = vmatpush1.msra.mxu0 0.0
    %2289 = vmatprep.subr.mxu0 0.0
    %2290 = vmatpush1.msra.mxu0 0.0
    %2291 = vmatprep.subr.mxu0 0.0
    %2292 = vmatpush1.msra.mxu0 0.0
    %2293 = vmatprep.subr.mxu0 0.0
    %2294 = vmatpush1.msra.mxu0 0.0
    %2295 = vmatprep.subr.mxu0 0.0
    %2296 = vmatpush1.msra.mxu0 0.0
    %2297 = vmatprep.subr.mxu0 0.0
    %2298 = vmatpush1.msra.mxu0 0.0
    %2299 = vmatprep.subr.mxu0 0.0
    %2300 = vmatpush1.msra.mxu0 0.0
    %2301 = vmatprep.subr.mxu0 0.0
    %2302 = vmatpush1.msra.mxu0 0.0
    %2303 = vmatprep.subr.mxu0 0.0
    %2304 = vmatpush1.msra.mxu0 0.0
    %2305 = vmatprep.subr.mxu0 0.0
    %2306 = vmatpush1.msra.mxu0 0.0
    %2307 = vmatprep.mubr.f32.mxu0 0.0
    %2308 = vmatmul.mubr.f32.gmra.mrb[0].mxu0 %v2238
    %v2309 = vpop.f32.mrb[0].mxu0
    %v2310 = vadd.f32 %v2234, %v2309
    %v2311 = vpop.f32.mrb[0].mxu0
    %2312 = vmatprep.mubr.f32.mxu0 0.0
    %2313 = vmatmul.mubr.f32.gmra.mrb[0].mxu0 %v2241
    %v2314 = vpop.f32.mrb[0].mxu0
    %v2315 = vadd.f32 %v2234, %v2314
    %v2316 = vpop.f32.mrb[0].mxu0
    %2317 = vdwg.mxu0
    %v2318 = vadd.f32 %v2310, %v2117
    %v2319 = vadd.f32 %v2315, %v2118
    %v2320 = vld [vmem:[%s18] sm:$0x1]
    %v2321 = vld [vmem:[%s19] sm:$0x1]
    %v2322 = vsel %vm82, %v2318, 0.0
    %2323 = vadd.xlane.f32.xlu0 %v2322
    %v2324 = vpop.xlane.xlu0 %2323
    %v2325 = vsel %vm82, %v2319, 0.0
    %2326 = vadd.xlane.f32.xlu0 %v2325
    %v2327 = vpop.xlane.xlu0 %2326
    %v2328 = vmul.f32 %v2324, %v89
    %v2329 = vmul.f32 %v2327, %v89
    %v2330 = vsub.f32 %v2318, %v2328
    %v2331 = vsub.f32 %v2319, %v2329
    %v2332 = vmul.f32 %v2330, %v2330
    %v2333 = vmul.f32 %v2331, %v2331
    %v2334 = vsel %vm82, %v2332, 0.0
    %2335 = vadd.xlane.f32.xlu0 %v2334
    %v2336 = vpop.xlane.xlu0 %2335
    %v2337 = vsel %vm82, %v2333, 0.0
    %2338 = vadd.xlane.f32.xlu0 %v2337
    %v2339 = vpop.xlane.xlu0 %2338
    %v2340 = vmul.f32 %v2336, %v89
    %v2341 = vmul.f32 %v2339, %v89
    %v2342 = vadd.f32 %v2340, 1e-12
    %v2343 = vadd.f32 %v2341, 1e-12
    %v2344 = vrsqrt.pop %v2342
    %v2345 = vrsqrt.pop %v2343
    %v2346 = vmul.f32 %v2330, %v2344
    %v2347 = vmul.f32 %v2331, %v2345
    %v2349 = vlaneseq
    %v2350 = vshrl.u32 %v2349, 7
    %v2351 = vsub.s32 0, %v2350
    %v2352 = vrot.slane %v2320, %v2351
    %v2354 = vmul.f32 %v2346, %v2352
    %v2355 = vmul.f32 %v2347, %v2352
    %v2357 = vlaneseq
    %v2358 = vshrl.u32 %v2357, 7
    %v2359 = vsub.s32 0, %v2358
    %v2360 = vrot.slane %v2321, %v2359
    %v2362 = vadd.f32 %v2354, %v2360
    %v2363 = vadd.f32 %v2355, %v2360
    %s2364 = scalar_lea.vmem %s4, 128
    %v2365 = vld [vmem:[%s2364] sm:$0xff]
    %v2366 = vld [vmem:[%s2364 + $0x8] sm:$0xff]
    %v2367 = vld [vmem:[%s2364 + $0x10] sm:$0xff]
    %v2368 = vld [vmem:[%s2364 + $0x18] sm:$0xff]
    %v2369 = vld [vmem:[%s2364 + $0x20] sm:$0xff]
    %v2370 = vld [vmem:[%s2364 + $0x28] sm:$0xff]
    %v2371 = vld [vmem:[%s2364 + $0x30] sm:$0xff]
    %v2372 = vld [vmem:[%s2364 + $0x38] sm:$0xff]
    %v2373 = vld [vmem:[%s2364 + $0x40] sm:$0xff]
    %v2374 = vld [vmem:[%s2364 + $0x48] sm:$0xff]
    %v2375 = vld [vmem:[%s2364 + $0x50] sm:$0xff]
    %v2376 = vld [vmem:[%s2364 + $0x58] sm:$0xff]
    %v2377 = vld [vmem:[%s2364 + $0x60] sm:$0xff]
    %v2378 = vld [vmem:[%s2364 + $0x68] sm:$0xff]
    %v2379 = vld [vmem:[%s2364 + $0x70] sm:$0xff]
    %v2380 = vld [vmem:[%s2364 + $0x78] sm:$0xff]
    %s2381 = scalar_lea.vmem %s5, 4
    %v2382 = vld [vmem:[%s2381] sm:$0x1]
    %v2383 = vld [vmem:[%s2381 + $0x1] sm:$0x1]
    %v2384 = vld [vmem:[%s2381 + $0x2] sm:$0x1]
    %v2385 = vld [vmem:[%s2381 + $0x3] sm:$0x1]
    %v2390 = vlaneseq
    %v2391 = vshrl.u32 %v2390, 7
    %v2392 = vsub.s32 0, %v2391
    %v2393 = vrot.slane %v2382, %v2392
    %v2394 = vlaneseq
    %v2395 = vshrl.u32 %v2394, 7
    %v2396 = vsub.s32 0, %v2395
    %v2397 = vrot.slane %v2383, %v2396
    %v2398 = vlaneseq
    %v2399 = vshrl.u32 %v2398, 7
    %v2400 = vsub.s32 0, %v2399
    %v2401 = vrot.slane %v2384, %v2400
    %v2402 = vlaneseq
    %v2403 = vshrl.u32 %v2402, 7
    %v2404 = vsub.s32 0, %v2403
    %v2405 = vrot.slane %v2385, %v2404
    %v2411 = vsel %vm82, %v2362, 0
    %2413 = vmatprep.subr.mxu0 0.0
    %2414 = vmatpush1.msra.mxu0 %v2365
    %2415 = vmatprep.subr.mxu0 0.0
    %2416 = vmatpush1.msra.mxu0 %v2366
    %2417 = vmatprep.subr.mxu0 0.0
    %2418 = vmatpush1.msra.mxu0 %v2367
    %2419 = vmatprep.subr.mxu0 0.0
    %2420 = vmatpush1.msra.mxu0 %v2368
    %2421 = vmatprep.subr.mxu0 0.0
    %2422 = vmatpush1.msra.mxu0 0.0
    %2423 = vmatprep.subr.mxu0 0.0
    %2424 = vmatpush1.msra.mxu0 0.0
    %2425 = vmatprep.subr.mxu0 0.0
    %2426 = vmatpush1.msra.mxu0 0.0
    %2427 = vmatprep.subr.mxu0 0.0
    %2428 = vmatpush1.msra.mxu0 0.0
    %2429 = vmatprep.subr.mxu0 0.0
    %2430 = vmatpush1.msra.mxu0 0.0
    %2431 = vmatprep.subr.mxu0 0.0
    %2432 = vmatpush1.msra.mxu0 0.0
    %2433 = vmatprep.subr.mxu0 0.0
    %2434 = vmatpush1.msra.mxu0 0.0
    %2435 = vmatprep.subr.mxu0 0.0
    %2436 = vmatpush1.msra.mxu0 0.0
    %2437 = vmatprep.subr.mxu0 0.0
    %2438 = vmatpush1.msra.mxu0 0.0
    %2439 = vmatprep.subr.mxu0 0.0
    %2440 = vmatpush1.msra.mxu0 0.0
    %2441 = vmatprep.subr.mxu0 0.0
    %2442 = vmatpush1.msra.mxu0 0.0
    %2443 = vmatprep.subr.mxu0 0.0
    %2444 = vmatpush1.msra.mxu0 0.0
    %2445 = vmatprep.subr.mxu0 0.0
    %2446 = vmatpush1.msra.mxu0 0.0
    %2447 = vmatprep.subr.mxu0 0.0
    %2448 = vmatpush1.msra.mxu0 0.0
    %2449 = vmatprep.subr.mxu0 0.0
    %2450 = vmatpush1.msra.mxu0 0.0
    %2451 = vmatprep.subr.mxu0 0.0
    %2452 = vmatpush1.msra.mxu0 0.0
    %2453 = vmatprep.subr.mxu0 0.0
    %2454 = vmatpush1.msra.mxu0 0.0
    %2455 = vmatprep.subr.mxu0 0.0
    %2456 = vmatpush1.msra.mxu0 0.0
    %2457 = vmatprep.subr.mxu0 0.0
    %2458 = vmatpush1.msra.mxu0 0.0
    %2459 = vmatprep.subr.mxu0 0.0
    %2460 = vmatpush1.msra.mxu0 0.0
    %2461 = vmatprep.subr.mxu0 0.0
    %2462 = vmatpush1.msra.mxu0 0.0
    %2463 = vmatprep.subr.mxu0 0.0
    %2464 = vmatpush1.msra.mxu0 0.0
    %2465 = vmatprep.subr.mxu0 0.0
    %2466 = vmatpush1.msra.mxu0 0.0
    %2467 = vmatprep.subr.mxu0 0.0
    %2468 = vmatpush1.msra.mxu0 0.0
    %2469 = vmatprep.subr.mxu0 0.0
    %2470 = vmatpush1.msra.mxu0 0.0
    %2471 = vmatprep.subr.mxu0 0.0
    %2472 = vmatpush1.msra.mxu0 0.0
    %2473 = vmatprep.subr.mxu0 0.0
    %2474 = vmatpush1.msra.mxu0 0.0
    %2475 = vmatprep.subr.mxu0 0.0
    %2476 = vmatpush1.msra.mxu0 0.0
    %2477 = vmatprep.mubr.f32.mxu0 0.0
    %2478 = vmatmul.mubr.f32.gmra.mrb[0].mxu0 %v2411
    %v2479 = vpop.f32.mrb[0].mxu0
    %v2480 = vadd.f32 %v2393, %v2479
    %v2481 = vpop.f32.mrb[0].mxu0
    %2482 = vdwg.mxu0
    %2483 = vmatprep.subr.mxu0 0.0
    %2484 = vmatpush1.msra.mxu0 %v2369
    %2485 = vmatprep.subr.mxu0 0.0
    %2486 = vmatpush1.msra.mxu0 %v2370
    %2487 = vmatprep.subr.mxu0 0.0
    %2488 = vmatpush1.msra.mxu0 %v2371
    %2489 = vmatprep.subr.mxu0 0.0
    %2490 = vmatpush1.msra.mxu0 %v2372
    %2491 = vmatprep.subr.mxu0 0.0
    %2492 = vmatpush1.msra.mxu0 0.0
    %2493 = vmatprep.subr.mxu0 0.0
    %2494 = vmatpush1.msra.mxu0 0.0
    %2495 = vmatprep.subr.mxu0 0.0
    %2496 = vmatpush1.msra.mxu0 0.0
    %2497 = vmatprep.subr.mxu0 0.0
    %2498 = vmatpush1.msra.mxu0 0.0
    %2499 = vmatprep.subr.mxu0 0.0
    %2500 = vmatpush1.msra.mxu0 0.0
    %2501 = vmatprep.subr.mxu0 0.0
    %2502 = vmatpush1.msra.mxu0 0.0
    %2503 = vmatprep.subr.mxu0 0.0
    %2504 = vmatpush1.msra.mxu0 0.0
    %2505 = vmatprep.subr.mxu0 0.0
    %2506 = vmatpush1.msra.mxu0 0.0
    %2507 = vmatprep.subr.mxu0 0.0
    %2508 = vmatpush1.msra.mxu0 0.0
    %2509 = vmatprep.subr.mxu0 0.0
    %2510 = vmatpush1.msra.mxu0 0.0
    %2511 = vmatprep.subr.mxu0 0.0
    %2512 = vmatpush1.msra.mxu0 0.0
    %2513 = vmatprep.subr.mxu0 0.0
    %2514 = vmatpush1.msra.mxu0 0.0
    %2515 = vmatprep.subr.mxu0 0.0
    %2516 = vmatpush1.msra.mxu0 0.0
    %2517 = vmatprep.subr.mxu0 0.0
    %2518 = vmatpush1.msra.mxu0 0.0
    %2519 = vmatprep.subr.mxu0 0.0
    %2520 = vmatpush1.msra.mxu0 0.0
    %2521 = vmatprep.subr.mxu0 0.0
    %2522 = vmatpush1.msra.mxu0 0.0
    %2523 = vmatprep.subr.mxu0 0.0
    %2524 = vmatpush1.msra.mxu0 0.0
    %2525 = vmatprep.subr.mxu0 0.0
    %2526 = vmatpush1.msra.mxu0 0.0
    %2527 = vmatprep.subr.mxu0 0.0
    %2528 = vmatpush1.msra.mxu0 0.0
    %2529 = vmatprep.subr.mxu0 0.0
    %2530 = vmatpush1.msra.mxu0 0.0
    %2531 = vmatprep.subr.mxu0 0.0
    %2532 = vmatpush1.msra.mxu0 0.0
    %2533 = vmatprep.subr.mxu0 0.0
    %2534 = vmatpush1.msra.mxu0 0.0
    %2535 = vmatprep.subr.mxu0 0.0
    %2536 = vmatpush1.msra.mxu0 0.0
    %2537 = vmatprep.subr.mxu0 0.0
    %2538 = vmatpush1.msra.mxu0 0.0
    %2539 = vmatprep.subr.mxu0 0.0
    %2540 = vmatpush1.msra.mxu0 0.0
    %2541 = vmatprep.subr.mxu0 0.0
    %2542 = vmatpush1.msra.mxu0 0.0
    %2543 = vmatprep.subr.mxu0 0.0
    %2544 = vmatpush1.msra.mxu0 0.0
    %2545 = vmatprep.subr.mxu0 0.0
    %2546 = vmatpush1.msra.mxu0 0.0
    %2547 = vmatprep.mubr.f32.mxu0 0.0
    %2548 = vmatmul.mubr.f32.gmra.mrb[0].mxu0 %v2411
    %v2549 = vpop.f32.mrb[0].mxu0
    %v2550 = vadd.f32 %v2397, %v2549
    %v2551 = vpop.f32.mrb[0].mxu0
    %2552 = vdwg.mxu0
    %v2554 = vsel %vm82, %v2363, 0
    %2556 = vmatprep.subr.mxu0 0.0
    %2557 = vmatpush1.msra.mxu0 %v2373
    %2558 = vmatprep.subr.mxu0 0.0
    %2559 = vmatpush1.msra.mxu0 %v2374
    %2560 = vmatprep.subr.mxu0 0.0
    %2561 = vmatpush1.msra.mxu0 %v2375
    %2562 = vmatprep.subr.mxu0 0.0
    %2563 = vmatpush1.msra.mxu0 %v2376
    %2564 = vmatprep.subr.mxu0 0.0
    %2565 = vmatpush1.msra.mxu0 0.0
    %2566 = vmatprep.subr.mxu0 0.0
    %2567 = vmatpush1.msra.mxu0 0.0
    %2568 = vmatprep.subr.mxu0 0.0
    %2569 = vmatpush1.msra.mxu0 0.0
    %2570 = vmatprep.subr.mxu0 0.0
    %2571 = vmatpush1.msra.mxu0 0.0
    %2572 = vmatprep.subr.mxu0 0.0
    %2573 = vmatpush1.msra.mxu0 0.0
    %2574 = vmatprep.subr.mxu0 0.0
    %2575 = vmatpush1.msra.mxu0 0.0
    %2576 = vmatprep.subr.mxu0 0.0
    %2577 = vmatpush1.msra.mxu0 0.0
    %2578 = vmatprep.subr.mxu0 0.0
    %2579 = vmatpush1.msra.mxu0 0.0
    %2580 = vmatprep.subr.mxu0 0.0
    %2581 = vmatpush1.msra.mxu0 0.0
    %2582 = vmatprep.subr.mxu0 0.0
    %2583 = vmatpush1.msra.mxu0 0.0
    %2584 = vmatprep.subr.mxu0 0.0
    %2585 = vmatpush1.msra.mxu0 0.0
    %2586 = vmatprep.subr.mxu0 0.0
    %2587 = vmatpush1.msra.mxu0 0.0
    %2588 = vmatprep.subr.mxu0 0.0
    %2589 = vmatpush1.msra.mxu0 0.0
    %2590 = vmatprep.subr.mxu0 0.0
    %2591 = vmatpush1.msra.mxu0 0.0
    %2592 = vmatprep.subr.mxu0 0.0
    %2593 = vmatpush1.msra.mxu0 0.0
    %2594 = vmatprep.subr.mxu0 0.0
    %2595 = vmatpush1.msra.mxu0 0.0
    %2596 = vmatprep.subr.mxu0 0.0
    %2597 = vmatpush1.msra.mxu0 0.0
    %2598 = vmatprep.subr.mxu0 0.0
    %2599 = vmatpush1.msra.mxu0 0.0
    %2600 = vmatprep.subr.mxu0 0.0
    %2601 = vmatpush1.msra.mxu0 0.0
    %2602 = vmatprep.subr.mxu0 0.0
    %2603 = vmatpush1.msra.mxu0 0.0
    %2604 = vmatprep.subr.mxu0 0.0
    %2605 = vmatpush1.msra.mxu0 0.0
    %2606 = vmatprep.subr.mxu0 0.0
    %2607 = vmatpush1.msra.mxu0 0.0
    %2608 = vmatprep.subr.mxu0 0.0
    %2609 = vmatpush1.msra.mxu0 0.0
    %2610 = vmatprep.subr.mxu0 0.0
    %2611 = vmatpush1.msra.mxu0 0.0
    %2612 = vmatprep.subr.mxu0 0.0
    %2613 = vmatpush1.msra.mxu0 0.0
    %2614 = vmatprep.subr.mxu0 0.0
    %2615 = vmatpush1.msra.mxu0 0.0
    %2616 = vmatprep.subr.mxu0 0.0
    %2617 = vmatpush1.msra.mxu0 0.0
    %2618 = vmatprep.subr.mxu0 0.0
    %2619 = vmatpush1.msra.mxu0 0.0
    %2620 = vmatprep.mubr.f32.mxu0 0.0
    %2621 = vmatmul.mubr.f32.gmra.mrb[0].mxu0 %v2554
    %v2622 = vpop.f32.mrb[0].mxu0
    %v2623 = vadd.f32 %v2401, %v2622
    %v2624 = vpop.f32.mrb[0].mxu0
    %2625 = vdwg.mxu0
    %2626 = vmatprep.subr.mxu0 0.0
    %2627 = vmatpush1.msra.mxu0 %v2377
    %2628 = vmatprep.subr.mxu0 0.0
    %2629 = vmatpush1.msra.mxu0 %v2378
    %2630 = vmatprep.subr.mxu0 0.0
    %2631 = vmatpush1.msra.mxu0 %v2379
    %2632 = vmatprep.subr.mxu0 0.0
    %2633 = vmatpush1.msra.mxu0 %v2380
    %2634 = vmatprep.subr.mxu0 0.0
    %2635 = vmatpush1.msra.mxu0 0.0
    %2636 = vmatprep.subr.mxu0 0.0
    %2637 = vmatpush1.msra.mxu0 0.0
    %2638 = vmatprep.subr.mxu0 0.0
    %2639 = vmatpush1.msra.mxu0 0.0
    %2640 = vmatprep.subr.mxu0 0.0
    %2641 = vmatpush1.msra.mxu0 0.0
    %2642 = vmatprep.subr.mxu0 0.0
    %2643 = vmatpush1.msra.mxu0 0.0
    %2644 = vmatprep.subr.mxu0 0.0
    %2645 = vmatpush1.msra.mxu0 0.0
    %2646 = vmatprep.subr.mxu0 0.0
    %2647 = vmatpush1.msra.mxu0 0.0
    %2648 = vmatprep.subr.mxu0 0.0
    %2649 = vmatpush1.msra.mxu0 0.0
    %2650 = vmatprep.subr.mxu0 0.0
    %2651 = vmatpush1.msra.mxu0 0.0
    %2652 = vmatprep.subr.mxu0 0.0
    %2653 = vmatpush1.msra.mxu0 0.0
    %2654 = vmatprep.subr.mxu0 0.0
    %2655 = vmatpush1.msra.mxu0 0.0
    %2656 = vmatprep.subr.mxu0 0.0
    %2657 = vmatpush1.msra.mxu0 0.0
    %2658 = vmatprep.subr.mxu0 0.0
    %2659 = vmatpush1.msra.mxu0 0.0
    %2660 = vmatprep.subr.mxu0 0.0
    %2661 = vmatpush1.msra.mxu0 0.0
    %2662 = vmatprep.subr.mxu0 0.0
    %2663 = vmatpush1.msra.mxu0 0.0
    %2664 = vmatprep.subr.mxu0 0.0
    %2665 = vmatpush1.msra.mxu0 0.0
    %2666 = vmatprep.subr.mxu0 0.0
    %2667 = vmatpush1.msra.mxu0 0.0
    %2668 = vmatprep.subr.mxu0 0.0
    %2669 = vmatpush1.msra.mxu0 0.0
    %2670 = vmatprep.subr.mxu0 0.0
    %2671 = vmatpush1.msra.mxu0 0.0
    %2672 = vmatprep.subr.mxu0 0.0
    %2673 = vmatpush1.msra.mxu0 0.0
    %2674 = vmatprep.subr.mxu0 0.0
    %2675 = vmatpush1.msra.mxu0 0.0
    %2676 = vmatprep.subr.mxu0 0.0
    %2677 = vmatpush1.msra.mxu0 0.0
    %2678 = vmatprep.subr.mxu0 0.0
    %2679 = vmatpush1.msra.mxu0 0.0
    %2680 = vmatprep.subr.mxu0 0.0
    %2681 = vmatpush1.msra.mxu0 0.0
    %2682 = vmatprep.subr.mxu0 0.0
    %2683 = vmatpush1.msra.mxu0 0.0
    %2684 = vmatprep.subr.mxu0 0.0
    %2685 = vmatpush1.msra.mxu0 0.0
    %2686 = vmatprep.subr.mxu0 0.0
    %2687 = vmatpush1.msra.mxu0 0.0
    %2688 = vmatprep.subr.mxu0 0.0
    %2689 = vmatpush1.msra.mxu0 0.0
    %2690 = vmatprep.mubr.f32.mxu0 0.0
    %2691 = vmatmul.mubr.f32.gmra.mrb[0].mxu0 %v2554
    %v2692 = vpop.f32.mrb[0].mxu0
    %v2693 = vadd.f32 %v2405, %v2692
    %v2694 = vpop.f32.mrb[0].mxu0
    %2695 = vdwg.mxu0
    %s2696 = scalar_lea.vmem %s6, 128
    %v2697 = vld [vmem:[%s2696] sm:$0xff]
    %v2698 = vld [vmem:[%s2696 + $0x8] sm:$0xff]
    %v2699 = vld [vmem:[%s2696 + $0x10] sm:$0xff]
    %v2700 = vld [vmem:[%s2696 + $0x18] sm:$0xff]
    %v2701 = vld [vmem:[%s2696 + $0x20] sm:$0xff]
    %v2702 = vld [vmem:[%s2696 + $0x28] sm:$0xff]
    %v2703 = vld [vmem:[%s2696 + $0x30] sm:$0xff]
    %v2704 = vld [vmem:[%s2696 + $0x38] sm:$0xff]
    %v2705 = vld [vmem:[%s2696 + $0x40] sm:$0xff]
    %v2706 = vld [vmem:[%s2696 + $0x48] sm:$0xff]
    %v2707 = vld [vmem:[%s2696 + $0x50] sm:$0xff]
    %v2708 = vld [vmem:[%s2696 + $0x58] sm:$0xff]
    %v2709 = vld [vmem:[%s2696 + $0x60] sm:$0xff]
    %v2710 = vld [vmem:[%s2696 + $0x68] sm:$0xff]
    %v2711 = vld [vmem:[%s2696 + $0x70] sm:$0xff]
    %v2712 = vld [vmem:[%s2696 + $0x78] sm:$0xff]
    %s2713 = scalar_lea.vmem %s7, 4
    %v2714 = vld [vmem:[%s2713] sm:$0x1]
    %v2715 = vld [vmem:[%s2713 + $0x1] sm:$0x1]
    %v2716 = vld [vmem:[%s2713 + $0x2] sm:$0x1]
    %v2717 = vld [vmem:[%s2713 + $0x3] sm:$0x1]
    %v2722 = vlaneseq
    %v2723 = vshrl.u32 %v2722, 7
    %v2724 = vsub.s32 0, %v2723
    %v2725 = vrot.slane %v2714, %v2724
    %v2726 = vlaneseq
    %v2727 = vshrl.u32 %v2726, 7
    %v2728 = vsub.s32 0, %v2727
    %v2729 = vrot.slane %v2715, %v2728
    %v2730 = vlaneseq
    %v2731 = vshrl.u32 %v2730, 7
    %v2732 = vsub.s32 0, %v2731
    %v2733 = vrot.slane %v2716, %v2732
    %v2734 = vlaneseq
    %v2735 = vshrl.u32 %v2734, 7
    %v2736 = vsub.s32 0, %v2735
    %v2737 = vrot.slane %v2717, %v2736
    %2742 = vmatprep.subr.mxu0 0.0
    %2743 = vmatpush1.msra.mxu0 %v2697
    %2744 = vmatprep.subr.mxu0 0.0
    %2745 = vmatpush1.msra.mxu0 %v2698
    %2746 = vmatprep.subr.mxu0 0.0
    %2747 = vmatpush1.msra.mxu0 %v2699
    %2748 = vmatprep.subr.mxu0 0.0
    %2749 = vmatpush1.msra.mxu0 %v2700
    %2750 = vmatprep.subr.mxu0 0.0
    %2751 = vmatpush1.msra.mxu0 0.0
    %2752 = vmatprep.subr.mxu0 0.0
    %2753 = vmatpush1.msra.mxu0 0.0
    %2754 = vmatprep.subr.mxu0 0.0
    %2755 = vmatpush1.msra.mxu0 0.0
    %2756 = vmatprep.subr.mxu0 0.0
    %2757 = vmatpush1.msra.mxu0 0.0
    %2758 = vmatprep.subr.mxu0 0.0
    %2759 = vmatpush1.msra.mxu0 0.0
    %2760 = vmatprep.subr.mxu0 0.0
    %2761 = vmatpush1.msra.mxu0 0.0
    %2762 = vmatprep.subr.mxu0 0.0
    %2763 = vmatpush1.msra.mxu0 0.0
    %2764 = vmatprep.subr.mxu0 0.0
    %2765 = vmatpush1.msra.mxu0 0.0
    %2766 = vmatprep.subr.mxu0 0.0
    %2767 = vmatpush1.msra.mxu0 0.0
    %2768 = vmatprep.subr.mxu0 0.0
    %2769 = vmatpush1.msra.mxu0 0.0
    %2770 = vmatprep.subr.mxu0 0.0
    %2771 = vmatpush1.msra.mxu0 0.0
    %2772 = vmatprep.subr.mxu0 0.0
    %2773 = vmatpush1.msra.mxu0 0.0
    %2774 = vmatprep.subr.mxu0 0.0
    %2775 = vmatpush1.msra.mxu0 0.0
    %2776 = vmatprep.subr.mxu0 0.0
    %2777 = vmatpush1.msra.mxu0 0.0
    %2778 = vmatprep.subr.mxu0 0.0
    %2779 = vmatpush1.msra.mxu0 0.0
    %2780 = vmatprep.subr.mxu0 0.0
    %2781 = vmatpush1.msra.mxu0 0.0
    %2782 = vmatprep.subr.mxu0 0.0
    %2783 = vmatpush1.msra.mxu0 0.0
    %2784 = vmatprep.subr.mxu0 0.0
    %2785 = vmatpush1.msra.mxu0 0.0
    %2786 = vmatprep.subr.mxu0 0.0
    %2787 = vmatpush1.msra.mxu0 0.0
    %2788 = vmatprep.subr.mxu0 0.0
    %2789 = vmatpush1.msra.mxu0 0.0
    %2790 = vmatprep.subr.mxu0 0.0
    %2791 = vmatpush1.msra.mxu0 0.0
    %2792 = vmatprep.subr.mxu0 0.0
    %2793 = vmatpush1.msra.mxu0 0.0
    %2794 = vmatprep.subr.mxu0 0.0
    %2795 = vmatpush1.msra.mxu0 0.0
    %2796 = vmatprep.subr.mxu0 0.0
    %2797 = vmatpush1.msra.mxu0 0.0
    %2798 = vmatprep.subr.mxu0 0.0
    %2799 = vmatpush1.msra.mxu0 0.0
    %2800 = vmatprep.subr.mxu0 0.0
    %2801 = vmatpush1.msra.mxu0 0.0
    %2802 = vmatprep.subr.mxu0 0.0
    %2803 = vmatpush1.msra.mxu0 0.0
    %2804 = vmatprep.subr.mxu0 0.0
    %2805 = vmatpush1.msra.mxu0 0.0
    %2806 = vmatprep.mubr.f32.mxu0 0.0
    %2807 = vmatmul.mubr.f32.gmra.mrb[0].mxu0 %v2411
    %v2808 = vpop.f32.mrb[0].mxu0
    %v2809 = vadd.f32 %v2725, %v2808
    %v2810 = vpop.f32.mrb[0].mxu0
    %2811 = vdwg.mxu0
    %2812 = vmatprep.subr.mxu0 0.0
    %2813 = vmatpush1.msra.mxu0 %v2701
    %2814 = vmatprep.subr.mxu0 0.0
    %2815 = vmatpush1.msra.mxu0 %v2702
    %2816 = vmatprep.subr.mxu0 0.0
    %2817 = vmatpush1.msra.mxu0 %v2703
    %2818 = vmatprep.subr.mxu0 0.0
    %2819 = vmatpush1.msra.mxu0 %v2704
    %2820 = vmatprep.subr.mxu0 0.0
    %2821 = vmatpush1.msra.mxu0 0.0
    %2822 = vmatprep.subr.mxu0 0.0
    %2823 = vmatpush1.msra.mxu0 0.0
    %2824 = vmatprep.subr.mxu0 0.0
    %2825 = vmatpush1.msra.mxu0 0.0
    %2826 = vmatprep.subr.mxu0 0.0
    %2827 = vmatpush1.msra.mxu0 0.0
    %2828 = vmatprep.subr.mxu0 0.0
    %2829 = vmatpush1.msra.mxu0 0.0
    %2830 = vmatprep.subr.mxu0 0.0
    %2831 = vmatpush1.msra.mxu0 0.0
    %2832 = vmatprep.subr.mxu0 0.0
    %2833 = vmatpush1.msra.mxu0 0.0
    %2834 = vmatprep.subr.mxu0 0.0
    %2835 = vmatpush1.msra.mxu0 0.0
    %2836 = vmatprep.subr.mxu0 0.0
    %2837 = vmatpush1.msra.mxu0 0.0
    %2838 = vmatprep.subr.mxu0 0.0
    %2839 = vmatpush1.msra.mxu0 0.0
    %2840 = vmatprep.subr.mxu0 0.0
    %2841 = vmatpush1.msra.mxu0 0.0
    %2842 = vmatprep.subr.mxu0 0.0
    %2843 = vmatpush1.msra.mxu0 0.0
    %2844 = vmatprep.subr.mxu0 0.0
    %2845 = vmatpush1.msra.mxu0 0.0
    %2846 = vmatprep.subr.mxu0 0.0
    %2847 = vmatpush1.msra.mxu0 0.0
    %2848 = vmatprep.subr.mxu0 0.0
    %2849 = vmatpush1.msra.mxu0 0.0
    %2850 = vmatprep.subr.mxu0 0.0
    %2851 = vmatpush1.msra.mxu0 0.0
    %2852 = vmatprep.subr.mxu0 0.0
    %2853 = vmatpush1.msra.mxu0 0.0
    %2854 = vmatprep.subr.mxu0 0.0
    %2855 = vmatpush1.msra.mxu0 0.0
    %2856 = vmatprep.subr.mxu0 0.0
    %2857 = vmatpush1.msra.mxu0 0.0
    %2858 = vmatprep.subr.mxu0 0.0
    %2859 = vmatpush1.msra.mxu0 0.0
    %2860 = vmatprep.subr.mxu0 0.0
    %2861 = vmatpush1.msra.mxu0 0.0
    %2862 = vmatprep.subr.mxu0 0.0
    %2863 = vmatpush1.msra.mxu0 0.0
    %2864 = vmatprep.subr.mxu0 0.0
    %2865 = vmatpush1.msra.mxu0 0.0
    %2866 = vmatprep.subr.mxu0 0.0
    %2867 = vmatpush1.msra.mxu0 0.0
    %2868 = vmatprep.subr.mxu0 0.0
    %2869 = vmatpush1.msra.mxu0 0.0
    %2870 = vmatprep.subr.mxu0 0.0
    %2871 = vmatpush1.msra.mxu0 0.0
    %2872 = vmatprep.subr.mxu0 0.0
    %2873 = vmatpush1.msra.mxu0 0.0
    %2874 = vmatprep.subr.mxu0 0.0
    %2875 = vmatpush1.msra.mxu0 0.0
    %2876 = vmatprep.mubr.f32.mxu0 0.0
    %2877 = vmatmul.mubr.f32.gmra.mrb[0].mxu0 %v2411
    %v2878 = vpop.f32.mrb[0].mxu0
    %v2879 = vadd.f32 %v2729, %v2878
    %v2880 = vpop.f32.mrb[0].mxu0
    %2881 = vdwg.mxu0
    %2882 = vmatprep.subr.mxu0 0.0
    %2883 = vmatpush1.msra.mxu0 %v2705
    %2884 = vmatprep.subr.mxu0 0.0
    %2885 = vmatpush1.msra.mxu0 %v2706
    %2886 = vmatprep.subr.mxu0 0.0
    %2887 = vmatpush1.msra.mxu0 %v2707
    %2888 = vmatprep.subr.mxu0 0.0
    %2889 = vmatpush1.msra.mxu0 %v2708
    %2890 = vmatprep.subr.mxu0 0.0
    %2891 = vmatpush1.msra.mxu0 0.0
    %2892 = vmatprep.subr.mxu0 0.0
    %2893 = vmatpush1.msra.mxu0 0.0
    %2894 = vmatprep.subr.mxu0 0.0
    %2895 = vmatpush1.msra.mxu0 0.0
    %2896 = vmatprep.subr.mxu0 0.0
    %2897 = vmatpush1.msra.mxu0 0.0
    %2898 = vmatprep.subr.mxu0 0.0
    %2899 = vmatpush1.msra.mxu0 0.0
    %2900 = vmatprep.subr.mxu0 0.0
    %2901 = vmatpush1.msra.mxu0 0.0
    %2902 = vmatprep.subr.mxu0 0.0
    %2903 = vmatpush1.msra.mxu0 0.0
    %2904 = vmatprep.subr.mxu0 0.0
    %2905 = vmatpush1.msra.mxu0 0.0
    %2906 = vmatprep.subr.mxu0 0.0
    %2907 = vmatpush1.msra.mxu0 0.0
    %2908 = vmatprep.subr.mxu0 0.0
    %2909 = vmatpush1.msra.mxu0 0.0
    %2910 = vmatprep.subr.mxu0 0.0
    %2911 = vmatpush1.msra.mxu0 0.0
    %2912 = vmatprep.subr.mxu0 0.0
    %2913 = vmatpush1.msra.mxu0 0.0
    %2914 = vmatprep.subr.mxu0 0.0
    %2915 = vmatpush1.msra.mxu0 0.0
    %2916 = vmatprep.subr.mxu0 0.0
    %2917 = vmatpush1.msra.mxu0 0.0
    %2918 = vmatprep.subr.mxu0 0.0
    %2919 = vmatpush1.msra.mxu0 0.0
    %2920 = vmatprep.subr.mxu0 0.0
    %2921 = vmatpush1.msra.mxu0 0.0
    %2922 = vmatprep.subr.mxu0 0.0
    %2923 = vmatpush1.msra.mxu0 0.0
    %2924 = vmatprep.subr.mxu0 0.0
    %2925 = vmatpush1.msra.mxu0 0.0
    %2926 = vmatprep.subr.mxu0 0.0
    %2927 = vmatpush1.msra.mxu0 0.0
    %2928 = vmatprep.subr.mxu0 0.0
    %2929 = vmatpush1.msra.mxu0 0.0
    %2930 = vmatprep.subr.mxu0 0.0
    %2931 = vmatpush1.msra.mxu0 0.0
    %2932 = vmatprep.subr.mxu0 0.0
    %2933 = vmatpush1.msra.mxu0 0.0
    %2934 = vmatprep.subr.mxu0 0.0
    %2935 = vmatpush1.msra.mxu0 0.0
    %2936 = vmatprep.subr.mxu0 0.0
    %2937 = vmatpush1.msra.mxu0 0.0
    %2938 = vmatprep.subr.mxu0 0.0
    %2939 = vmatpush1.msra.mxu0 0.0
    %2940 = vmatprep.subr.mxu0 0.0
    %2941 = vmatpush1.msra.mxu0 0.0
    %2942 = vmatprep.subr.mxu0 0.0
    %2943 = vmatpush1.msra.mxu0 0.0
    %2944 = vmatprep.subr.mxu0 0.0
    %2945 = vmatpush1.msra.mxu0 0.0
    %2946 = vmatprep.mubr.f32.mxu0 0.0
    %2947 = vmatmul.mubr.f32.gmra.mrb[0].mxu0 %v2554
    %v2948 = vpop.f32.mrb[0].mxu0
    %v2949 = vadd.f32 %v2733, %v2948
    %v2950 = vpop.f32.mrb[0].mxu0
    %2951 = vdwg.mxu0
    %2952 = vmatprep.subr.mxu0 0.0
    %2953 = vmatpush1.msra.mxu0 %v2709
    %2954 = vmatprep.subr.mxu0 0.0
    %2955 = vmatpush1.msra.mxu0 %v2710
    %2956 = vmatprep.subr.mxu0 0.0
    %2957 = vmatpush1.msra.mxu0 %v2711
    %2958 = vmatprep.subr.mxu0 0.0
    %2959 = vmatpush1.msra.mxu0 %v2712
    %2960 = vmatprep.subr.mxu0 0.0
    %2961 = vmatpush1.msra.mxu0 0.0
    %2962 = vmatprep.subr.mxu0 0.0
    %2963 = vmatpush1.msra.mxu0 0.0
    %2964 = vmatprep.subr.mxu0 0.0
    %2965 = vmatpush1.msra.mxu0 0.0
    %2966 = vmatprep.subr.mxu0 0.0
    %2967 = vmatpush1.msra.mxu0 0.0
    %2968 = vmatprep.subr.mxu0 0.0
    %2969 = vmatpush1.msra.mxu0 0.0
    %2970 = vmatprep.subr.mxu0 0.0
    %2971 = vmatpush1.msra.mxu0 0.0
    %2972 = vmatprep.subr.mxu0 0.0
    %2973 = vmatpush1.msra.mxu0 0.0
    %2974 = vmatprep.subr.mxu0 0.0
    %2975 = vmatpush1.msra.mxu0 0.0
    %2976 = vmatprep.subr.mxu0 0.0
    %2977 = vmatpush1.msra.mxu0 0.0
    %2978 = vmatprep.subr.mxu0 0.0
    %2979 = vmatpush1.msra.mxu0 0.0
    %2980 = vmatprep.subr.mxu0 0.0
    %2981 = vmatpush1.msra.mxu0 0.0
    %2982 = vmatprep.subr.mxu0 0.0
    %2983 = vmatpush1.msra.mxu0 0.0
    %2984 = vmatprep.subr.mxu0 0.0
    %2985 = vmatpush1.msra.mxu0 0.0
    %2986 = vmatprep.subr.mxu0 0.0
    %2987 = vmatpush1.msra.mxu0 0.0
    %2988 = vmatprep.subr.mxu0 0.0
    %2989 = vmatpush1.msra.mxu0 0.0
    %2990 = vmatprep.subr.mxu0 0.0
    %2991 = vmatpush1.msra.mxu0 0.0
    %2992 = vmatprep.subr.mxu0 0.0
    %2993 = vmatpush1.msra.mxu0 0.0
    %2994 = vmatprep.subr.mxu0 0.0
    %2995 = vmatpush1.msra.mxu0 0.0
    %2996 = vmatprep.subr.mxu0 0.0
    %2997 = vmatpush1.msra.mxu0 0.0
    %2998 = vmatprep.subr.mxu0 0.0
    %2999 = vmatpush1.msra.mxu0 0.0
    %3000 = vmatprep.subr.mxu0 0.0
    %3001 = vmatpush1.msra.mxu0 0.0
    %3002 = vmatprep.subr.mxu0 0.0
    %3003 = vmatpush1.msra.mxu0 0.0
    %3004 = vmatprep.subr.mxu0 0.0
    %3005 = vmatpush1.msra.mxu0 0.0
    %3006 = vmatprep.subr.mxu0 0.0
    %3007 = vmatpush1.msra.mxu0 0.0
    %3008 = vmatprep.subr.mxu0 0.0
    %3009 = vmatpush1.msra.mxu0 0.0
    %3010 = vmatprep.subr.mxu0 0.0
    %3011 = vmatpush1.msra.mxu0 0.0
    %3012 = vmatprep.subr.mxu0 0.0
    %3013 = vmatpush1.msra.mxu0 0.0
    %3014 = vmatprep.subr.mxu0 0.0
    %3015 = vmatpush1.msra.mxu0 0.0
    %3016 = vmatprep.mubr.f32.mxu0 0.0
    %3017 = vmatmul.mubr.f32.gmra.mrb[0].mxu0 %v2554
    %v3018 = vpop.f32.mrb[0].mxu0
    %v3019 = vadd.f32 %v2737, %v3018
    %v3020 = vpop.f32.mrb[0].mxu0
    %3021 = vdwg.mxu0
    %s3022 = scalar_lea.vmem %s8, 128
    %v3023 = vld [vmem:[%s3022] sm:$0xff]
    %v3024 = vld [vmem:[%s3022 + $0x8] sm:$0xff]
    %v3025 = vld [vmem:[%s3022 + $0x10] sm:$0xff]
    %v3026 = vld [vmem:[%s3022 + $0x18] sm:$0xff]
    %v3027 = vld [vmem:[%s3022 + $0x20] sm:$0xff]
    %v3028 = vld [vmem:[%s3022 + $0x28] sm:$0xff]
    %v3029 = vld [vmem:[%s3022 + $0x30] sm:$0xff]
    %v3030 = vld [vmem:[%s3022 + $0x38] sm:$0xff]
    %v3031 = vld [vmem:[%s3022 + $0x40] sm:$0xff]
    %v3032 = vld [vmem:[%s3022 + $0x48] sm:$0xff]
    %v3033 = vld [vmem:[%s3022 + $0x50] sm:$0xff]
    %v3034 = vld [vmem:[%s3022 + $0x58] sm:$0xff]
    %v3035 = vld [vmem:[%s3022 + $0x60] sm:$0xff]
    %v3036 = vld [vmem:[%s3022 + $0x68] sm:$0xff]
    %v3037 = vld [vmem:[%s3022 + $0x70] sm:$0xff]
    %v3038 = vld [vmem:[%s3022 + $0x78] sm:$0xff]
    %s3039 = scalar_lea.vmem %s9, 4
    %v3040 = vld [vmem:[%s3039] sm:$0x1]
    %v3041 = vld [vmem:[%s3039 + $0x1] sm:$0x1]
    %v3042 = vld [vmem:[%s3039 + $0x2] sm:$0x1]
    %v3043 = vld [vmem:[%s3039 + $0x3] sm:$0x1]
    %v3048 = vlaneseq
    %v3049 = vshrl.u32 %v3048, 7
    %v3050 = vsub.s32 0, %v3049
    %v3051 = vrot.slane %v3040, %v3050
    %v3052 = vlaneseq
    %v3053 = vshrl.u32 %v3052, 7
    %v3054 = vsub.s32 0, %v3053
    %v3055 = vrot.slane %v3041, %v3054
    %v3056 = vlaneseq
    %v3057 = vshrl.u32 %v3056, 7
    %v3058 = vsub.s32 0, %v3057
    %v3059 = vrot.slane %v3042, %v3058
    %v3060 = vlaneseq
    %v3061 = vshrl.u32 %v3060, 7
    %v3062 = vsub.s32 0, %v3061
    %v3063 = vrot.slane %v3043, %v3062
    %3068 = vmatprep.subr.mxu0 0.0
    %3069 = vmatpush1.msra.mxu0 %v3023
    %3070 = vmatprep.subr.mxu0 0.0
    %3071 = vmatpush1.msra.mxu0 %v3024
    %3072 = vmatprep.subr.mxu0 0.0
    %3073 = vmatpush1.msra.mxu0 %v3025
    %3074 = vmatprep.subr.mxu0 0.0
    %3075 = vmatpush1.msra.mxu0 %v3026
    %3076 = vmatprep.subr.mxu0 0.0
    %3077 = vmatpush1.msra.mxu0 0.0
    %3078 = vmatprep.subr.mxu0 0.0
    %3079 = vmatpush1.msra.mxu0 0.0
    %3080 = vmatprep.subr.mxu0 0.0
    %3081 = vmatpush1.msra.mxu0 0.0
    %3082 = vmatprep.subr.mxu0 0.0
    %3083 = vmatpush1.msra.mxu0 0.0
    %3084 = vmatprep.subr.mxu0 0.0
    %3085 = vmatpush1.msra.mxu0 0.0
    %3086 = vmatprep.subr.mxu0 0.0
    %3087 = vmatpush1.msra.mxu0 0.0
    %3088 = vmatprep.subr.mxu0 0.0
    %3089 = vmatpush1.msra.mxu0 0.0
    %3090 = vmatprep.subr.mxu0 0.0
    %3091 = vmatpush1.msra.mxu0 0.0
    %3092 = vmatprep.subr.mxu0 0.0
    %3093 = vmatpush1.msra.mxu0 0.0
    %3094 = vmatprep.subr.mxu0 0.0
    %3095 = vmatpush1.msra.mxu0 0.0
    %3096 = vmatprep.subr.mxu0 0.0
    %3097 = vmatpush1.msra.mxu0 0.0
    %3098 = vmatprep.subr.mxu0 0.0
    %3099 = vmatpush1.msra.mxu0 0.0
    %3100 = vmatprep.subr.mxu0 0.0
    %3101 = vmatpush1.msra.mxu0 0.0
    %3102 = vmatprep.subr.mxu0 0.0
    %3103 = vmatpush1.msra.mxu0 0.0
    %3104 = vmatprep.subr.mxu0 0.0
    %3105 = vmatpush1.msra.mxu0 0.0
    %3106 = vmatprep.subr.mxu0 0.0
    %3107 = vmatpush1.msra.mxu0 0.0
    %3108 = vmatprep.subr.mxu0 0.0
    %3109 = vmatpush1.msra.mxu0 0.0
    %3110 = vmatprep.subr.mxu0 0.0
    %3111 = vmatpush1.msra.mxu0 0.0
    %3112 = vmatprep.subr.mxu0 0.0
    %3113 = vmatpush1.msra.mxu0 0.0
    %3114 = vmatprep.subr.mxu0 0.0
    %3115 = vmatpush1.msra.mxu0 0.0
    %3116 = vmatprep.subr.mxu0 0.0
    %3117 = vmatpush1.msra.mxu0 0.0
    %3118 = vmatprep.subr.mxu0 0.0
    %3119 = vmatpush1.msra.mxu0 0.0
    %3120 = vmatprep.subr.mxu0 0.0
    %3121 = vmatpush1.msra.mxu0 0.0
    %3122 = vmatprep.subr.mxu0 0.0
    %3123 = vmatpush1.msra.mxu0 0.0
    %3124 = vmatprep.subr.mxu0 0.0
    %3125 = vmatpush1.msra.mxu0 0.0
    %3126 = vmatprep.subr.mxu0 0.0
    %3127 = vmatpush1.msra.mxu0 0.0
    %3128 = vmatprep.subr.mxu0 0.0
    %3129 = vmatpush1.msra.mxu0 0.0
    %3130 = vmatprep.subr.mxu0 0.0
    %3131 = vmatpush1.msra.mxu0 0.0
    %3132 = vmatprep.mubr.f32.mxu0 0.0
    %3133 = vmatmul.mubr.f32.gmra.mrb[0].mxu0 %v2411
    %v3134 = vpop.f32.mrb[0].mxu0
    %v3135 = vadd.f32 %v3051, %v3134
    %v3136 = vpop.f32.mrb[0].mxu0
    %3137 = vdwg.mxu0
    %3138 = vmatprep.subr.mxu0 0.0
    %3139 = vmatpush1.msra.mxu0 %v3027
    %3140 = vmatprep.subr.mxu0 0.0
    %3141 = vmatpush1.msra.mxu0 %v3028
    %3142 = vmatprep.subr.mxu0 0.0
    %3143 = vmatpush1.msra.mxu0 %v3029
    %3144 = vmatprep.subr.mxu0 0.0
    %3145 = vmatpush1.msra.mxu0 %v3030
    %3146 = vmatprep.subr.mxu0 0.0
    %3147 = vmatpush1.msra.mxu0 0.0
    %3148 = vmatprep.subr.mxu0 0.0
    %3149 = vmatpush1.msra.mxu0 0.0
    %3150 = vmatprep.subr.mxu0 0.0
    %3151 = vmatpush1.msra.mxu0 0.0
    %3152 = vmatprep.subr.mxu0 0.0
    %3153 = vmatpush1.msra.mxu0 0.0
    %3154 = vmatprep.subr.mxu0 0.0
    %3155 = vmatpush1.msra.mxu0 0.0
    %3156 = vmatprep.subr.mxu0 0.0
    %3157 = vmatpush1.msra.mxu0 0.0
    %3158 = vmatprep.subr.mxu0 0.0
    %3159 = vmatpush1.msra.mxu0 0.0
    %3160 = vmatprep.subr.mxu0 0.0
    %3161 = vmatpush1.msra.mxu0 0.0
    %3162 = vmatprep.subr.mxu0 0.0
    %3163 = vmatpush1.msra.mxu0 0.0
    %3164 = vmatprep.subr.mxu0 0.0
    %3165 = vmatpush1.msra.mxu0 0.0
    %3166 = vmatprep.subr.mxu0 0.0
    %3167 = vmatpush1.msra.mxu0 0.0
    %3168 = vmatprep.subr.mxu0 0.0
    %3169 = vmatpush1.msra.mxu0 0.0
    %3170 = vmatprep.subr.mxu0 0.0
    %3171 = vmatpush1.msra.mxu0 0.0
    %3172 = vmatprep.subr.mxu0 0.0
    %3173 = vmatpush1.msra.mxu0 0.0
    %3174 = vmatprep.subr.mxu0 0.0
    %3175 = vmatpush1.msra.mxu0 0.0
    %3176 = vmatprep.subr.mxu0 0.0
    %3177 = vmatpush1.msra.mxu0 0.0
    %3178 = vmatprep.subr.mxu0 0.0
    %3179 = vmatpush1.msra.mxu0 0.0
    %3180 = vmatprep.subr.mxu0 0.0
    %3181 = vmatpush1.msra.mxu0 0.0
    %3182 = vmatprep.subr.mxu0 0.0
    %3183 = vmatpush1.msra.mxu0 0.0
    %3184 = vmatprep.subr.mxu0 0.0
    %3185 = vmatpush1.msra.mxu0 0.0
    %3186 = vmatprep.subr.mxu0 0.0
    %3187 = vmatpush1.msra.mxu0 0.0
    %3188 = vmatprep.subr.mxu0 0.0
    %3189 = vmatpush1.msra.mxu0 0.0
    %3190 = vmatprep.subr.mxu0 0.0
    %3191 = vmatpush1.msra.mxu0 0.0
    %3192 = vmatprep.subr.mxu0 0.0
    %3193 = vmatpush1.msra.mxu0 0.0
    %3194 = vmatprep.subr.mxu0 0.0
    %3195 = vmatpush1.msra.mxu0 0.0
    %3196 = vmatprep.subr.mxu0 0.0
    %3197 = vmatpush1.msra.mxu0 0.0
    %3198 = vmatprep.subr.mxu0 0.0
    %3199 = vmatpush1.msra.mxu0 0.0
    %3200 = vmatprep.subr.mxu0 0.0
    %3201 = vmatpush1.msra.mxu0 0.0
    %3202 = vmatprep.mubr.f32.mxu0 0.0
    %3203 = vmatmul.mubr.f32.gmra.mrb[0].mxu0 %v2411
    %v3204 = vpop.f32.mrb[0].mxu0
    %v3205 = vadd.f32 %v3055, %v3204
    %v3206 = vpop.f32.mrb[0].mxu0
    %3207 = vdwg.mxu0
    %3208 = vmatprep.subr.mxu0 0.0
    %3209 = vmatpush1.msra.mxu0 %v3031
    %3210 = vmatprep.subr.mxu0 0.0
    %3211 = vmatpush1.msra.mxu0 %v3032
    %3212 = vmatprep.subr.mxu0 0.0
    %3213 = vmatpush1.msra.mxu0 %v3033
    %3214 = vmatprep.subr.mxu0 0.0
    %3215 = vmatpush1.msra.mxu0 %v3034
    %3216 = vmatprep.subr.mxu0 0.0
    %3217 = vmatpush1.msra.mxu0 0.0
    %3218 = vmatprep.subr.mxu0 0.0
    %3219 = vmatpush1.msra.mxu0 0.0
    %3220 = vmatprep.subr.mxu0 0.0
    %3221 = vmatpush1.msra.mxu0 0.0
    %3222 = vmatprep.subr.mxu0 0.0
    %3223 = vmatpush1.msra.mxu0 0.0
    %3224 = vmatprep.subr.mxu0 0.0
    %3225 = vmatpush1.msra.mxu0 0.0
    %3226 = vmatprep.subr.mxu0 0.0
    %3227 = vmatpush1.msra.mxu0 0.0
    %3228 = vmatprep.subr.mxu0 0.0
    %3229 = vmatpush1.msra.mxu0 0.0
    %3230 = vmatprep.subr.mxu0 0.0
    %3231 = vmatpush1.msra.mxu0 0.0
    %3232 = vmatprep.subr.mxu0 0.0
    %3233 = vmatpush1.msra.mxu0 0.0
    %3234 = vmatprep.subr.mxu0 0.0
    %3235 = vmatpush1.msra.mxu0 0.0
    %3236 = vmatprep.subr.mxu0 0.0
    %3237 = vmatpush1.msra.mxu0 0.0
    %3238 = vmatprep.subr.mxu0 0.0
    %3239 = vmatpush1.msra.mxu0 0.0
    %3240 = vmatprep.subr.mxu0 0.0
    %3241 = vmatpush1.msra.mxu0 0.0
    %3242 = vmatprep.subr.mxu0 0.0
    %3243 = vmatpush1.msra.mxu0 0.0
    %3244 = vmatprep.subr.mxu0 0.0
    %3245 = vmatpush1.msra.mxu0 0.0
    %3246 = vmatprep.subr.mxu0 0.0
    %3247 = vmatpush1.msra.mxu0 0.0
    %3248 = vmatprep.subr.mxu0 0.0
    %3249 = vmatpush1.msra.mxu0 0.0
    %3250 = vmatprep.subr.mxu0 0.0
    %3251 = vmatpush1.msra.mxu0 0.0
    %3252 = vmatprep.subr.mxu0 0.0
    %3253 = vmatpush1.msra.mxu0 0.0
    %3254 = vmatprep.subr.mxu0 0.0
    %3255 = vmatpush1.msra.mxu0 0.0
    %3256 = vmatprep.subr.mxu0 0.0
    %3257 = vmatpush1.msra.mxu0 0.0
    %3258 = vmatprep.subr.mxu0 0.0
    %3259 = vmatpush1.msra.mxu0 0.0
    %3260 = vmatprep.subr.mxu0 0.0
    %3261 = vmatpush1.msra.mxu0 0.0
    %3262 = vmatprep.subr.mxu0 0.0
    %3263 = vmatpush1.msra.mxu0 0.0
    %3264 = vmatprep.subr.mxu0 0.0
    %3265 = vmatpush1.msra.mxu0 0.0
    %3266 = vmatprep.subr.mxu0 0.0
    %3267 = vmatpush1.msra.mxu0 0.0
    %3268 = vmatprep.subr.mxu0 0.0
    %3269 = vmatpush1.msra.mxu0 0.0
    %3270 = vmatprep.subr.mxu0 0.0
    %3271 = vmatpush1.msra.mxu0 0.0
    %3272 = vmatprep.mubr.f32.mxu0 0.0
    %3273 = vmatmul.mubr.f32.gmra.mrb[0].mxu0 %v2554
    %v3274 = vpop.f32.mrb[0].mxu0
    %v3275 = vadd.f32 %v3059, %v3274
    %v3276 = vpop.f32.mrb[0].mxu0
    %3277 = vdwg.mxu0
    %3278 = vmatprep.subr.mxu0 0.0
    %3279 = vmatpush1.msra.mxu0 %v3035
    %3280 = vmatprep.subr.mxu0 0.0
    %3281 = vmatpush1.msra.mxu0 %v3036
    %3282 = vmatprep.subr.mxu0 0.0
    %3283 = vmatpush1.msra.mxu0 %v3037
    %3284 = vmatprep.subr.mxu0 0.0
    %3285 = vmatpush1.msra.mxu0 %v3038
    %3286 = vmatprep.subr.mxu0 0.0
    %3287 = vmatpush1.msra.mxu0 0.0
    %3288 = vmatprep.subr.mxu0 0.0
    %3289 = vmatpush1.msra.mxu0 0.0
    %3290 = vmatprep.subr.mxu0 0.0
    %3291 = vmatpush1.msra.mxu0 0.0
    %3292 = vmatprep.subr.mxu0 0.0
    %3293 = vmatpush1.msra.mxu0 0.0
    %3294 = vmatprep.subr.mxu0 0.0
    %3295 = vmatpush1.msra.mxu0 0.0
    %3296 = vmatprep.subr.mxu0 0.0
    %3297 = vmatpush1.msra.mxu0 0.0
    %3298 = vmatprep.subr.mxu0 0.0
    %3299 = vmatpush1.msra.mxu0 0.0
    %3300 = vmatprep.subr.mxu0 0.0
    %3301 = vmatpush1.msra.mxu0 0.0
    %3302 = vmatprep.subr.mxu0 0.0
    %3303 = vmatpush1.msra.mxu0 0.0
    %3304 = vmatprep.subr.mxu0 0.0
    %3305 = vmatpush1.msra.mxu0 0.0
    %3306 = vmatprep.subr.mxu0 0.0
    %3307 = vmatpush1.msra.mxu0 0.0
    %3308 = vmatprep.subr.mxu0 0.0
    %3309 = vmatpush1.msra.mxu0 0.0
    %3310 = vmatprep.subr.mxu0 0.0
    %3311 = vmatpush1.msra.mxu0 0.0
    %3312 = vmatprep.subr.mxu0 0.0
    %3313 = vmatpush1.msra.mxu0 0.0
    %3314 = vmatprep.subr.mxu0 0.0
    %3315 = vmatpush1.msra.mxu0 0.0
    %3316 = vmatprep.subr.mxu0 0.0
    %3317 = vmatpush1.msra.mxu0 0.0
    %3318 = vmatprep.subr.mxu0 0.0
    %3319 = vmatpush1.msra.mxu0 0.0
    %3320 = vmatprep.subr.mxu0 0.0
    %3321 = vmatpush1.msra.mxu0 0.0
    %3322 = vmatprep.subr.mxu0 0.0
    %3323 = vmatpush1.msra.mxu0 0.0
    %3324 = vmatprep.subr.mxu0 0.0
    %3325 = vmatpush1.msra.mxu0 0.0
    %3326 = vmatprep.subr.mxu0 0.0
    %3327 = vmatpush1.msra.mxu0 0.0
    %3328 = vmatprep.subr.mxu0 0.0
    %3329 = vmatpush1.msra.mxu0 0.0
    %3330 = vmatprep.subr.mxu0 0.0
    %3331 = vmatpush1.msra.mxu0 0.0
    %3332 = vmatprep.subr.mxu0 0.0
    %3333 = vmatpush1.msra.mxu0 0.0
    %3334 = vmatprep.subr.mxu0 0.0
    %3335 = vmatpush1.msra.mxu0 0.0
    %3336 = vmatprep.subr.mxu0 0.0
    %3337 = vmatpush1.msra.mxu0 0.0
    %3338 = vmatprep.subr.mxu0 0.0
    %3339 = vmatpush1.msra.mxu0 0.0
    %3340 = vmatprep.subr.mxu0 0.0
    %3341 = vmatpush1.msra.mxu0 0.0
    %3342 = vmatprep.mubr.f32.mxu0 0.0
    %3343 = vmatmul.mubr.f32.gmra.mrb[0].mxu0 %v2554
    %v3344 = vpop.f32.mrb[0].mxu0
    %v3345 = vadd.f32 %v3063, %v3344
    %v3346 = vpop.f32.mrb[0].mxu0
    %3347 = vdwg.mxu0
    %v3349 = vsel %vm1108, %v2480, 0
    %v3352 = vsel %vm1108, %v2809, 0
    %3354 = vmatprep.subr.mxu0 0.0
    %3355 = vmatpush1.xpose.msra.mxu0 %v3352
    %3356 = vmatprep.subr.mxu0 0.0
    %3357 = vmatpush1.xpose.msra.mxu0 0.0
    %3358 = vmatprep.subr.mxu0 0.0
    %3359 = vmatpush1.xpose.msra.mxu0 0.0
    %3360 = vmatprep.subr.mxu0 0.0
    %3361 = vmatpush1.xpose.msra.mxu0 0.0
    %3362 = vmatprep.subr.mxu0 0.0
    %3363 = vmatpush1.xpose.msra.mxu0 0.0
    %3364 = vmatprep.subr.mxu0 0.0
    %3365 = vmatpush1.xpose.msra.mxu0 0.0
    %3366 = vmatprep.subr.mxu0 0.0
    %3367 = vmatpush1.xpose.msra.mxu0 0.0
    %3368 = vmatprep.subr.mxu0 0.0
    %3369 = vmatpush1.xpose.msra.mxu0 0.0
    %3370 = vmatprep.subr.mxu0 0.0
    %3371 = vmatpush1.xpose.msra.mxu0 0.0
    %3372 = vmatprep.subr.mxu0 0.0
    %3373 = vmatpush1.xpose.msra.mxu0 0.0
    %3374 = vmatprep.subr.mxu0 0.0
    %3375 = vmatpush1.xpose.msra.mxu0 0.0
    %3376 = vmatprep.subr.mxu0 0.0
    %3377 = vmatpush1.xpose.msra.mxu0 0.0
    %3378 = vmatprep.subr.mxu0 0.0
    %3379 = vmatpush1.xpose.msra.mxu0 0.0
    %3380 = vmatprep.subr.mxu0 0.0
    %3381 = vmatpush1.xpose.msra.mxu0 0.0
    %3382 = vmatprep.subr.mxu0 0.0
    %3383 = vmatpush1.xpose.msra.mxu0 0.0
    %3384 = vmatprep.subr.mxu0 0.0
    %3385 = vmatpush1.xpose.msra.mxu0 0.0
    %3386 = vmatprep.subr.mxu0 0.0
    %3387 = vmatpush1.xpose.msra.mxu0 0.0
    %3388 = vmatprep.subr.mxu0 0.0
    %3389 = vmatpush1.xpose.msra.mxu0 0.0
    %3390 = vmatprep.subr.mxu0 0.0
    %3391 = vmatpush1.xpose.msra.mxu0 0.0
    %3392 = vmatprep.subr.mxu0 0.0
    %3393 = vmatpush1.xpose.msra.mxu0 0.0
    %3394 = vmatprep.subr.mxu0 0.0
    %3395 = vmatpush1.xpose.msra.mxu0 0.0
    %3396 = vmatprep.subr.mxu0 0.0
    %3397 = vmatpush1.xpose.msra.mxu0 0.0
    %3398 = vmatprep.subr.mxu0 0.0
    %3399 = vmatpush1.xpose.msra.mxu0 0.0
    %3400 = vmatprep.subr.mxu0 0.0
    %3401 = vmatpush1.xpose.msra.mxu0 0.0
    %3402 = vmatprep.subr.mxu0 0.0
    %3403 = vmatpush1.xpose.msra.mxu0 0.0
    %3404 = vmatprep.subr.mxu0 0.0
    %3405 = vmatpush1.xpose.msra.mxu0 0.0
    %3406 = vmatprep.subr.mxu0 0.0
    %3407 = vmatpush1.xpose.msra.mxu0 0.0
    %3408 = vmatprep.subr.mxu0 0.0
    %3409 = vmatpush1.xpose.msra.mxu0 0.0
    %3410 = vmatprep.subr.mxu0 0.0
    %3411 = vmatpush1.xpose.msra.mxu0 0.0
    %3412 = vmatprep.subr.mxu0 0.0
    %3413 = vmatpush1.xpose.msra.mxu0 0.0
    %3414 = vmatprep.subr.mxu0 0.0
    %3415 = vmatpush1.xpose.msra.mxu0 0.0
    %3416 = vmatprep.subr.mxu0 0.0
    %3417 = vmatpush1.xpose.msra.mxu0 0.0
    %3418 = vmatprep.mubr.f32.mxu0 0.0
    %3419 = vmatmul.mubr.f32.gmra.mrb[0].mxu0 %v3349
    %v3420 = vpop.f32.mrb[0].mxu0
    %v3421 = vadd.f32 0.0, %v3420
    %v3422 = vpop.f32.mrb[0].mxu0
    %3423 = vdwg.mxu0
    %v3425 = vsel %vm1108, %v2550, 0
    %v3428 = vsel %vm1108, %v2879, 0
    %3430 = vmatprep.subr.mxu0 0.0
    %3431 = vmatpush1.xpose.msra.mxu0 %v3428
    %3432 = vmatprep.subr.mxu0 0.0
    %3433 = vmatpush1.xpose.msra.mxu0 0.0
    %3434 = vmatprep.subr.mxu0 0.0
    %3435 = vmatpush1.xpose.msra.mxu0 0.0
    %3436 = vmatprep.subr.mxu0 0.0
    %3437 = vmatpush1.xpose.msra.mxu0 0.0
    %3438 = vmatprep.subr.mxu0 0.0
    %3439 = vmatpush1.xpose.msra.mxu0 0.0
    %3440 = vmatprep.subr.mxu0 0.0
    %3441 = vmatpush1.xpose.msra.mxu0 0.0
    %3442 = vmatprep.subr.mxu0 0.0
    %3443 = vmatpush1.xpose.msra.mxu0 0.0
    %3444 = vmatprep.subr.mxu0 0.0
    %3445 = vmatpush1.xpose.msra.mxu0 0.0
    %3446 = vmatprep.subr.mxu0 0.0
    %3447 = vmatpush1.xpose.msra.mxu0 0.0
    %3448 = vmatprep.subr.mxu0 0.0
    %3449 = vmatpush1.xpose.msra.mxu0 0.0
    %3450 = vmatprep.subr.mxu0 0.0
    %3451 = vmatpush1.xpose.msra.mxu0 0.0
    %3452 = vmatprep.subr.mxu0 0.0
    %3453 = vmatpush1.xpose.msra.mxu0 0.0
    %3454 = vmatprep.subr.mxu0 0.0
    %3455 = vmatpush1.xpose.msra.mxu0 0.0
    %3456 = vmatprep.subr.mxu0 0.0
    %3457 = vmatpush1.xpose.msra.mxu0 0.0
    %3458 = vmatprep.subr.mxu0 0.0
    %3459 = vmatpush1.xpose.msra.mxu0 0.0
    %3460 = vmatprep.subr.mxu0 0.0
    %3461 = vmatpush1.xpose.msra.mxu0 0.0
    %3462 = vmatprep.subr.mxu0 0.0
    %3463 = vmatpush1.xpose.msra.mxu0 0.0
    %3464 = vmatprep.subr.mxu0 0.0
    %3465 = vmatpush1.xpose.msra.mxu0 0.0
    %3466 = vmatprep.subr.mxu0 0.0
    %3467 = vmatpush1.xpose.msra.mxu0 0.0
    %3468 = vmatprep.subr.mxu0 0.0
    %3469 = vmatpush1.xpose.msra.mxu0 0.0
    %3470 = vmatprep.subr.mxu0 0.0
    %3471 = vmatpush1.xpose.msra.mxu0 0.0
    %3472 = vmatprep.subr.mxu0 0.0
    %3473 = vmatpush1.xpose.msra.mxu0 0.0
    %3474 = vmatprep.subr.mxu0 0.0
    %3475 = vmatpush1.xpose.msra.mxu0 0.0
    %3476 = vmatprep.subr.mxu0 0.0
    %3477 = vmatpush1.xpose.msra.mxu0 0.0
    %3478 = vmatprep.subr.mxu0 0.0
    %3479 = vmatpush1.xpose.msra.mxu0 0.0
    %3480 = vmatprep.subr.mxu0 0.0
    %3481 = vmatpush1.xpose.msra.mxu0 0.0
    %3482 = vmatprep.subr.mxu0 0.0
    %3483 = vmatpush1.xpose.msra.mxu0 0.0
    %3484 = vmatprep.subr.mxu0 0.0
    %3485 = vmatpush1.xpose.msra.mxu0 0.0
    %3486 = vmatprep.subr.mxu0 0.0
    %3487 = vmatpush1.xpose.msra.mxu0 0.0
    %3488 = vmatprep.subr.mxu0 0.0
    %3489 = vmatpush1.xpose.msra.mxu0 0.0
    %3490 = vmatprep.subr.mxu0 0.0
    %3491 = vmatpush1.xpose.msra.mxu0 0.0
    %3492 = vmatprep.subr.mxu0 0.0
    %3493 = vmatpush1.xpose.msra.mxu0 0.0
    %3494 = vmatprep.mubr.f32.mxu0 0.0
    %3495 = vmatmul.mubr.f32.gmra.mrb[0].mxu0 %v3425
    %v3496 = vpop.f32.mrb[0].mxu0
    %v3497 = vadd.f32 0.0, %v3496
    %v3498 = vpop.f32.mrb[0].mxu0
    %3499 = vdwg.mxu0
    %v3501 = vsel %vm1108, %v2623, 0
    %v3504 = vsel %vm1108, %v2949, 0
    %3506 = vmatprep.subr.mxu0 0.0
    %3507 = vmatpush1.xpose.msra.mxu0 %v3504
    %3508 = vmatprep.subr.mxu0 0.0
    %3509 = vmatpush1.xpose.msra.mxu0 0.0
    %3510 = vmatprep.subr.mxu0 0.0
    %3511 = vmatpush1.xpose.msra.mxu0 0.0
    %3512 = vmatprep.subr.mxu0 0.0
    %3513 = vmatpush1.xpose.msra.mxu0 0.0
    %3514 = vmatprep.subr.mxu0 0.0
    %3515 = vmatpush1.xpose.msra.mxu0 0.0
    %3516 = vmatprep.subr.mxu0 0.0
    %3517 = vmatpush1.xpose.msra.mxu0 0.0
    %3518 = vmatprep.subr.mxu0 0.0
    %3519 = vmatpush1.xpose.msra.mxu0 0.0
    %3520 = vmatprep.subr.mxu0 0.0
    %3521 = vmatpush1.xpose.msra.mxu0 0.0
    %3522 = vmatprep.subr.mxu0 0.0
    %3523 = vmatpush1.xpose.msra.mxu0 0.0
    %3524 = vmatprep.subr.mxu0 0.0
    %3525 = vmatpush1.xpose.msra.mxu0 0.0
    %3526 = vmatprep.subr.mxu0 0.0
    %3527 = vmatpush1.xpose.msra.mxu0 0.0
    %3528 = vmatprep.subr.mxu0 0.0
    %3529 = vmatpush1.xpose.msra.mxu0 0.0
    %3530 = vmatprep.subr.mxu0 0.0
    %3531 = vmatpush1.xpose.msra.mxu0 0.0
    %3532 = vmatprep.subr.mxu0 0.0
    %3533 = vmatpush1.xpose.msra.mxu0 0.0
    %3534 = vmatprep.subr.mxu0 0.0
    %3535 = vmatpush1.xpose.msra.mxu0 0.0
    %3536 = vmatprep.subr.mxu0 0.0
    %3537 = vmatpush1.xpose.msra.mxu0 0.0
    %3538 = vmatprep.subr.mxu0 0.0
    %3539 = vmatpush1.xpose.msra.mxu0 0.0
    %3540 = vmatprep.subr.mxu0 0.0
    %3541 = vmatpush1.xpose.msra.mxu0 0.0
    %3542 = vmatprep.subr.mxu0 0.0
    %3543 = vmatpush1.xpose.msra.mxu0 0.0
    %3544 = vmatprep.subr.mxu0 0.0
    %3545 = vmatpush1.xpose.msra.mxu0 0.0
    %3546 = vmatprep.subr.mxu0 0.0
    %3547 = vmatpush1.xpose.msra.mxu0 0.0
    %3548 = vmatprep.subr.mxu0 0.0
    %3549 = vmatpush1.xpose.msra.mxu0 0.0
    %3550 = vmatprep.subr.mxu0 0.0
    %3551 = vmatpush1.xpose.msra.mxu0 0.0
    %3552 = vmatprep.subr.mxu0 0.0
    %3553 = vmatpush1.xpose.msra.mxu0 0.0
    %3554 = vmatprep.subr.mxu0 0.0
    %3555 = vmatpush1.xpose.msra.mxu0 0.0
    %3556 = vmatprep.subr.mxu0 0.0
    %3557 = vmatpush1.xpose.msra.mxu0 0.0
    %3558 = vmatprep.subr.mxu0 0.0
    %3559 = vmatpush1.xpose.msra.mxu0 0.0
    %3560 = vmatprep.subr.mxu0 0.0
    %3561 = vmatpush1.xpose.msra.mxu0 0.0
    %3562 = vmatprep.subr.mxu0 0.0
    %3563 = vmatpush1.xpose.msra.mxu0 0.0
    %3564 = vmatprep.subr.mxu0 0.0
    %3565 = vmatpush1.xpose.msra.mxu0 0.0
    %3566 = vmatprep.subr.mxu0 0.0
    %3567 = vmatpush1.xpose.msra.mxu0 0.0
    %3568 = vmatprep.subr.mxu0 0.0
    %3569 = vmatpush1.xpose.msra.mxu0 0.0
    %3570 = vmatprep.mubr.f32.mxu0 0.0
    %3571 = vmatmul.mubr.f32.gmra.mrb[0].mxu0 %v3501
    %v3572 = vpop.f32.mrb[0].mxu0
    %v3573 = vadd.f32 0.0, %v3572
    %v3574 = vpop.f32.mrb[0].mxu0
    %3575 = vdwg.mxu0
    %v3577 = vsel %vm1108, %v2693, 0
    %v3580 = vsel %vm1108, %v3019, 0
    %3582 = vmatprep.subr.mxu0 0.0
    %3583 = vmatpush1.xpose.msra.mxu0 %v3580
    %3584 = vmatprep.subr.mxu0 0.0
    %3585 = vmatpush1.xpose.msra.mxu0 0.0
    %3586 = vmatprep.subr.mxu0 0.0
    %3587 = vmatpush1.xpose.msra.mxu0 0.0
    %3588 = vmatprep.subr.mxu0 0.0
    %3589 = vmatpush1.xpose.msra.mxu0 0.0
    %3590 = vmatprep.subr.mxu0 0.0
    %3591 = vmatpush1.xpose.msra.mxu0 0.0
    %3592 = vmatprep.subr.mxu0 0.0
    %3593 = vmatpush1.xpose.msra.mxu0 0.0
    %3594 = vmatprep.subr.mxu0 0.0
    %3595 = vmatpush1.xpose.msra.mxu0 0.0
    %3596 = vmatprep.subr.mxu0 0.0
    %3597 = vmatpush1.xpose.msra.mxu0 0.0
    %3598 = vmatprep.subr.mxu0 0.0
    %3599 = vmatpush1.xpose.msra.mxu0 0.0
    %3600 = vmatprep.subr.mxu0 0.0
    %3601 = vmatpush1.xpose.msra.mxu0 0.0
    %3602 = vmatprep.subr.mxu0 0.0
    %3603 = vmatpush1.xpose.msra.mxu0 0.0
    %3604 = vmatprep.subr.mxu0 0.0
    %3605 = vmatpush1.xpose.msra.mxu0 0.0
    %3606 = vmatprep.subr.mxu0 0.0
    %3607 = vmatpush1.xpose.msra.mxu0 0.0
    %3608 = vmatprep.subr.mxu0 0.0
    %3609 = vmatpush1.xpose.msra.mxu0 0.0
    %3610 = vmatprep.subr.mxu0 0.0
    %3611 = vmatpush1.xpose.msra.mxu0 0.0
    %3612 = vmatprep.subr.mxu0 0.0
    %3613 = vmatpush1.xpose.msra.mxu0 0.0
    %3614 = vmatprep.subr.mxu0 0.0
    %3615 = vmatpush1.xpose.msra.mxu0 0.0
    %3616 = vmatprep.subr.mxu0 0.0
    %3617 = vmatpush1.xpose.msra.mxu0 0.0
    %3618 = vmatprep.subr.mxu0 0.0
    %3619 = vmatpush1.xpose.msra.mxu0 0.0
    %3620 = vmatprep.subr.mxu0 0.0
    %3621 = vmatpush1.xpose.msra.mxu0 0.0
    %3622 = vmatprep.subr.mxu0 0.0
    %3623 = vmatpush1.xpose.msra.mxu0 0.0
    %3624 = vmatprep.subr.mxu0 0.0
    %3625 = vmatpush1.xpose.msra.mxu0 0.0
    %3626 = vmatprep.subr.mxu0 0.0
    %3627 = vmatpush1.xpose.msra.mxu0 0.0
    %3628 = vmatprep.subr.mxu0 0.0
    %3629 = vmatpush1.xpose.msra.mxu0 0.0
    %3630 = vmatprep.subr.mxu0 0.0
    %3631 = vmatpush1.xpose.msra.mxu0 0.0
    %3632 = vmatprep.subr.mxu0 0.0
    %3633 = vmatpush1.xpose.msra.mxu0 0.0
    %3634 = vmatprep.subr.mxu0 0.0
    %3635 = vmatpush1.xpose.msra.mxu0 0.0
    %3636 = vmatprep.subr.mxu0 0.0
    %3637 = vmatpush1.xpose.msra.mxu0 0.0
    %3638 = vmatprep.subr.mxu0 0.0
    %3639 = vmatpush1.xpose.msra.mxu0 0.0
    %3640 = vmatprep.subr.mxu0 0.0
    %3641 = vmatpush1.xpose.msra.mxu0 0.0
    %3642 = vmatprep.subr.mxu0 0.0
    %3643 = vmatpush1.xpose.msra.mxu0 0.0
    %3644 = vmatprep.subr.mxu0 0.0
    %3645 = vmatpush1.xpose.msra.mxu0 0.0
    %3646 = vmatprep.mubr.f32.mxu0 0.0
    %3647 = vmatmul.mubr.f32.gmra.mrb[0].mxu0 %v3577
    %v3648 = vpop.f32.mrb[0].mxu0
    %v3649 = vadd.f32 0.0, %v3648
    %v3650 = vpop.f32.mrb[0].mxu0
    %3651 = vdwg.mxu0
    %v3652 = vmul.f32 %v3421, 0.25
    %v3653 = vmul.f32 %v3497, 0.25
    %v3654 = vmul.f32 %v3573, 0.25
    %v3655 = vmul.f32 %v3649, 0.25
    %v3656 = vadd.f32 %v3652, %v126
    %v3657 = vadd.f32 %v3653, %v127
    %v3658 = vadd.f32 %v3654, %v128
    %v3659 = vadd.f32 %v3655, %v129
    %v3660 = vsel %vm1421, %v3656, -inf
    %3661 = vmax.xlane.f32.xlu0 %v3660
    %v3662 = vpop.xlane.xlu0 %3661
    %v3663 = vsel %vm1421, %v3657, -inf
    %3664 = vmax.xlane.f32.xlu0 %v3663
    %v3665 = vpop.xlane.xlu0 %3664
    %v3666 = vsel %vm1421, %v3658, -inf
    %3667 = vmax.xlane.f32.xlu0 %v3666
    %v3668 = vpop.xlane.xlu0 %3667
    %v3669 = vsel %vm1421, %v3659, -inf
    %3670 = vmax.xlane.f32.xlu0 %v3669
    %v3671 = vpop.xlane.xlu0 %3670
    %v3672 = vsub.f32 %v3656, %v3662
    %v3673 = vsub.f32 %v3657, %v3665
    %v3674 = vsub.f32 %v3658, %v3668
    %v3675 = vsub.f32 %v3659, %v3671
    %v3676 = vmul.f32 %v3672, 1.442695
    %v3677 = vpow.pop %v3676
    %v3678 = vmul.f32 %v3673, 1.442695
    %v3679 = vpow.pop %v3678
    %v3680 = vmul.f32 %v3674, 1.442695
    %v3681 = vpow.pop %v3680
    %v3682 = vmul.f32 %v3675, 1.442695
    %v3683 = vpow.pop %v3682
    %v3684 = vsel %vm1421, %v3677, 0.0
    %3685 = vadd.xlane.f32.xlu0 %v3684
    %v3686 = vpop.xlane.xlu0 %3685
    %v3687 = vsel %vm1421, %v3679, 0.0
    %3688 = vadd.xlane.f32.xlu0 %v3687
    %v3689 = vpop.xlane.xlu0 %3688
    %v3690 = vsel %vm1421, %v3681, 0.0
    %3691 = vadd.xlane.f32.xlu0 %v3690
    %v3692 = vpop.xlane.xlu0 %3691
    %v3693 = vsel %vm1421, %v3683, 0.0
    %3694 = vadd.xlane.f32.xlu0 %v3693
    %v3695 = vpop.xlane.xlu0 %3694
    %v3696 = vrcp.pop %v3686
    %v3697 = vrcp.pop %v3689
    %v3698 = vrcp.pop %v3692
    %v3699 = vrcp.pop %v3695
    %v3700 = vmul.f32 %v3677, %v3696
    %v3701 = vmul.f32 %v3679, %v3697
    %v3702 = vmul.f32 %v3681, %v3698
    %v3703 = vmul.f32 %v3683, %v3699
    %v3705 = vsel %vm1421, %v3700, 0
    %3707 = vmatprep.subr.mxu0 0.0
    %3708 = vmatpush1.msra.mxu0 %v3135
    %3709 = vmatprep.subr.mxu0 0.0
    %3710 = vmatpush1.msra.mxu0 0.0
    %3711 = vmatprep.subr.mxu0 0.0
    %3712 = vmatpush1.msra.mxu0 0.0
    %3713 = vmatprep.subr.mxu0 0.0
    %3714 = vmatpush1.msra.mxu0 0.0
    %3715 = vmatprep.subr.mxu0 0.0
    %3716 = vmatpush1.msra.mxu0 0.0
    %3717 = vmatprep.subr.mxu0 0.0
    %3718 = vmatpush1.msra.mxu0 0.0
    %3719 = vmatprep.subr.mxu0 0.0
    %3720 = vmatpush1.msra.mxu0 0.0
    %3721 = vmatprep.subr.mxu0 0.0
    %3722 = vmatpush1.msra.mxu0 0.0
    %3723 = vmatprep.subr.mxu0 0.0
    %3724 = vmatpush1.msra.mxu0 0.0
    %3725 = vmatprep.subr.mxu0 0.0
    %3726 = vmatpush1.msra.mxu0 0.0
    %3727 = vmatprep.subr.mxu0 0.0
    %3728 = vmatpush1.msra.mxu0 0.0
    %3729 = vmatprep.subr.mxu0 0.0
    %3730 = vmatpush1.msra.mxu0 0.0
    %3731 = vmatprep.subr.mxu0 0.0
    %3732 = vmatpush1.msra.mxu0 0.0
    %3733 = vmatprep.subr.mxu0 0.0
    %3734 = vmatpush1.msra.mxu0 0.0
    %3735 = vmatprep.subr.mxu0 0.0
    %3736 = vmatpush1.msra.mxu0 0.0
    %3737 = vmatprep.subr.mxu0 0.0
    %3738 = vmatpush1.msra.mxu0 0.0
    %3739 = vmatprep.subr.mxu0 0.0
    %3740 = vmatpush1.msra.mxu0 0.0
    %3741 = vmatprep.subr.mxu0 0.0
    %3742 = vmatpush1.msra.mxu0 0.0
    %3743 = vmatprep.subr.mxu0 0.0
    %3744 = vmatpush1.msra.mxu0 0.0
    %3745 = vmatprep.subr.mxu0 0.0
    %3746 = vmatpush1.msra.mxu0 0.0
    %3747 = vmatprep.subr.mxu0 0.0
    %3748 = vmatpush1.msra.mxu0 0.0
    %3749 = vmatprep.subr.mxu0 0.0
    %3750 = vmatpush1.msra.mxu0 0.0
    %3751 = vmatprep.subr.mxu0 0.0
    %3752 = vmatpush1.msra.mxu0 0.0
    %3753 = vmatprep.subr.mxu0 0.0
    %3754 = vmatpush1.msra.mxu0 0.0
    %3755 = vmatprep.subr.mxu0 0.0
    %3756 = vmatpush1.msra.mxu0 0.0
    %3757 = vmatprep.subr.mxu0 0.0
    %3758 = vmatpush1.msra.mxu0 0.0
    %3759 = vmatprep.subr.mxu0 0.0
    %3760 = vmatpush1.msra.mxu0 0.0
    %3761 = vmatprep.subr.mxu0 0.0
    %3762 = vmatpush1.msra.mxu0 0.0
    %3763 = vmatprep.subr.mxu0 0.0
    %3764 = vmatpush1.msra.mxu0 0.0
    %3765 = vmatprep.subr.mxu0 0.0
    %3766 = vmatpush1.msra.mxu0 0.0
    %3767 = vmatprep.subr.mxu0 0.0
    %3768 = vmatpush1.msra.mxu0 0.0
    %3769 = vmatprep.subr.mxu0 0.0
    %3770 = vmatpush1.msra.mxu0 0.0
    %3771 = vmatprep.mubr.f32.mxu0 0.0
    %3772 = vmatmul.mubr.f32.gmra.mrb[0].mxu0 %v3705
    %v3773 = vpop.f32.mrb[0].mxu0
    %v3774 = vadd.f32 0.0, %v3773
    %v3775 = vpop.f32.mrb[0].mxu0
    %3776 = vdwg.mxu0
    %v3778 = vsel %vm1421, %v3701, 0
    %3780 = vmatprep.subr.mxu0 0.0
    %3781 = vmatpush1.msra.mxu0 %v3205
    %3782 = vmatprep.subr.mxu0 0.0
    %3783 = vmatpush1.msra.mxu0 0.0
    %3784 = vmatprep.subr.mxu0 0.0
    %3785 = vmatpush1.msra.mxu0 0.0
    %3786 = vmatprep.subr.mxu0 0.0
    %3787 = vmatpush1.msra.mxu0 0.0
    %3788 = vmatprep.subr.mxu0 0.0
    %3789 = vmatpush1.msra.mxu0 0.0
    %3790 = vmatprep.subr.mxu0 0.0
    %3791 = vmatpush1.msra.mxu0 0.0
    %3792 = vmatprep.subr.mxu0 0.0
    %3793 = vmatpush1.msra.mxu0 0.0
    %3794 = vmatprep.subr.mxu0 0.0
    %3795 = vmatpush1.msra.mxu0 0.0
    %3796 = vmatprep.subr.mxu0 0.0
    %3797 = vmatpush1.msra.mxu0 0.0
    %3798 = vmatprep.subr.mxu0 0.0
    %3799 = vmatpush1.msra.mxu0 0.0
    %3800 = vmatprep.subr.mxu0 0.0
    %3801 = vmatpush1.msra.mxu0 0.0
    %3802 = vmatprep.subr.mxu0 0.0
    %3803 = vmatpush1.msra.mxu0 0.0
    %3804 = vmatprep.subr.mxu0 0.0
    %3805 = vmatpush1.msra.mxu0 0.0
    %3806 = vmatprep.subr.mxu0 0.0
    %3807 = vmatpush1.msra.mxu0 0.0
    %3808 = vmatprep.subr.mxu0 0.0
    %3809 = vmatpush1.msra.mxu0 0.0
    %3810 = vmatprep.subr.mxu0 0.0
    %3811 = vmatpush1.msra.mxu0 0.0
    %3812 = vmatprep.subr.mxu0 0.0
    %3813 = vmatpush1.msra.mxu0 0.0
    %3814 = vmatprep.subr.mxu0 0.0
    %3815 = vmatpush1.msra.mxu0 0.0
    %3816 = vmatprep.subr.mxu0 0.0
    %3817 = vmatpush1.msra.mxu0 0.0
    %3818 = vmatprep.subr.mxu0 0.0
    %3819 = vmatpush1.msra.mxu0 0.0
    %3820 = vmatprep.subr.mxu0 0.0
    %3821 = vmatpush1.msra.mxu0 0.0
    %3822 = vmatprep.subr.mxu0 0.0
    %3823 = vmatpush1.msra.mxu0 0.0
    %3824 = vmatprep.subr.mxu0 0.0
    %3825 = vmatpush1.msra.mxu0 0.0
    %3826 = vmatprep.subr.mxu0 0.0
    %3827 = vmatpush1.msra.mxu0 0.0
    %3828 = vmatprep.subr.mxu0 0.0
    %3829 = vmatpush1.msra.mxu0 0.0
    %3830 = vmatprep.subr.mxu0 0.0
    %3831 = vmatpush1.msra.mxu0 0.0
    %3832 = vmatprep.subr.mxu0 0.0
    %3833 = vmatpush1.msra.mxu0 0.0
    %3834 = vmatprep.subr.mxu0 0.0
    %3835 = vmatpush1.msra.mxu0 0.0
    %3836 = vmatprep.subr.mxu0 0.0
    %3837 = vmatpush1.msra.mxu0 0.0
    %3838 = vmatprep.subr.mxu0 0.0
    %3839 = vmatpush1.msra.mxu0 0.0
    %3840 = vmatprep.subr.mxu0 0.0
    %3841 = vmatpush1.msra.mxu0 0.0
    %3842 = vmatprep.subr.mxu0 0.0
    %3843 = vmatpush1.msra.mxu0 0.0
    %3844 = vmatprep.mubr.f32.mxu0 0.0
    %3845 = vmatmul.mubr.f32.gmra.mrb[0].mxu0 %v3778
    %v3846 = vpop.f32.mrb[0].mxu0
    %v3847 = vadd.f32 0.0, %v3846
    %v3848 = vpop.f32.mrb[0].mxu0
    %3849 = vdwg.mxu0
    %v3851 = vsel %vm1421, %v3702, 0
    %3853 = vmatprep.subr.mxu0 0.0
    %3854 = vmatpush1.msra.mxu0 %v3275
    %3855 = vmatprep.subr.mxu0 0.0
    %3856 = vmatpush1.msra.mxu0 0.0
    %3857 = vmatprep.subr.mxu0 0.0
    %3858 = vmatpush1.msra.mxu0 0.0
    %3859 = vmatprep.subr.mxu0 0.0
    %3860 = vmatpush1.msra.mxu0 0.0
    %3861 = vmatprep.subr.mxu0 0.0
    %3862 = vmatpush1.msra.mxu0 0.0
    %3863 = vmatprep.subr.mxu0 0.0
    %3864 = vmatpush1.msra.mxu0 0.0
    %3865 = vmatprep.subr.mxu0 0.0
    %3866 = vmatpush1.msra.mxu0 0.0
    %3867 = vmatprep.subr.mxu0 0.0
    %3868 = vmatpush1.msra.mxu0 0.0
    %3869 = vmatprep.subr.mxu0 0.0
    %3870 = vmatpush1.msra.mxu0 0.0
    %3871 = vmatprep.subr.mxu0 0.0
    %3872 = vmatpush1.msra.mxu0 0.0
    %3873 = vmatprep.subr.mxu0 0.0
    %3874 = vmatpush1.msra.mxu0 0.0
    %3875 = vmatprep.subr.mxu0 0.0
    %3876 = vmatpush1.msra.mxu0 0.0
    %3877 = vmatprep.subr.mxu0 0.0
    %3878 = vmatpush1.msra.mxu0 0.0
    %3879 = vmatprep.subr.mxu0 0.0
    %3880 = vmatpush1.msra.mxu0 0.0
    %3881 = vmatprep.subr.mxu0 0.0
    %3882 = vmatpush1.msra.mxu0 0.0
    %3883 = vmatprep.subr.mxu0 0.0
    %3884 = vmatpush1.msra.mxu0 0.0
    %3885 = vmatprep.subr.mxu0 0.0
    %3886 = vmatpush1.msra.mxu0 0.0
    %3887 = vmatprep.subr.mxu0 0.0
    %3888 = vmatpush1.msra.mxu0 0.0
    %3889 = vmatprep.subr.mxu0 0.0
    %3890 = vmatpush1.msra.mxu0 0.0
    %3891 = vmatprep.subr.mxu0 0.0
    %3892 = vmatpush1.msra.mxu0 0.0
    %3893 = vmatprep.subr.mxu0 0.0
    %3894 = vmatpush1.msra.mxu0 0.0
    %3895 = vmatprep.subr.mxu0 0.0
    %3896 = vmatpush1.msra.mxu0 0.0
    %3897 = vmatprep.subr.mxu0 0.0
    %3898 = vmatpush1.msra.mxu0 0.0
    %3899 = vmatprep.subr.mxu0 0.0
    %3900 = vmatpush1.msra.mxu0 0.0
    %3901 = vmatprep.subr.mxu0 0.0
    %3902 = vmatpush1.msra.mxu0 0.0
    %3903 = vmatprep.subr.mxu0 0.0
    %3904 = vmatpush1.msra.mxu0 0.0
    %3905 = vmatprep.subr.mxu0 0.0
    %3906 = vmatpush1.msra.mxu0 0.0
    %3907 = vmatprep.subr.mxu0 0.0
    %3908 = vmatpush1.msra.mxu0 0.0
    %3909 = vmatprep.subr.mxu0 0.0
    %3910 = vmatpush1.msra.mxu0 0.0
    %3911 = vmatprep.subr.mxu0 0.0
    %3912 = vmatpush1.msra.mxu0 0.0
    %3913 = vmatprep.subr.mxu0 0.0
    %3914 = vmatpush1.msra.mxu0 0.0
    %3915 = vmatprep.subr.mxu0 0.0
    %3916 = vmatpush1.msra.mxu0 0.0
    %3917 = vmatprep.mubr.f32.mxu0 0.0
    %3918 = vmatmul.mubr.f32.gmra.mrb[0].mxu0 %v3851
    %v3919 = vpop.f32.mrb[0].mxu0
    %v3920 = vadd.f32 0.0, %v3919
    %v3921 = vpop.f32.mrb[0].mxu0
    %3922 = vdwg.mxu0
    %v3924 = vsel %vm1421, %v3703, 0
    %3926 = vmatprep.subr.mxu0 0.0
    %3927 = vmatpush1.msra.mxu0 %v3345
    %3928 = vmatprep.subr.mxu0 0.0
    %3929 = vmatpush1.msra.mxu0 0.0
    %3930 = vmatprep.subr.mxu0 0.0
    %3931 = vmatpush1.msra.mxu0 0.0
    %3932 = vmatprep.subr.mxu0 0.0
    %3933 = vmatpush1.msra.mxu0 0.0
    %3934 = vmatprep.subr.mxu0 0.0
    %3935 = vmatpush1.msra.mxu0 0.0
    %3936 = vmatprep.subr.mxu0 0.0
    %3937 = vmatpush1.msra.mxu0 0.0
    %3938 = vmatprep.subr.mxu0 0.0
    %3939 = vmatpush1.msra.mxu0 0.0
    %3940 = vmatprep.subr.mxu0 0.0
    %3941 = vmatpush1.msra.mxu0 0.0
    %3942 = vmatprep.subr.mxu0 0.0
    %3943 = vmatpush1.msra.mxu0 0.0
    %3944 = vmatprep.subr.mxu0 0.0
    %3945 = vmatpush1.msra.mxu0 0.0
    %3946 = vmatprep.subr.mxu0 0.0
    %3947 = vmatpush1.msra.mxu0 0.0
    %3948 = vmatprep.subr.mxu0 0.0
    %3949 = vmatpush1.msra.mxu0 0.0
    %3950 = vmatprep.subr.mxu0 0.0
    %3951 = vmatpush1.msra.mxu0 0.0
    %3952 = vmatprep.subr.mxu0 0.0
    %3953 = vmatpush1.msra.mxu0 0.0
    %3954 = vmatprep.subr.mxu0 0.0
    %3955 = vmatpush1.msra.mxu0 0.0
    %3956 = vmatprep.subr.mxu0 0.0
    %3957 = vmatpush1.msra.mxu0 0.0
    %3958 = vmatprep.subr.mxu0 0.0
    %3959 = vmatpush1.msra.mxu0 0.0
    %3960 = vmatprep.subr.mxu0 0.0
    %3961 = vmatpush1.msra.mxu0 0.0
    %3962 = vmatprep.subr.mxu0 0.0
    %3963 = vmatpush1.msra.mxu0 0.0
    %3964 = vmatprep.subr.mxu0 0.0
    %3965 = vmatpush1.msra.mxu0 0.0
    %3966 = vmatprep.subr.mxu0 0.0
    %3967 = vmatpush1.msra.mxu0 0.0
    %3968 = vmatprep.subr.mxu0 0.0
    %3969 = vmatpush1.msra.mxu0 0.0
    %3970 = vmatprep.subr.mxu0 0.0
    %3971 = vmatpush1.msra.mxu0 0.0
    %3972 = vmatprep.subr.mxu0 0.0
    %3973 = vmatpush1.msra.mxu0 0.0
    %3974 = vmatprep.subr.mxu0 0.0
    %3975 = vmatpush1.msra.mxu0 0.0
    %3976 = vmatprep.subr.mxu0 0.0
    %3977 = vmatpush1.msra.mxu0 0.0
    %3978 = vmatprep.subr.mxu0 0.0
    %3979 = vmatpush1.msra.mxu0 0.0
    %3980 = vmatprep.subr.mxu0 0.0
    %3981 = vmatpush1.msra.mxu0 0.0
    %3982 = vmatprep.subr.mxu0 0.0
    %3983 = vmatpush1.msra.mxu0 0.0
    %3984 = vmatprep.subr.mxu0 0.0
    %3985 = vmatpush1.msra.mxu0 0.0
    %3986 = vmatprep.subr.mxu0 0.0
    %3987 = vmatpush1.msra.mxu0 0.0
    %3988 = vmatprep.subr.mxu0 0.0
    %3989 = vmatpush1.msra.mxu0 0.0
    %3990 = vmatprep.mubr.f32.mxu0 0.0
    %3991 = vmatmul.mubr.f32.gmra.mrb[0].mxu0 %v3924
    %v3992 = vpop.f32.mrb[0].mxu0
    %v3993 = vadd.f32 0.0, %v3992
    %v3994 = vpop.f32.mrb[0].mxu0
    %3995 = vdwg.mxu0
    %s3996 = scalar_lea.vmem %s10, 64
    %v3997 = vld [vmem:[%s3996] sm:$0xff]
    %v3998 = vld [vmem:[%s3996 + $0x8] sm:$0xff]
    %v3999 = vld [vmem:[%s3996 + $0x10] sm:$0xff]
    %v4000 = vld [vmem:[%s3996 + $0x18] sm:$0xff]
    %v4001 = vld [vmem:[%s3996 + $0x20] sm:$0xff]
    %v4002 = vld [vmem:[%s3996 + $0x28] sm:$0xff]
    %v4003 = vld [vmem:[%s3996 + $0x30] sm:$0xff]
    %v4004 = vld [vmem:[%s3996 + $0x38] sm:$0xff]
    %v4006 = vsel %vm1108, %v3774, 0
    %4008 = vmatprep.subr.mxu0 0.0
    %4009 = vmatpush1.msra.mxu0 %v3997
    %4010 = vmatprep.subr.mxu0 0.0
    %4011 = vmatpush1.msra.mxu0 %v3998
    %4012 = vmatprep.subr.mxu0 0.0
    %4013 = vmatpush1.msra.mxu0 0.0
    %4014 = vmatprep.subr.mxu0 0.0
    %4015 = vmatpush1.msra.mxu0 0.0
    %4016 = vmatprep.subr.mxu0 0.0
    %4017 = vmatpush1.msra.mxu0 0.0
    %4018 = vmatprep.subr.mxu0 0.0
    %4019 = vmatpush1.msra.mxu0 0.0
    %4020 = vmatprep.subr.mxu0 0.0
    %4021 = vmatpush1.msra.mxu0 0.0
    %4022 = vmatprep.subr.mxu0 0.0
    %4023 = vmatpush1.msra.mxu0 0.0
    %4024 = vmatprep.subr.mxu0 0.0
    %4025 = vmatpush1.msra.mxu0 0.0
    %4026 = vmatprep.subr.mxu0 0.0
    %4027 = vmatpush1.msra.mxu0 0.0
    %4028 = vmatprep.subr.mxu0 0.0
    %4029 = vmatpush1.msra.mxu0 0.0
    %4030 = vmatprep.subr.mxu0 0.0
    %4031 = vmatpush1.msra.mxu0 0.0
    %4032 = vmatprep.subr.mxu0 0.0
    %4033 = vmatpush1.msra.mxu0 0.0
    %4034 = vmatprep.subr.mxu0 0.0
    %4035 = vmatpush1.msra.mxu0 0.0
    %4036 = vmatprep.subr.mxu0 0.0
    %4037 = vmatpush1.msra.mxu0 0.0
    %4038 = vmatprep.subr.mxu0 0.0
    %4039 = vmatpush1.msra.mxu0 0.0
    %4040 = vmatprep.subr.mxu0 0.0
    %4041 = vmatpush1.msra.mxu0 0.0
    %4042 = vmatprep.subr.mxu0 0.0
    %4043 = vmatpush1.msra.mxu0 0.0
    %4044 = vmatprep.subr.mxu0 0.0
    %4045 = vmatpush1.msra.mxu0 0.0
    %4046 = vmatprep.subr.mxu0 0.0
    %4047 = vmatpush1.msra.mxu0 0.0
    %4048 = vmatprep.subr.mxu0 0.0
    %4049 = vmatpush1.msra.mxu0 0.0
    %4050 = vmatprep.subr.mxu0 0.0
    %4051 = vmatpush1.msra.mxu0 0.0
    %4052 = vmatprep.subr.mxu0 0.0
    %4053 = vmatpush1.msra.mxu0 0.0
    %4054 = vmatprep.subr.mxu0 0.0
    %4055 = vmatpush1.msra.mxu0 0.0
    %4056 = vmatprep.subr.mxu0 0.0
    %4057 = vmatpush1.msra.mxu0 0.0
    %4058 = vmatprep.subr.mxu0 0.0
    %4059 = vmatpush1.msra.mxu0 0.0
    %4060 = vmatprep.subr.mxu0 0.0
    %4061 = vmatpush1.msra.mxu0 0.0
    %4062 = vmatprep.subr.mxu0 0.0
    %4063 = vmatpush1.msra.mxu0 0.0
    %4064 = vmatprep.subr.mxu0 0.0
    %4065 = vmatpush1.msra.mxu0 0.0
    %4066 = vmatprep.subr.mxu0 0.0
    %4067 = vmatpush1.msra.mxu0 0.0
    %4068 = vmatprep.subr.mxu0 0.0
    %4069 = vmatpush1.msra.mxu0 0.0
    %4070 = vmatprep.subr.mxu0 0.0
    %4071 = vmatpush1.msra.mxu0 0.0
    %4072 = vmatprep.mubr.f32.mxu0 0.0
    %4073 = vmatmul.mubr.f32.gmra.mrb[0].mxu0 %v4006
    %v4074 = vpop.f32.mrb[0].mxu0
    %v4075 = vadd.f32 0.0, %v4074
    %v4076 = vpop.f32.mrb[0].mxu0
    %4077 = vdwg.mxu0
    %v4079 = vsel %vm1108, %v3847, 0
    %4081 = vmatprep.subr.mxu0 0.0
    %4082 = vmatpush1.msra.mxu0 %v3999
    %4083 = vmatprep.subr.mxu0 0.0
    %4084 = vmatpush1.msra.mxu0 %v4000
    %4085 = vmatprep.subr.mxu0 0.0
    %4086 = vmatpush1.msra.mxu0 0.0
    %4087 = vmatprep.subr.mxu0 0.0
    %4088 = vmatpush1.msra.mxu0 0.0
    %4089 = vmatprep.subr.mxu0 0.0
    %4090 = vmatpush1.msra.mxu0 0.0
    %4091 = vmatprep.subr.mxu0 0.0
    %4092 = vmatpush1.msra.mxu0 0.0
    %4093 = vmatprep.subr.mxu0 0.0
    %4094 = vmatpush1.msra.mxu0 0.0
    %4095 = vmatprep.subr.mxu0 0.0
    %4096 = vmatpush1.msra.mxu0 0.0
    %4097 = vmatprep.subr.mxu0 0.0
    %4098 = vmatpush1.msra.mxu0 0.0
    %4099 = vmatprep.subr.mxu0 0.0
    %4100 = vmatpush1.msra.mxu0 0.0
    %4101 = vmatprep.subr.mxu0 0.0
    %4102 = vmatpush1.msra.mxu0 0.0
    %4103 = vmatprep.subr.mxu0 0.0
    %4104 = vmatpush1.msra.mxu0 0.0
    %4105 = vmatprep.subr.mxu0 0.0
    %4106 = vmatpush1.msra.mxu0 0.0
    %4107 = vmatprep.subr.mxu0 0.0
    %4108 = vmatpush1.msra.mxu0 0.0
    %4109 = vmatprep.subr.mxu0 0.0
    %4110 = vmatpush1.msra.mxu0 0.0
    %4111 = vmatprep.subr.mxu0 0.0
    %4112 = vmatpush1.msra.mxu0 0.0
    %4113 = vmatprep.subr.mxu0 0.0
    %4114 = vmatpush1.msra.mxu0 0.0
    %4115 = vmatprep.subr.mxu0 0.0
    %4116 = vmatpush1.msra.mxu0 0.0
    %4117 = vmatprep.subr.mxu0 0.0
    %4118 = vmatpush1.msra.mxu0 0.0
    %4119 = vmatprep.subr.mxu0 0.0
    %4120 = vmatpush1.msra.mxu0 0.0
    %4121 = vmatprep.subr.mxu0 0.0
    %4122 = vmatpush1.msra.mxu0 0.0
    %4123 = vmatprep.subr.mxu0 0.0
    %4124 = vmatpush1.msra.mxu0 0.0
    %4125 = vmatprep.subr.mxu0 0.0
    %4126 = vmatpush1.msra.mxu0 0.0
    %4127 = vmatprep.subr.mxu0 0.0
    %4128 = vmatpush1.msra.mxu0 0.0
    %4129 = vmatprep.subr.mxu0 0.0
    %4130 = vmatpush1.msra.mxu0 0.0
    %4131 = vmatprep.subr.mxu0 0.0
    %4132 = vmatpush1.msra.mxu0 0.0
    %4133 = vmatprep.subr.mxu0 0.0
    %4134 = vmatpush1.msra.mxu0 0.0
    %4135 = vmatprep.subr.mxu0 0.0
    %4136 = vmatpush1.msra.mxu0 0.0
    %4137 = vmatprep.subr.mxu0 0.0
    %4138 = vmatpush1.msra.mxu0 0.0
    %4139 = vmatprep.subr.mxu0 0.0
    %4140 = vmatpush1.msra.mxu0 0.0
    %4141 = vmatprep.subr.mxu0 0.0
    %4142 = vmatpush1.msra.mxu0 0.0
    %4143 = vmatprep.subr.mxu0 0.0
    %4144 = vmatpush1.msra.mxu0 0.0
    %4145 = vmatprep.mubr.f32.mxu0 0.0
    %4146 = vmatmul.mubr.f32.gmra.mrb[0].mxu0 %v4079
    %v4147 = vpop.f32.mrb[0].mxu0
    %v4148 = vadd.f32 0.0, %v4147
    %v4149 = vpop.f32.mrb[0].mxu0
    %4150 = vdwg.mxu0
    %v4152 = vsel %vm1108, %v3920, 0
    %4154 = vmatprep.subr.mxu0 0.0
    %4155 = vmatpush1.msra.mxu0 %v4001
    %4156 = vmatprep.subr.mxu0 0.0
    %4157 = vmatpush1.msra.mxu0 %v4002
    %4158 = vmatprep.subr.mxu0 0.0
    %4159 = vmatpush1.msra.mxu0 0.0
    %4160 = vmatprep.subr.mxu0 0.0
    %4161 = vmatpush1.msra.mxu0 0.0
    %4162 = vmatprep.subr.mxu0 0.0
    %4163 = vmatpush1.msra.mxu0 0.0
    %4164 = vmatprep.subr.mxu0 0.0
    %4165 = vmatpush1.msra.mxu0 0.0
    %4166 = vmatprep.subr.mxu0 0.0
    %4167 = vmatpush1.msra.mxu0 0.0
    %4168 = vmatprep.subr.mxu0 0.0
    %4169 = vmatpush1.msra.mxu0 0.0
    %4170 = vmatprep.subr.mxu0 0.0
    %4171 = vmatpush1.msra.mxu0 0.0
    %4172 = vmatprep.subr.mxu0 0.0
    %4173 = vmatpush1.msra.mxu0 0.0
    %4174 = vmatprep.subr.mxu0 0.0
    %4175 = vmatpush1.msra.mxu0 0.0
    %4176 = vmatprep.subr.mxu0 0.0
    %4177 = vmatpush1.msra.mxu0 0.0
    %4178 = vmatprep.subr.mxu0 0.0
    %4179 = vmatpush1.msra.mxu0 0.0
    %4180 = vmatprep.subr.mxu0 0.0
    %4181 = vmatpush1.msra.mxu0 0.0
    %4182 = vmatprep.subr.mxu0 0.0
    %4183 = vmatpush1.msra.mxu0 0.0
    %4184 = vmatprep.subr.mxu0 0.0
    %4185 = vmatpush1.msra.mxu0 0.0
    %4186 = vmatprep.subr.mxu0 0.0
    %4187 = vmatpush1.msra.mxu0 0.0
    %4188 = vmatprep.subr.mxu0 0.0
    %4189 = vmatpush1.msra.mxu0 0.0
    %4190 = vmatprep.subr.mxu0 0.0
    %4191 = vmatpush1.msra.mxu0 0.0
    %4192 = vmatprep.subr.mxu0 0.0
    %4193 = vmatpush1.msra.mxu0 0.0
    %4194 = vmatprep.subr.mxu0 0.0
    %4195 = vmatpush1.msra.mxu0 0.0
    %4196 = vmatprep.subr.mxu0 0.0
    %4197 = vmatpush1.msra.mxu0 0.0
    %4198 = vmatprep.subr.mxu0 0.0
    %4199 = vmatpush1.msra.mxu0 0.0
    %4200 = vmatprep.subr.mxu0 0.0
    %4201 = vmatpush1.msra.mxu0 0.0
    %4202 = vmatprep.subr.mxu0 0.0
    %4203 = vmatpush1.msra.mxu0 0.0
    %4204 = vmatprep.subr.mxu0 0.0
    %4205 = vmatpush1.msra.mxu0 0.0
    %4206 = vmatprep.subr.mxu0 0.0
    %4207 = vmatpush1.msra.mxu0 0.0
    %4208 = vmatprep.subr.mxu0 0.0
    %4209 = vmatpush1.msra.mxu0 0.0
    %4210 = vmatprep.subr.mxu0 0.0
    %4211 = vmatpush1.msra.mxu0 0.0
    %4212 = vmatprep.subr.mxu0 0.0
    %4213 = vmatpush1.msra.mxu0 0.0
    %4214 = vmatprep.subr.mxu0 0.0
    %4215 = vmatpush1.msra.mxu0 0.0
    %4216 = vmatprep.subr.mxu0 0.0
    %4217 = vmatpush1.msra.mxu0 0.0
    %4218 = vmatprep.mubr.f32.mxu0 0.0
    %4219 = vmatmul.mubr.f32.gmra.mrb[0].mxu0 %v4152
    %v4220 = vpop.f32.mrb[0].mxu0
    %v4221 = vadd.f32 0.0, %v4220
    %v4222 = vpop.f32.mrb[0].mxu0
    %4223 = vdwg.mxu0
    %v4225 = vsel %vm1108, %v3993, 0
    %4227 = vmatprep.subr.mxu0 0.0
    %4228 = vmatpush1.msra.mxu0 %v4003
    %4229 = vmatprep.subr.mxu0 0.0
    %4230 = vmatpush1.msra.mxu0 %v4004
    %4231 = vmatprep.subr.mxu0 0.0
    %4232 = vmatpush1.msra.mxu0 0.0
    %4233 = vmatprep.subr.mxu0 0.0
    %4234 = vmatpush1.msra.mxu0 0.0
    %4235 = vmatprep.subr.mxu0 0.0
    %4236 = vmatpush1.msra.mxu0 0.0
    %4237 = vmatprep.subr.mxu0 0.0
    %4238 = vmatpush1.msra.mxu0 0.0
    %4239 = vmatprep.subr.mxu0 0.0
    %4240 = vmatpush1.msra.mxu0 0.0
    %4241 = vmatprep.subr.mxu0 0.0
    %4242 = vmatpush1.msra.mxu0 0.0
    %4243 = vmatprep.subr.mxu0 0.0
    %4244 = vmatpush1.msra.mxu0 0.0
    %4245 = vmatprep.subr.mxu0 0.0
    %4246 = vmatpush1.msra.mxu0 0.0
    %4247 = vmatprep.subr.mxu0 0.0
    %4248 = vmatpush1.msra.mxu0 0.0
    %4249 = vmatprep.subr.mxu0 0.0
    %4250 = vmatpush1.msra.mxu0 0.0
    %4251 = vmatprep.subr.mxu0 0.0
    %4252 = vmatpush1.msra.mxu0 0.0
    %4253 = vmatprep.subr.mxu0 0.0
    %4254 = vmatpush1.msra.mxu0 0.0
    %4255 = vmatprep.subr.mxu0 0.0
    %4256 = vmatpush1.msra.mxu0 0.0
    %4257 = vmatprep.subr.mxu0 0.0
    %4258 = vmatpush1.msra.mxu0 0.0
    %4259 = vmatprep.subr.mxu0 0.0
    %4260 = vmatpush1.msra.mxu0 0.0
    %4261 = vmatprep.subr.mxu0 0.0
    %4262 = vmatpush1.msra.mxu0 0.0
    %4263 = vmatprep.subr.mxu0 0.0
    %4264 = vmatpush1.msra.mxu0 0.0
    %4265 = vmatprep.subr.mxu0 0.0
    %4266 = vmatpush1.msra.mxu0 0.0
    %4267 = vmatprep.subr.mxu0 0.0
    %4268 = vmatpush1.msra.mxu0 0.0
    %4269 = vmatprep.subr.mxu0 0.0
    %4270 = vmatpush1.msra.mxu0 0.0
    %4271 = vmatprep.subr.mxu0 0.0
    %4272 = vmatpush1.msra.mxu0 0.0
    %4273 = vmatprep.subr.mxu0 0.0
    %4274 = vmatpush1.msra.mxu0 0.0
    %4275 = vmatprep.subr.mxu0 0.0
    %4276 = vmatpush1.msra.mxu0 0.0
    %4277 = vmatprep.subr.mxu0 0.0
    %4278 = vmatpush1.msra.mxu0 0.0
    %4279 = vmatprep.subr.mxu0 0.0
    %4280 = vmatpush1.msra.mxu0 0.0
    %4281 = vmatprep.subr.mxu0 0.0
    %4282 = vmatpush1.msra.mxu0 0.0
    %4283 = vmatprep.subr.mxu0 0.0
    %4284 = vmatpush1.msra.mxu0 0.0
    %4285 = vmatprep.subr.mxu0 0.0
    %4286 = vmatpush1.msra.mxu0 0.0
    %4287 = vmatprep.subr.mxu0 0.0
    %4288 = vmatpush1.msra.mxu0 0.0
    %4289 = vmatprep.subr.mxu0 0.0
    %4290 = vmatpush1.msra.mxu0 0.0
    %4291 = vmatprep.mubr.f32.mxu0 0.0
    %4292 = vmatmul.mubr.f32.gmra.mrb[0].mxu0 %v4225
    %v4293 = vpop.f32.mrb[0].mxu0
    %v4294 = vadd.f32 0.0, %v4293
    %v4295 = vpop.f32.mrb[0].mxu0
    %4296 = vdwg.mxu0
    %v4297 = vsel %vm82, %v4075, 0.0
    %v4298 = vsel %vm82, %v4148, 0.0
    %v4299 = vadd.f32 %v4297, %v4298
    %v4300 = vsel %vm82, %v4221, 0.0
    %v4301 = vsel %vm82, %v4294, 0.0
    %v4302 = vadd.f32 %v4300, %v4301
    %s4303 = scalar_lea.vmem %s11, 1
    %v4304 = vld [vmem:[%s4303] sm:$0x1]
    %v4306 = vlaneseq
    %v4307 = vshrl.u32 %v4306, 7
    %v4308 = vsub.s32 0, %v4307
    %v4309 = vrot.slane %v4304, %v4308
    %v4311 = vadd.f32 %v4299, %v4309
    %v4312 = vadd.f32 %v4302, %v4309
    %v4313 = vadd.f32 %v4311, %v2362
    %v4314 = vadd.f32 %v4312, %v2363
    %s4315 = scalar_lea.vmem %s12, 1
    %v4316 = vld [vmem:[%s4315] sm:$0x1]
    %s4317 = scalar_lea.vmem %s13, 1
    %v4318 = vld [vmem:[%s4317] sm:$0x1]
    %v4319 = vsel %vm82, %v4313, 0.0
    %4320 = vadd.xlane.f32.xlu0 %v4319
    %v4321 = vpop.xlane.xlu0 %4320
    %v4322 = vsel %vm82, %v4314, 0.0
    %4323 = vadd.xlane.f32.xlu0 %v4322
    %v4324 = vpop.xlane.xlu0 %4323
    %v4325 = vmul.f32 %v4321, %v89
    %v4326 = vmul.f32 %v4324, %v89
    %v4327 = vsub.f32 %v4313, %v4325
    %v4328 = vsub.f32 %v4314, %v4326
    %v4329 = vmul.f32 %v4327, %v4327
    %v4330 = vmul.f32 %v4328, %v4328
    %v4331 = vsel %vm82, %v4329, 0.0
    %4332 = vadd.xlane.f32.xlu0 %v4331
    %v4333 = vpop.xlane.xlu0 %4332
    %v4334 = vsel %vm82, %v4330, 0.0
    %4335 = vadd.xlane.f32.xlu0 %v4334
    %v4336 = vpop.xlane.xlu0 %4335
    %v4337 = vmul.f32 %v4333, %v89
    %v4338 = vmul.f32 %v4336, %v89
    %v4339 = vadd.f32 %v4337, 1e-12
    %v4340 = vadd.f32 %v4338, 1e-12
    %v4341 = vrsqrt.pop %v4339
    %v4342 = vrsqrt.pop %v4340
    %v4343 = vmul.f32 %v4327, %v4341
    %v4344 = vmul.f32 %v4328, %v4342
    %v4346 = vlaneseq
    %v4347 = vshrl.u32 %v4346, 7
    %v4348 = vsub.s32 0, %v4347
    %v4349 = vrot.slane %v4316, %v4348
    %v4351 = vmul.f32 %v4343, %v4349
    %v4352 = vmul.f32 %v4344, %v4349
    %v4354 = vlaneseq
    %v4355 = vshrl.u32 %v4354, 7
    %v4356 = vsub.s32 0, %v4355
    %v4357 = vrot.slane %v4318, %v4356
    %v4359 = vadd.f32 %v4351, %v4357
    %v4360 = vadd.f32 %v4352, %v4357
    %s4361 = scalar_lea.vmem %s14, 32
    %v4362 = vld [vmem:[%s4361] sm:$0xff]
    %v4363 = vld [vmem:[%s4361 + $0x8] sm:$0xff]
    %v4364 = vld [vmem:[%s4361 + $0x10] sm:$0xff]
    %v4365 = vld [vmem:[%s4361 + $0x18] sm:$0xff]
    %s4366 = scalar_lea.vmem %s15, 1
    %v4367 = vld [vmem:[%s4366] sm:$0x1]
    %v4369 = vlaneseq
    %v4370 = vshrl.u32 %v4369, 7
    %v4371 = vsub.s32 0, %v4370
    %v4372 = vrot.slane %v4367, %v4371
    %v4375 = vsel %vm82, %v4359, 0
    %v4378 = vsel %vm82, %v4360, 0
    %4380 = vmatprep.subr.mxu0 0.0
    %4381 = vmatpush1.msra.mxu0 %v4362
    %4382 = vmatprep.subr.mxu0 0.0
    %4383 = vmatpush1.msra.mxu0 %v4363
    %4384 = vmatprep.subr.mxu0 0.0
    %4385 = vmatpush1.msra.mxu0 %v4364
    %4386 = vmatprep.subr.mxu0 0.0
    %4387 = vmatpush1.msra.mxu0 %v4365
    %4388 = vmatprep.subr.mxu0 0.0
    %4389 = vmatpush1.msra.mxu0 0.0
    %4390 = vmatprep.subr.mxu0 0.0
    %4391 = vmatpush1.msra.mxu0 0.0
    %4392 = vmatprep.subr.mxu0 0.0
    %4393 = vmatpush1.msra.mxu0 0.0
    %4394 = vmatprep.subr.mxu0 0.0
    %4395 = vmatpush1.msra.mxu0 0.0
    %4396 = vmatprep.subr.mxu0 0.0
    %4397 = vmatpush1.msra.mxu0 0.0
    %4398 = vmatprep.subr.mxu0 0.0
    %4399 = vmatpush1.msra.mxu0 0.0
    %4400 = vmatprep.subr.mxu0 0.0
    %4401 = vmatpush1.msra.mxu0 0.0
    %4402 = vmatprep.subr.mxu0 0.0
    %4403 = vmatpush1.msra.mxu0 0.0
    %4404 = vmatprep.subr.mxu0 0.0
    %4405 = vmatpush1.msra.mxu0 0.0
    %4406 = vmatprep.subr.mxu0 0.0
    %4407 = vmatpush1.msra.mxu0 0.0
    %4408 = vmatprep.subr.mxu0 0.0
    %4409 = vmatpush1.msra.mxu0 0.0
    %4410 = vmatprep.subr.mxu0 0.0
    %4411 = vmatpush1.msra.mxu0 0.0
    %4412 = vmatprep.subr.mxu0 0.0
    %4413 = vmatpush1.msra.mxu0 0.0
    %4414 = vmatprep.subr.mxu0 0.0
    %4415 = vmatpush1.msra.mxu0 0.0
    %4416 = vmatprep.subr.mxu0 0.0
    %4417 = vmatpush1.msra.mxu0 0.0
    %4418 = vmatprep.subr.mxu0 0.0
    %4419 = vmatpush1.msra.mxu0 0.0
    %4420 = vmatprep.subr.mxu0 0.0
    %4421 = vmatpush1.msra.mxu0 0.0
    %4422 = vmatprep.subr.mxu0 0.0
    %4423 = vmatpush1.msra.mxu0 0.0
    %4424 = vmatprep.subr.mxu0 0.0
    %4425 = vmatpush1.msra.mxu0 0.0
    %4426 = vmatprep.subr.mxu0 0.0
    %4427 = vmatpush1.msra.mxu0 0.0
    %4428 = vmatprep.subr.mxu0 0.0
    %4429 = vmatpush1.msra.mxu0 0.0
    %4430 = vmatprep.subr.mxu0 0.0
    %4431 = vmatpush1.msra.mxu0 0.0
    %4432 = vmatprep.subr.mxu0 0.0
    %4433 = vmatpush1.msra.mxu0 0.0
    %4434 = vmatprep.subr.mxu0 0.0
    %4435 = vmatpush1.msra.mxu0 0.0
    %4436 = vmatprep.subr.mxu0 0.0
    %4437 = vmatpush1.msra.mxu0 0.0
    %4438 = vmatprep.subr.mxu0 0.0
    %4439 = vmatpush1.msra.mxu0 0.0
    %4440 = vmatprep.subr.mxu0 0.0
    %4441 = vmatpush1.msra.mxu0 0.0
    %4442 = vmatprep.subr.mxu0 0.0
    %4443 = vmatpush1.msra.mxu0 0.0
    %4444 = vmatprep.mubr.f32.mxu0 0.0
    %4445 = vmatmul.mubr.f32.gmra.mrb[0].mxu0 %v4375
    %v4446 = vpop.f32.mrb[0].mxu0
    %v4447 = vadd.f32 %v4372, %v4446
    %v4448 = vpop.f32.mrb[0].mxu0
    %4449 = vmatprep.mubr.f32.mxu0 0.0
    %4450 = vmatmul.mubr.f32.gmra.mrb[0].mxu0 %v4378
    %v4451 = vpop.f32.mrb[0].mxu0
    %v4452 = vadd.f32 %v4372, %v4451
    %v4453 = vpop.f32.mrb[0].mxu0
    %4454 = vdwg.mxu0
    %v4455 = vmul.f32 %v4447, 0.5
    %v4456 = vmul.f32 %v4452, 0.5
    %v4457 = vmul.f32 %v4447, 0.70710677
    %v4458 = vmul.f32 %v4452, 0.70710677
    %v4459 = verf.f32.pop %v4457
    %v4460 = verf.f32.pop %v4458
    %v4461 = vadd.f32 %v4459, 1.0
    %v4462 = vadd.f32 %v4460, 1.0
    %v4463 = vmul.f32 %v4455, %v4461
    %v4464 = vmul.f32 %v4456, %v4462
    %s4465 = scalar_lea.vmem %s16, 64
    %v4466 = vld [vmem:[%s4465] sm:$0xff]
    %v4467 = vld [vmem:[%s4465 + $0x8] sm:$0xff]
    %v4468 = vld [vmem:[%s4465 + $0x10] sm:$0xff]
    %v4469 = vld [vmem:[%s4465 + $0x18] sm:$0xff]
    %v4470 = vld [vmem:[%s4465 + $0x20] sm:$0xff]
    %v4471 = vld [vmem:[%s4465 + $0x28] sm:$0xff]
    %v4472 = vld [vmem:[%s4465 + $0x30] sm:$0xff]
    %v4473 = vld [vmem:[%s4465 + $0x38] sm:$0xff]
    %s4474 = scalar_lea.vmem %s17, 1
    %v4475 = vld [vmem:[%s4474] sm:$0x1]
    %v4477 = vlaneseq
    %v4478 = vshrl.u32 %v4477, 7
    %v4479 = vsub.s32 0, %v4478
    %v4480 = vrot.slane %v4475, %v4479
    %v4483 = vsel %vm2236, %v4463, 0
    %v4486 = vsel %vm2236, %v4464, 0
    %4488 = vmatprep.subr.mxu0 0.0
    %4489 = vmatpush1.msra.mxu0 %v4466
    %4490 = vmatprep.subr.mxu0 0.0
    %4491 = vmatpush1.msra.mxu0 %v4467
    %4492 = vmatprep.subr.mxu0 0.0
    %4493 = vmatpush1.msra.mxu0 %v4468
    %4494 = vmatprep.subr.mxu0 0.0
    %4495 = vmatpush1.msra.mxu0 %v4469
    %4496 = vmatprep.subr.mxu0 0.0
    %4497 = vmatpush1.msra.mxu0 %v4470
    %4498 = vmatprep.subr.mxu0 0.0
    %4499 = vmatpush1.msra.mxu0 %v4471
    %4500 = vmatprep.subr.mxu0 0.0
    %4501 = vmatpush1.msra.mxu0 %v4472
    %4502 = vmatprep.subr.mxu0 0.0
    %4503 = vmatpush1.msra.mxu0 %v4473
    %4504 = vmatprep.subr.mxu0 0.0
    %4505 = vmatpush1.msra.mxu0 0.0
    %4506 = vmatprep.subr.mxu0 0.0
    %4507 = vmatpush1.msra.mxu0 0.0
    %4508 = vmatprep.subr.mxu0 0.0
    %4509 = vmatpush1.msra.mxu0 0.0
    %4510 = vmatprep.subr.mxu0 0.0
    %4511 = vmatpush1.msra.mxu0 0.0
    %4512 = vmatprep.subr.mxu0 0.0
    %4513 = vmatpush1.msra.mxu0 0.0
    %4514 = vmatprep.subr.mxu0 0.0
    %4515 = vmatpush1.msra.mxu0 0.0
    %4516 = vmatprep.subr.mxu0 0.0
    %4517 = vmatpush1.msra.mxu0 0.0
    %4518 = vmatprep.subr.mxu0 0.0
    %4519 = vmatpush1.msra.mxu0 0.0
    %4520 = vmatprep.subr.mxu0 0.0
    %4521 = vmatpush1.msra.mxu0 0.0
    %4522 = vmatprep.subr.mxu0 0.0
    %4523 = vmatpush1.msra.mxu0 0.0
    %4524 = vmatprep.subr.mxu0 0.0
    %4525 = vmatpush1.msra.mxu0 0.0
    %4526 = vmatprep.subr.mxu0 0.0
    %4527 = vmatpush1.msra.mxu0 0.0
    %4528 = vmatprep.subr.mxu0 0.0
    %4529 = vmatpush1.msra.mxu0 0.0
    %4530 = vmatprep.subr.mxu0 0.0
    %4531 = vmatpush1.msra.mxu0 0.0
    %4532 = vmatprep.subr.mxu0 0.0
    %4533 = vmatpush1.msra.mxu0 0.0
    %4534 = vmatprep.subr.mxu0 0.0
    %4535 = vmatpush1.msra.mxu0 0.0
    %4536 = vmatprep.subr.mxu0 0.0
    %4537 = vmatpush1.msra.mxu0 0.0
    %4538 = vmatprep.subr.mxu0 0.0
    %4539 = vmatpush1.msra.mxu0 0.0
    %4540 = vmatprep.subr.mxu0 0.0
    %4541 = vmatpush1.msra.mxu0 0.0
    %4542 = vmatprep.subr.mxu0 0.0
    %4543 = vmatpush1.msra.mxu0 0.0
    %4544 = vmatprep.subr.mxu0 0.0
    %4545 = vmatpush1.msra.mxu0 0.0
    %4546 = vmatprep.subr.mxu0 0.0
    %4547 = vmatpush1.msra.mxu0 0.0
    %4548 = vmatprep.subr.mxu0 0.0
    %4549 = vmatpush1.msra.mxu0 0.0
    %4550 = vmatprep.subr.mxu0 0.0
    %4551 = vmatpush1.msra.mxu0 0.0
    %4552 = vmatprep.mubr.f32.mxu0 0.0
    %4553 = vmatmul.mubr.f32.gmra.mrb[0].mxu0 %v4483
    %v4554 = vpop.f32.mrb[0].mxu0
    %v4555 = vadd.f32 %v4480, %v4554
    %v4556 = vpop.f32.mrb[0].mxu0
    %4557 = vmatprep.mubr.f32.mxu0 0.0
    %4558 = vmatmul.mubr.f32.gmra.mrb[0].mxu0 %v4486
    %v4559 = vpop.f32.mrb[0].mxu0
    %v4560 = vadd.f32 %v4480, %v4559
    %v4561 = vpop.f32.mrb[0].mxu0
    %4562 = vdwg.mxu0
    %v4563 = vadd.f32 %v4555, %v4359
    %v4564 = vadd.f32 %v4560, %v4360
    %s4565 = scalar_lea.vmem %s18, 1
    %v4566 = vld [vmem:[%s4565] sm:$0x1]
    %s4567 = scalar_lea.vmem %s19, 1
    %v4568 = vld [vmem:[%s4567] sm:$0x1]
    %v4569 = vsel %vm82, %v4563, 0.0
    %4570 = vadd.xlane.f32.xlu0 %v4569
    %v4571 = vpop.xlane.xlu0 %4570
    %v4572 = vsel %vm82, %v4564, 0.0
    %4573 = vadd.xlane.f32.xlu0 %v4572
    %v4574 = vpop.xlane.xlu0 %4573
    %v4575 = vmul.f32 %v4571, %v89
    %v4576 = vmul.f32 %v4574, %v89
    %v4577 = vsub.f32 %v4563, %v4575
    %v4578 = vsub.f32 %v4564, %v4576
    %v4579 = vmul.f32 %v4577, %v4577
    %v4580 = vmul.f32 %v4578, %v4578
    %v4581 = vsel %vm82, %v4579, 0.0
    %4582 = vadd.xlane.f32.xlu0 %v4581
    %v4583 = vpop.xlane.xlu0 %4582
    %v4584 = vsel %vm82, %v4580, 0.0
    %4585 = vadd.xlane.f32.xlu0 %v4584
    %v4586 = vpop.xlane.xlu0 %4585
    %v4587 = vmul.f32 %v4583, %v89
    %v4588 = vmul.f32 %v4586, %v89
    %v4589 = vadd.f32 %v4587, 1e-12
    %v4590 = vadd.f32 %v4588, 1e-12
    %v4591 = vrsqrt.pop %v4589
    %v4592 = vrsqrt.pop %v4590
    %v4593 = vmul.f32 %v4577, %v4591
    %v4594 = vmul.f32 %v4578, %v4592
    %v4596 = vlaneseq
    %v4597 = vshrl.u32 %v4596, 7
    %v4598 = vsub.s32 0, %v4597
    %v4599 = vrot.slane %v4566, %v4598
    %v4601 = vmul.f32 %v4593, %v4599
    %v4602 = vmul.f32 %v4594, %v4599
    %v4604 = vlaneseq
    %v4605 = vshrl.u32 %v4604, 7
    %v4606 = vsub.s32 0, %v4605
    %v4607 = vrot.slane %v4568, %v4606
    %v4609 = vadd.f32 %v4601, %v4607
    %v4610 = vadd.f32 %v4602, %v4607
    %v4611 = vld [vmem:[%s20] sm:$0xff]
    %v4612 = vld [vmem:[%s20 + $0x8] sm:$0xff]
    %v4613 = vld [vmem:[%s20 + $0x10] sm:$0xff]
    %v4614 = vld [vmem:[%s20 + $0x18] sm:$0xff]
    %v4615 = vld [vmem:[%s21] sm:$0x1]
    %v4617 = vlaneseq
    %v4618 = vshrl.u32 %v4617, 7
    %v4619 = vsub.s32 0, %v4618
    %v4620 = vrot.slane %v4615, %v4619
    %v4624 = vrot.slane %v4610, 7
    %vm4625 = vcmask 1041409
    %v4626 = vsel %vm4625, %v4624, %v4609
    %v4627 = vsel %vm82, %v4626, 0
    %4629 = vmatprep.subr.mxu0 0.0
    %4630 = vmatpush1.msra.mxu0 %v4611
    %4631 = vmatprep.subr.mxu0 0.0
    %4632 = vmatpush1.msra.mxu0 %v4612
    %4633 = vmatprep.subr.mxu0 0.0
    %4634 = vmatpush1.msra.mxu0 %v4613
    %4635 = vmatprep.subr.mxu0 0.0
    %4636 = vmatpush1.msra.mxu0 %v4614
    %4637 = vmatprep.subr.mxu0 0.0
    %4638 = vmatpush1.msra.mxu0 0.0
    %4639 = vmatprep.subr.mxu0 0.0
    %4640 = vmatpush1.msra.mxu0 0.0
    %4641 = vmatprep.subr.mxu0 0.0
    %4642 = vmatpush1.msra.mxu0 0.0
    %4643 = vmatprep.subr.mxu0 0.0
    %4644 = vmatpush1.msra.mxu0 0.0
    %4645 = vmatprep.subr.mxu0 0.0
    %4646 = vmatpush1.msra.mxu0 0.0
    %4647 = vmatprep.subr.mxu0 0.0
    %4648 = vmatpush1.msra.mxu0 0.0
    %4649 = vmatprep.subr.mxu0 0.0
    %4650 = vmatpush1.msra.mxu0 0.0
    %4651 = vmatprep.subr.mxu0 0.0
    %4652 = vmatpush1.msra.mxu0 0.0
    %4653 = vmatprep.subr.mxu0 0.0
    %4654 = vmatpush1.msra.mxu0 0.0
    %4655 = vmatprep.subr.mxu0 0.0
    %4656 = vmatpush1.msra.mxu0 0.0
    %4657 = vmatprep.subr.mxu0 0.0
    %4658 = vmatpush1.msra.mxu0 0.0
    %4659 = vmatprep.subr.mxu0 0.0
    %4660 = vmatpush1.msra.mxu0 0.0
    %4661 = vmatprep.subr.mxu0 0.0
    %4662 = vmatpush1.msra.mxu0 0.0
    %4663 = vmatprep.subr.mxu0 0.0
    %4664 = vmatpush1.msra.mxu0 0.0
    %4665 = vmatprep.subr.mxu0 0.0
    %4666 = vmatpush1.msra.mxu0 0.0
    %4667 = vmatprep.subr.mxu0 0.0
    %4668 = vmatpush1.msra.mxu0 0.0
    %4669 = vmatprep.subr.mxu0 0.0
    %4670 = vmatpush1.msra.mxu0 0.0
    %4671 = vmatprep.subr.mxu0 0.0
    %4672 = vmatpush1.msra.mxu0 0.0
    %4673 = vmatprep.subr.mxu0 0.0
    %4674 = vmatpush1.msra.mxu0 0.0
    %4675 = vmatprep.subr.mxu0 0.0
    %4676 = vmatpush1.msra.mxu0 0.0
    %4677 = vmatprep.subr.mxu0 0.0
    %4678 = vmatpush1.msra.mxu0 0.0
    %4679 = vmatprep.subr.mxu0 0.0
    %4680 = vmatpush1.msra.mxu0 0.0
    %4681 = vmatprep.subr.mxu0 0.0
    %4682 = vmatpush1.msra.mxu0 0.0
    %4683 = vmatprep.subr.mxu0 0.0
    %4684 = vmatpush1.msra.mxu0 0.0
    %4685 = vmatprep.subr.mxu0 0.0
    %4686 = vmatpush1.msra.mxu0 0.0
    %4687 = vmatprep.subr.mxu0 0.0
    %4688 = vmatpush1.msra.mxu0 0.0
    %4689 = vmatprep.subr.mxu0 0.0
    %4690 = vmatpush1.msra.mxu0 0.0
    %4691 = vmatprep.subr.mxu0 0.0
    %4692 = vmatpush1.msra.mxu0 0.0
    %4693 = vmatprep.mubr.f32.mxu0 0.0
    %4694 = vmatmul.mubr.f32.gmra.mrb[0].mxu0 %v4627
    %v4695 = vpop.f32.mrb[0].mxu0
    %v4696 = vadd.f32 %v4620, %v4695
    %v4697 = vpop.f32.mrb[0].mxu0
    %4698 = vdwg.mxu0
    %v4699 = vtanh.pop %v4696
    %v4700 = vld [vmem:[%s22] sm:$0xff]
    %v4701 = vld [vmem:[%s22 + $0x8] sm:$0xff]
    %v4702 = vld [vmem:[%s22 + $0x10] sm:$0xff]
    %v4703 = vld [vmem:[%s22 + $0x18] sm:$0xff]
    %v4704 = vld [vmem:[%s23] sm:$0x1]
    %v4706 = vlaneseq
    %v4707 = vshrl.u32 %v4706, 7
    %v4708 = vsub.s32 0, %v4707
    %v4709 = vrot.slane %v4704, %v4708
    %v4712 = vsel %vm82, %v4699, 0
    %4714 = vmatprep.subr.mxu0 0.0
    %4715 = vmatpush1.msra.mxu0 %v4700
    %4716 = vmatprep.subr.mxu0 0.0
    %4717 = vmatpush1.msra.mxu0 %v4701
    %4718 = vmatprep.subr.mxu0 0.0
    %4719 = vmatpush1.msra.mxu0 %v4702
    %4720 = vmatprep.subr.mxu0 0.0
    %4721 = vmatpush1.msra.mxu0 %v4703
    %4722 = vmatprep.subr.mxu0 0.0
    %4723 = vmatpush1.msra.mxu0 0.0
    %4724 = vmatprep.subr.mxu0 0.0
    %4725 = vmatpush1.msra.mxu0 0.0
    %4726 = vmatprep.subr.mxu0 0.0
    %4727 = vmatpush1.msra.mxu0 0.0
    %4728 = vmatprep.subr.mxu0 0.0
    %4729 = vmatpush1.msra.mxu0 0.0
    %4730 = vmatprep.subr.mxu0 0.0
    %4731 = vmatpush1.msra.mxu0 0.0
    %4732 = vmatprep.subr.mxu0 0.0
    %4733 = vmatpush1.msra.mxu0 0.0
    %4734 = vmatprep.subr.mxu0 0.0
    %4735 = vmatpush1.msra.mxu0 0.0
    %4736 = vmatprep.subr.mxu0 0.0
    %4737 = vmatpush1.msra.mxu0 0.0
    %4738 = vmatprep.subr.mxu0 0.0
    %4739 = vmatpush1.msra.mxu0 0.0
    %4740 = vmatprep.subr.mxu0 0.0
    %4741 = vmatpush1.msra.mxu0 0.0
    %4742 = vmatprep.subr.mxu0 0.0
    %4743 = vmatpush1.msra.mxu0 0.0
    %4744 = vmatprep.subr.mxu0 0.0
    %4745 = vmatpush1.msra.mxu0 0.0
    %4746 = vmatprep.subr.mxu0 0.0
    %4747 = vmatpush1.msra.mxu0 0.0
    %4748 = vmatprep.subr.mxu0 0.0
    %4749 = vmatpush1.msra.mxu0 0.0
    %4750 = vmatprep.subr.mxu0 0.0
    %4751 = vmatpush1.msra.mxu0 0.0
    %4752 = vmatprep.subr.mxu0 0.0
    %4753 = vmatpush1.msra.mxu0 0.0
    %4754 = vmatprep.subr.mxu0 0.0
    %4755 = vmatpush1.msra.mxu0 0.0
    %4756 = vmatprep.subr.mxu0 0.0
    %4757 = vmatpush1.msra.mxu0 0.0
    %4758 = vmatprep.subr.mxu0 0.0
    %4759 = vmatpush1.msra.mxu0 0.0
    %4760 = vmatprep.subr.mxu0 0.0
    %4761 = vmatpush1.msra.mxu0 0.0
    %4762 = vmatprep.subr.mxu0 0.0
    %4763 = vmatpush1.msra.mxu0 0.0
    %4764 = vmatprep.subr.mxu0 0.0
    %4765 = vmatpush1.msra.mxu0 0.0
    %4766 = vmatprep.subr.mxu0 0.0
    %4767 = vmatpush1.msra.mxu0 0.0
    %4768 = vmatprep.subr.mxu0 0.0
    %4769 = vmatpush1.msra.mxu0 0.0
    %4770 = vmatprep.subr.mxu0 0.0
    %4771 = vmatpush1.msra.mxu0 0.0
    %4772 = vmatprep.subr.mxu0 0.0
    %4773 = vmatpush1.msra.mxu0 0.0
    %4774 = vmatprep.subr.mxu0 0.0
    %4775 = vmatpush1.msra.mxu0 0.0
    %4776 = vmatprep.subr.mxu0 0.0
    %4777 = vmatpush1.msra.mxu0 0.0
    %4778 = vmatprep.mubr.f32.mxu0 0.0
    %4779 = vmatmul.mubr.f32.gmra.mrb[0].mxu0 %v4712
    %v4780 = vpop.f32.mrb[0].mxu0
    %v4781 = vadd.f32 %v4709, %v4780
    %v4782 = vpop.f32.mrb[0].mxu0
    %4783 = vdwg.mxu0
    %vm4784 = vcmask 1041408
    %v4785 = vsel %vm4784, %v4781, -inf
    %4786 = vmax.xlane.f32.xlu0 %v4785
    %v4787 = vpop.xlane.xlu0 %4786
    %v4788 = vsub.f32 %v4781, %v4787
    %v4789 = vmul.f32 %v4788, 1.442695
    %v4790 = vpow.pop %v4789
    %v4791 = vsel %vm4784, %v4790, 0.0
    %4792 = vadd.xlane.f32.xlu0 %v4791
    %v4793 = vpop.xlane.xlu0 %4792
    %v4794 = vrcp.pop %v4793
    %v4795 = vmul.f32 %v4790, %v4794
    %4796 = vst [vmem:[#allocation2] sm:$0x3] %v4795
    // Predicated region
    $region98: #{sentiment_classifier.1} parent=1 // pred_check
      _
    $region99: #{sentiment_classifier.1} parent=1 // pred_check_branch
      %4798 = sbr.rel (0) target = $region101
    $region100: #{sentiment_classifier.1} parent=1 // pred_region
      %s4800 = ssub.s32 32, 32
      %4801 = vsyncadd [#allocation3], %s4800
      %s4803 = sshll.u32 [#allocation2], 4
      %s4804 = int_to_ptr.vmem [resolvable:$true] %s4803
      %4806 = dma.vmem_to_hbm [thread:$0]  %s4804, 32, %s24, [#allocation3]
    $region101: #{sentiment_classifier.1} parent=1 // pred_fallthru
      _
    // Predicated region
    $region102: #{sentiment_classifier.1} parent=1 // pred_check
      _
    $region103: #{sentiment_classifier.1} parent=1 // pred_check_branch
      %4808 = sbr.rel (0) target = $region105
    $region104: #{sentiment_classifier.1} parent=1 // pred_region
      %4809 = dma.done [#allocation3], 32
    $region105: #{sentiment_classifier.1} parent=1 // pred_fallthru
      _
    %4810 = vsyncpa [#allocation3], 1

</llo_original>
